<compile_context>
chip_gen: v5e
topology: v5e:2x2
jax: 0.10.0
libtpu: 0.0.40
codegen_flags: <defaults>
</compile_context>

<pallas_src>
import numpy as np
import jax
import jax.numpy as jnp
from jax import lax
from jax.experimental import pallas as pl
from jax.experimental.pallas import tpu as pltpu

N = 2          # batch
C_IN = 128     # conv1 input channels (fixed by the module definition)
H = W = 19     # input spatial size -> 17 -> 8 -> 6 -> 3 through the stages
C_MID = 64     # conv output channels == BatchNorm features == input_size
HIDDEN = 32    # hidden_size
EPS = 1e-5

H1 = W1 = 17                      # conv1 output spatial size
P1 = 8                            # pool1 output spatial size
H2 = W2 = 6                       # conv2 output spatial size (valid part)
P2 = 3                            # pool2 output spatial size

R1 = N * H1 * W1                  # 578 conv1 output rows (all positions)
RP1 = P1 * P1 * N                 # 128 pooled rows, ordered (a, b, n)
# conv2 "shifted full grid" rows: r = 2*(i2*8 + j2) + n, i2,j2 in [0,6) valid
R2 = 2 * ((H2 - 1) * P1 + (W2 - 1)) + (N - 1) + 1       # 92
N_VALID2 = N * H2 * W2            # 72 valid conv2 positions (BN2 count)
TAPS2 = tuple(2 * (kh * P1 + kw) for kh in range(3) for kw in range(3))
L2 = R2 - 18                      # 74 pool2 candidate rows

K1 = 9 * C_IN                     # 1152 conv1 contraction depth
K1_STEPS = 3                      # grid steps pipelining the slab DMA
TK1 = K1 // K1_STEPS              # 384


# --------------------------------- kernel ----------------------------------
def relation_kernel(slab1_ref, w1_ref, b1_ref, g1_ref, be1_ref,
                    w2_ref, b2_ref, g2_ref, be2_ref, mask2_ref,
                    wf1_ref, bf1_ref, wf2_ref, bf2_ref,
                    o_ref, acc1_ref, lhs2_ref, lhsf_ref):
    k = pl.program_id(0)

    # ---- conv1 partial matmul, accumulated over the K grid axis ------------
    @pl.when(k == 0)
    def _():
        acc1_ref[...] = jnp.zeros_like(acc1_ref)

    acc1_ref[...] += jnp.dot(slab1_ref[...], w1_ref[...],
                             preferred_element_type=jnp.float32)   # (578, 64)

    # ---- everything else only on the last K step ---------------------------
    @pl.when(k == pl.num_programs(0) - 1)
    def _():
        # BatchNorm1 (batch stats) folded to scale+bias, + ReLU
        y1 = acc1_ref[...] + b1_ref[...]                            # (578, 64)
        inv1 = 1.0 / float(R1)
        mean1 = jnp.sum(y1, axis=0, keepdims=True) * inv1
        var1 = jnp.sum(y1 * y1, axis=0, keepdims=True) * inv1 - mean1 * mean1
        scale1 = g1_ref[...] * lax.rsqrt(var1 + EPS)
        shift1 = be1_ref[...] - mean1 * scale1
        y1 = jnp.maximum(y1 * scale1 + shift1, 0.0)

        # maxpool1: slab rows are pre-ordered (ip, jp, a, b, n), so the 2x2
        # pool is a max of four aligned contiguous 128-row slices.
        p1 = jnp.maximum(
            jnp.maximum(y1[0 * RP1:1 * RP1, :], y1[1 * RP1:2 * RP1, :]),
            jnp.maximum(y1[2 * RP1:3 * RP1, :], y1[3 * RP1:4 * RP1, :]))
        # p1: (128, 64), rows ordered (a, b, n) over the pooled 8x8 grid.

        # conv2: assemble a (92, 576) shifted-grid lhs in VMEM scratch, then
        # ONE K=576 matmul (keeps accumulation inside the MXU).
        for t, s in enumerate(TAPS2):
            lhs2_ref[:, t * C_MID:(t + 1) * C_MID] = p1[s:s + R2, :]
        y2 = jnp.dot(lhs2_ref[...], w2_ref[...],
                     preferred_element_type=jnp.float32) + b2_ref[...]  # (92,64)

        # BatchNorm2 over the 72 valid positions, folded to scale+bias, + ReLU
        m2 = mask2_ref[...]                                         # (92, 1)
        inv2 = 1.0 / float(N_VALID2)
        ym = y2 * m2
        mean2 = jnp.sum(ym, axis=0, keepdims=True) * inv2
        var2 = jnp.sum(ym * y2, axis=0, keepdims=True) * inv2 - mean2 * mean2
        scale2 = g2_ref[...] * lax.rsqrt(var2 + EPS)
        shift2 = be2_ref[...] - mean2 * scale2
        y2 = jnp.maximum(y2 * scale2 + shift2, 0.0)
        # rows of y2 with i2 > 5 or j2 > 5 hold finite garbage; never read below.

        # maxpool2 fused with fc1: grid row r = 2*(i2*8+j2)+n, so the 2x2 pool
        # is a max over row shifts {0, 2, 16, 18}; pooled (u,v) for both
        # samples then live in TWO CONTIGUOUS rows 32u+4v(+n).
        pf = jnp.maximum(
            jnp.maximum(y2[0:L2, :], y2[2:L2 + 2, :]),
            jnp.maximum(y2[16:L2 + 16, :], y2[18:L2 + 18, :]))
        for p in range(P2 * P2):
            u, v = p // P2, p % P2
            r0 = 32 * u + 4 * v
            lhsf_ref[:, p * C_MID:(p + 1) * C_MID] = pf[r0:r0 + N, :]
        h = jnp.dot(lhsf_ref[...], wf1_ref[...],
                    preferred_element_type=jnp.float32) + bf1_ref[...]
        h = jnp.maximum(h, 0.0)                                     # (N, 32)

        # fc2 on the VPU/XLU (avoid a lane-1 MXU matmul) + sigmoid
        logit = jnp.sum(h * wf2_ref[...], axis=1, keepdims=True) + bf2_ref[...]
        o_ref[...] = 1.0 / (1.0 + jnp.exp(-logit))                  # (N, 1)


# ------------------------ wrapper-side layout helpers ------------------------
def _build_slab1(x_nhwc):
    """Layer-1 im2col slab (578, 1152) built from strided slices (no gather).

    Rows [0, 512): conv1-output positions (i=2a+ip, j=2b+jp) ordered by
    (ip, jp, a, b, n) so MaxPool2d(2) in the kernel is a max of four aligned
    contiguous 128-row slices (pooled rows come out ordered (a, b, n)).
    Rows [512, 578): the i==16 / j==16 positions (BatchNorm stats only).
    Columns: tap-major, col = (kh*3+kw)*128 + cin.
    """
    blocks = []
    for ip in range(2):
        for jp in range(2):
            taps = []
            for kh in range(3):
                for kw in range(3):
                    sl = x_nhwc[:, ip + kh:ip + kh + 2 * P1:2,
                                jp + kw:jp + kw + 2 * P1:2, :]       # (N,8,8,C)
                    sl = jnp.transpose(sl, (1, 2, 0, 3))             # (8,8,N,C)
                    taps.append(sl.reshape(P1 * P1 * N, C_IN))       # (128, C)
            blocks.append(jnp.concatenate(taps, axis=1))             # (128, 1152)
    main = jnp.concatenate(blocks, axis=0)                           # (512, 1152)

    tail_taps = []
    for kh in range(3):
        for kw in range(3):
            ta = x_nhwc[:, 16 + kh, kw:kw + H1, :].reshape(N * H1, C_IN)       # i==16
            tb = x_nhwc[:, kh:kh + H1 - 1, 16 + kw, :].reshape(N * (H1 - 1), C_IN)  # j==16, i<16
            tail_taps.append(jnp.concatenate([ta, tb], axis=0))      # (66, C)
    tail = jnp.concatenate(tail_taps, axis=1)                        # (66, 1152)
    return jnp.concatenate([main, tail], axis=0)                     # (578, 1152)


def _mask2():
    m = np.zeros((R2, 1), np.float32)
    for n in range(N):
        for i2 in range(H2):
            for j2 in range(W2):
                m[2 * (i2 * P1 + j2) + n, 0] = 1.0
    return m


_MASK2 = _mask2()


# ------------------------------ JAX glue/wrapper ----------------------------
def relation_network_forward(x_nchw, params):
    (w1_t, b1, g1, be1, w2_t, b2, g2, be2, wf1_t, bf1, wf2_t, bf2) = params
    x = jnp.transpose(x_nchw, (0, 2, 3, 1)).astype(jnp.float32)   # NCHW -> NHWC

    slab1 = _build_slab1(x)                                        # (578, 1152)

    w1m = jnp.transpose(w1_t, (2, 3, 1, 0)).reshape(9 * C_IN, C_MID)
    w2m = jnp.transpose(w2_t, (2, 3, 1, 0)).reshape(9 * C_MID, C_MID)
    # torch fc1 weight is (HIDDEN, 64*3*3) with flatten order (c, u, v);
    # rearrange to [(u*3+v)*64 + c, HIDDEN] to match the kernel's pooled layout.
    wf1m = jnp.transpose(wf1_t.reshape(HIDDEN, C_MID, P2, P2),
                         (2, 3, 1, 0)).reshape(P2 * P2 * C_MID, HIDDEN)

    args = (slab1, w1m,
            b1.reshape(1, -1), g1.reshape(1, -1), be1.reshape(1, -1),
            w2m, b2.reshape(1, -1), g2.reshape(1, -1), be2.reshape(1, -1),
            jnp.asarray(_MASK2),
            wf1m, bf1.reshape(1, -1), wf2_t.reshape(1, -1), bf2.reshape(1, -1))

    def _const(shape):
        return pl.BlockSpec(shape, lambda k: (0, 0))

    in_specs = [
        pl.BlockSpec((R1, TK1), lambda k: (0, k)),        # slab1, K-blocked
        pl.BlockSpec((TK1, C_MID), lambda k: (k, 0)),     # w1m,   K-blocked
        _const((1, C_MID)),                               # b1
        _const((1, C_MID)),                               # g1
        _const((1, C_MID)),                               # be1
        _const((9 * C_MID, C_MID)),                       # w2m
        _const((1, C_MID)),                               # b2
        _const((1, C_MID)),                               # g2
        _const((1, C_MID)),                               # be2
        _const((R2, 1)),                                  # mask2
        _const((P2 * P2 * C_MID, HIDDEN)),                # wf1m
        _const((1, HIDDEN)),                              # bf1
        _const((1, HIDDEN)),                              # wf2
        _const((1, 1)),                                   # bf2
    ]

    flops = (2 * R1 * K1 * C_MID + 2 * R2 * 9 * C_MID * C_MID
             + 2 * N * P2 * P2 * C_MID * HIDDEN + 2 * N * HIDDEN)
    bytes_accessed = 4 * (R1 * K1 + K1 * C_MID + 9 * C_MID * C_MID
                          + P2 * P2 * C_MID * HIDDEN + R2 + 8 * C_MID
                          + 2 * HIDDEN + 1 + N)

    return pl.pallas_call(
        relation_kernel,
        out_shape=jax.ShapeDtypeStruct((N, 1), jnp.float32),
        grid=(K1_STEPS,),
        in_specs=in_specs,
        out_specs=pl.BlockSpec((N, 1), lambda k: (0, 0)),
        scratch_shapes=[
            pltpu.VMEM((R1, C_MID), jnp.float32),          # conv1 accumulator
            pltpu.VMEM((R2, 9 * C_MID), jnp.float32),      # conv2 im2col lhs
            pltpu.VMEM((N, P2 * P2 * C_MID), jnp.float32), # fc1 lhs
        ],
        compiler_params=pltpu.CompilerParams(
            dimension_semantics=("arbitrary",),
            vmem_limit_bytes=16 * 1024 * 1024),
        cost_estimate=pl.CostEstimate(flops=flops, transcendentals=200,
                                      bytes_accessed=bytes_accessed),
    )(*args)


# --------------------------- pure-JAX reference -----------------------------
def reference_forward(x_nchw, params):
    (w1_t, b1, g1, be1, w2_t, b2, g2, be2, wf1_t, bf1, wf2_t, bf2) = params

    def conv(x, w, b):
        y = lax.conv_general_dilated(
            x, w, (1, 1), 'VALID',
            dimension_numbers=('NCHW', 'OIHW', 'NCHW'),
            precision=lax.Precision.HIGHEST)
        return y + b.reshape(1, -1, 1, 1)

    def bn(x, g, bta):
        mean = jnp.mean(x, axis=(0, 2, 3), keepdims=True)
        var = jnp.mean((x - mean) ** 2, axis=(0, 2, 3), keepdims=True)
        return ((x - mean) / jnp.sqrt(var + EPS)) * g.reshape(1, -1, 1, 1) \
            + bta.reshape(1, -1, 1, 1)

    def pool(x):
        return lax.reduce_window(x, -jnp.inf, lax.max,
                                 (1, 1, 2, 2), (1, 1, 2, 2), 'VALID')

    y = pool(jax.nn.relu(bn(conv(x_nchw, w1_t, b1), g1, be1)))
    y = pool(jax.nn.relu(bn(conv(y, w2_t, b2), g2, be2)))
    y = y.reshape(y.shape[0], -1)
    y = jax.nn.relu(y @ wf1_t.T + bf1)
    return jax.nn.sigmoid(y @ wf2_t.T + bf2)


if __name__ == "__main__":
    key = jax.random.PRNGKey(0)
    ks = jax.random.split(key, 13)
    x = jax.random.normal(ks[0], (N, C_IN, H, W), jnp.float32)      # NCHW input
    params = (
        0.05 * jax.random.normal(ks[1], (C_MID, C_IN, 3, 3), jnp.float32),   # conv1 w (OIHW)
        0.05 * jax.random.normal(ks[2], (C_MID,), jnp.float32),              # conv1 b
        1.0 + 0.05 * jax.random.normal(ks[3], (C_MID,), jnp.float32),        # bn1 gamma
        0.05 * jax.random.normal(ks[4], (C_MID,), jnp.float32),              # bn1 beta
        0.05 * jax.random.normal(ks[5], (C_MID, C_MID, 3, 3), jnp.float32),  # conv2 w
        0.05 * jax.random.normal(ks[6], (C_MID,), jnp.float32),              # conv2 b
        1.0 + 0.05 * jax.random.normal(ks[7], (C_MID,), jnp.float32),        # bn2 gamma
        0.05 * jax.random.normal(ks[8], (C_MID,), jnp.float32),              # bn2 beta
        0.05 * jax.random.normal(ks[9], (HIDDEN, C_MID * 3 * 3), jnp.float32),  # fc1 w
        0.05 * jax.random.normal(ks[10], (HIDDEN,), jnp.float32),               # fc1 b
        0.05 * jax.random.normal(ks[11], (1, HIDDEN), jnp.float32),             # fc2 w
        0.05 * jax.random.normal(ks[12], (1,), jnp.float32),                    # fc2 b
    )

    out = jax.block_until_ready(relation_network_forward(x, params))
    assert out.shape == (N, 1) and out.dtype == jnp.float32

    ref = jax.block_until_ready(reference_forward(x, params))
    err = float(jnp.max(jnp.abs(out - ref)))
    if err > 1e-3:
        raise AssertionError(f"kernel/reference mismatch: max abs err = {err}")

    print("KERNEL_OK")
</pallas_src>

<mosaic_0001>
module attributes {stable_mosaic.version = 11 : i64} {
  func.func @relation_kernel(%arg0: i32, %arg1: memref<578x384xf32, #tpu.memory_space<vmem>>, %arg2: memref<384x64xf32, #tpu.memory_space<vmem>>, %arg3: memref<1x64xf32, #tpu.memory_space<vmem>>, %arg4: memref<1x64xf32, #tpu.memory_space<vmem>>, %arg5: memref<1x64xf32, #tpu.memory_space<vmem>>, %arg6: memref<576x64xf32, #tpu.memory_space<vmem>>, %arg7: memref<1x64xf32, #tpu.memory_space<vmem>>, %arg8: memref<1x64xf32, #tpu.memory_space<vmem>>, %arg9: memref<1x64xf32, #tpu.memory_space<vmem>>, %arg10: memref<92x1xf32, #tpu.memory_space<vmem>>, %arg11: memref<576x32xf32, #tpu.memory_space<vmem>>, %arg12: memref<1x32xf32, #tpu.memory_space<vmem>>, %arg13: memref<1x32xf32, #tpu.memory_space<vmem>>, %arg14: memref<1x1xf32, #tpu.memory_space<vmem>>, %arg15: memref<2x1xf32, #tpu.memory_space<vmem>>, %arg16: memref<578x64xf32, #tpu.memory_space<vmem>>, %arg17: memref<92x576xf32, #tpu.memory_space<vmem>>, %arg18: memref<2x576xf32, #tpu.memory_space<vmem>>) attributes {dimension_semantics = [#tpu.dimension_semantics<arbitrary>], iteration_bounds = array<i64: 3>, scalar_prefetch = 0 : i64, scratch_operands = 3 : i64, tpu.core_type = #tpu.core_type<tc>, window_params = [{transform_indices = @transform_0, window_bounds = array<i64: 578, 384>}, {transform_indices = @transform_1, window_bounds = array<i64: 384, 64>}, {pipeline_mode = #tpu.pipeline_mode<synchronous>, transform_indices = @transform_2, window_bounds = array<i64: 1, 64>}, {pipeline_mode = #tpu.pipeline_mode<synchronous>, transform_indices = @transform_3, window_bounds = array<i64: 1, 64>}, {pipeline_mode = #tpu.pipeline_mode<synchronous>, transform_indices = @transform_4, window_bounds = array<i64: 1, 64>}, {pipeline_mode = #tpu.pipeline_mode<synchronous>, transform_indices = @transform_5, window_bounds = array<i64: 576, 64>}, {pipeline_mode = #tpu.pipeline_mode<synchronous>, transform_indices = @transform_6, window_bounds = array<i64: 1, 64>}, {pipeline_mode = #tpu.pipeline_mode<synchronous>, transform_indices = @transform_7, window_bounds = array<i64: 1, 64>}, {pipeline_mode = #tpu.pipeline_mode<synchronous>, transform_indices = @transform_8, window_bounds = array<i64: 1, 64>}, {pipeline_mode = #tpu.pipeline_mode<synchronous>, transform_indices = @transform_9, window_bounds = array<i64: 92, 1>}, {pipeline_mode = #tpu.pipeline_mode<synchronous>, transform_indices = @transform_10, window_bounds = array<i64: 576, 32>}, {pipeline_mode = #tpu.pipeline_mode<synchronous>, transform_indices = @transform_11, window_bounds = array<i64: 1, 32>}, {pipeline_mode = #tpu.pipeline_mode<synchronous>, transform_indices = @transform_12, window_bounds = array<i64: 1, 32>}, {pipeline_mode = #tpu.pipeline_mode<synchronous>, transform_indices = @transform_13, window_bounds = array<i64: 1, 1>}, {pipeline_mode = #tpu.pipeline_mode<synchronous>, transform_indices = @transform_14, window_bounds = array<i64: 2, 1>}]} {
    %c0_i32 = arith.constant 0 : i32
    %0 = arith.cmpi eq, %arg0, %c0_i32 : i32
    %1 = arith.extui %0 : i1 to i32
    %c0_i32_0 = arith.constant 0 : i32
    %2 = arith.cmpi ne, %1, %c0_i32_0 : i32
    scf.if %2 {
      %cst_9 = arith.constant 0.000000e+00 : f32
      %12 = vector.broadcast %cst_9 : f32 to vector<578x64xf32>
      %c0_10 = arith.constant 0 : index
      %c0_11 = arith.constant 0 : index
      %13 = vector.load %arg16[%c0_10, %c0_11] : memref<578x64xf32, #tpu.memory_space<vmem>>, vector<578x64xf32>
      tpu.vector_store %arg16[%c0_10, %c0_11], %12 {strides = array<i32>} : memref<578x64xf32, #tpu.memory_space<vmem>>, vector<578x64xf32>,
    } else {
    }
    %c0 = arith.constant 0 : index
    %c0_1 = arith.constant 0 : index
    %3 = vector.load %arg16[%c0, %c0_1] : memref<578x64xf32, #tpu.memory_space<vmem>>, vector<578x64xf32>
    %c0_2 = arith.constant 0 : index
    %c0_3 = arith.constant 0 : index
    %4 = vector.load %arg1[%c0_2, %c0_3] : memref<578x384xf32, #tpu.memory_space<vmem>>, vector<578x384xf32>
    %c0_4 = arith.constant 0 : index
    %c0_5 = arith.constant 0 : index
    %5 = vector.load %arg2[%c0_4, %c0_5] : memref<384x64xf32, #tpu.memory_space<vmem>>, vector<384x64xf32>
    %cst = arith.constant dense<0.000000e+00> : vector<578x64xf32>
    %6 = tpu.matmul %4, %5, %cst {dimension_numbers = #tpu.dot_dimension_numbers<[1], [0], [0], [1], [0, 0, 1, 1], [], []>} : vector<578x384xf32>, vector<384x64xf32>, vector<578x64xf32> -> vector<578x64xf32>
    %7 = arith.addf %3, %6 : vector<578x64xf32>
    %c0_6 = arith.constant 0 : index
    %c0_7 = arith.constant 0 : index
    %8 = vector.load %arg16[%c0_6, %c0_7] : memref<578x64xf32, #tpu.memory_space<vmem>>, vector<578x64xf32>
    tpu.vector_store %arg16[%c0_6, %c0_7], %7 {strides = array<i32>} : memref<578x64xf32, #tpu.memory_space<vmem>>, vector<578x64xf32>,
    %c2_i32 = arith.constant 2 : i32
    %9 = arith.cmpi eq, %arg0, %c2_i32 : i32
    %10 = arith.extui %9 : i1 to i32
    %c0_i32_8 = arith.constant 0 : i32
    %11 = arith.cmpi ne, %10, %c0_i32_8 : i32
    scf.if %11 {
      %c0_9 = arith.constant 0 : index
      %c0_10 = arith.constant 0 : index
      %12 = vector.load %arg16[%c0_9, %c0_10] : memref<578x64xf32, #tpu.memory_space<vmem>>, vector<578x64xf32>
      %c0_11 = arith.constant 0 : index
      %c0_12 = arith.constant 0 : index
      %13 = vector.load %arg3[%c0_11, %c0_12] : memref<1x64xf32, #tpu.memory_space<vmem>>, vector<1x64xf32>
      %14 = vector.broadcast %13 : vector<1x64xf32> to vector<578x64xf32>
      %15 = arith.addf %12, %14 : vector<578x64xf32>
      %cst_13 = arith.constant dense<0.000000e+00> : vector<64xf32>
      %16 = vector.multi_reduction <add>, %15, %cst_13 [0] : vector<578x64xf32> to vector<64xf32>
      %17 = vector.shape_cast %16 : vector<64xf32> to vector<1x64xf32>
      %cst_14 = arith.constant 0.00173010386 : f32
      %18 = vector.broadcast %cst_14 : f32 to vector<1x64xf32>
      %19 = arith.mulf %17, %18 : vector<1x64xf32>
      %20 = arith.mulf %15, %15 : vector<578x64xf32>
      %cst_15 = arith.constant dense<0.000000e+00> : vector<64xf32>
      %21 = vector.multi_reduction <add>, %20, %cst_15 [0] : vector<578x64xf32> to vector<64xf32>
      %22 = vector.shape_cast %21 : vector<64xf32> to vector<1x64xf32>
      %cst_16 = arith.constant 0.00173010386 : f32
      %23 = vector.broadcast %cst_16 : f32 to vector<1x64xf32>
      %24 = arith.mulf %22, %23 : vector<1x64xf32>
      %25 = arith.mulf %19, %19 : vector<1x64xf32>
      %26 = arith.subf %24, %25 : vector<1x64xf32>
      %c0_17 = arith.constant 0 : index
      %c0_18 = arith.constant 0 : index
      %27 = vector.load %arg4[%c0_17, %c0_18] : memref<1x64xf32, #tpu.memory_space<vmem>>, vector<1x64xf32>
      %cst_19 = arith.constant 9.99999974E-6 : f32
      %28 = vector.broadcast %cst_19 : f32 to vector<1x64xf32>
      %29 = arith.addf %26, %28 : vector<1x64xf32>
      %30 = math.rsqrt %29 : vector<1x64xf32>
      %31 = arith.mulf %27, %30 : vector<1x64xf32>
      %c0_20 = arith.constant 0 : index
      %c0_21 = arith.constant 0 : index
      %32 = vector.load %arg5[%c0_20, %c0_21] : memref<1x64xf32, #tpu.memory_space<vmem>>, vector<1x64xf32>
      %33 = arith.mulf %19, %31 : vector<1x64xf32>
      %34 = arith.subf %32, %33 : vector<1x64xf32>
      %35 = vector.broadcast %31 : vector<1x64xf32> to vector<578x64xf32>
      %36 = arith.mulf %15, %35 : vector<578x64xf32>
      %37 = vector.broadcast %34 : vector<1x64xf32> to vector<578x64xf32>
      %38 = arith.addf %36, %37 : vector<578x64xf32>
      %cst_22 = arith.constant 0.000000e+00 : f32
      %39 = vector.broadcast %cst_22 : f32 to vector<578x64xf32>
      %40 = arith.maximumf %38, %39 : vector<578x64xf32>
      %41 = vector.extract_strided_slice %40 {offsets = [0, 0], sizes = [128, 64], strides = [1, 1]} : vector<578x64xf32> to vector<128x64xf32>
      %42 = vector.extract_strided_slice %40 {offsets = [128, 0], sizes = [128, 64], strides = [1, 1]} : vector<578x64xf32> to vector<128x64xf32>
      %43 = arith.maximumf %41, %42 : vector<128x64xf32>
      %44 = vector.extract_strided_slice %40 {offsets = [256, 0], sizes = [128, 64], strides = [1, 1]} : vector<578x64xf32> to vector<128x64xf32>
      %45 = vector.extract_strided_slice %40 {offsets = [384, 0], sizes = [128, 64], strides = [1, 1]} : vector<578x64xf32> to vector<128x64xf32>
      %46 = arith.maximumf %44, %45 : vector<128x64xf32>
      %47 = arith.maximumf %43, %46 : vector<128x64xf32>
      %48 = vector.extract_strided_slice %47 {offsets = [0, 0], sizes = [92, 64], strides = [1, 1]} : vector<128x64xf32> to vector<92x64xf32>
      %c0_23 = arith.constant 0 : index
      %c0_24 = arith.constant 0 : index
      %49 = vector.load %arg17[%c0_23, %c0_24] : memref<92x576xf32, #tpu.memory_space<vmem>>, vector<92x64xf32>
      tpu.vector_store %arg17[%c0_23, %c0_24], %48 {strides = array<i32>} : memref<92x576xf32, #tpu.memory_space<vmem>>, vector<92x64xf32>,
      %50 = vector.extract_strided_slice %47 {offsets = [2, 0], sizes = [92, 64], strides = [1, 1]} : vector<128x64xf32> to vector<92x64xf32>
      %c0_25 = arith.constant 0 : index
      %c64 = arith.constant 64 : index
      %51 = vector.load %arg17[%c0_25, %c64] : memref<92x576xf32, #tpu.memory_space<vmem>>, vector<92x64xf32>
      tpu.vector_store %arg17[%c0_25, %c64], %50 {strides = array<i32>} : memref<92x576xf32, #tpu.memory_space<vmem>>, vector<92x64xf32>,
      %52 = vector.extract_strided_slice %47 {offsets = [4, 0], sizes = [92, 64], strides = [1, 1]} : vector<128x64xf32> to vector<92x64xf32>
      %c0_26 = arith.constant 0 : index
      %c128 = arith.constant 128 : index
      %53 = vector.load %arg17[%c0_26, %c128] : memref<92x576xf32, #tpu.memory_space<vmem>>, vector<92x64xf32>
      tpu.vector_store %arg17[%c0_26, %c128], %52 {strides = array<i32>} : memref<92x576xf32, #tpu.memory_space<vmem>>, vector<92x64xf32>,
      %54 = vector.extract_strided_slice %47 {offsets = [16, 0], sizes = [92, 64], strides = [1, 1]} : vector<128x64xf32> to vector<92x64xf32>
      %c0_27 = arith.constant 0 : index
      %c192 = arith.constant 192 : index
      %55 = vector.load %arg17[%c0_27, %c192] : memref<92x576xf32, #tpu.memory_space<vmem>>, vector<92x64xf32>
      tpu.vector_store %arg17[%c0_27, %c192], %54 {strides = array<i32>} : memref<92x576xf32, #tpu.memory_space<vmem>>, vector<92x64xf32>,
      %56 = vector.extract_strided_slice %47 {offsets = [18, 0], sizes = [92, 64], strides = [1, 1]} : vector<128x64xf32> to vector<92x64xf32>
      %c0_28 = arith.constant 0 : index
      %c256 = arith.constant 256 : index
      %57 = vector.load %arg17[%c0_28, %c256] : memref<92x576xf32, #tpu.memory_space<vmem>>, vector<92x64xf32>
      tpu.vector_store %arg17[%c0_28, %c256], %56 {strides = array<i32>} : memref<92x576xf32, #tpu.memory_space<vmem>>, vector<92x64xf32>,
      %58 = vector.extract_strided_slice %47 {offsets = [20, 0], sizes = [92, 64], strides = [1, 1]} : vector<128x64xf32> to vector<92x64xf32>
      %c0_29 = arith.constant 0 : index
      %c320 = arith.constant 320 : index
      %59 = vector.load %arg17[%c0_29, %c320] : memref<92x576xf32, #tpu.memory_space<vmem>>, vector<92x64xf32>
      tpu.vector_store %arg17[%c0_29, %c320], %58 {strides = array<i32>} : memref<92x576xf32, #tpu.memory_space<vmem>>, vector<92x64xf32>,
      %60 = vector.extract_strided_slice %47 {offsets = [32, 0], sizes = [92, 64], strides = [1, 1]} : vector<128x64xf32> to vector<92x64xf32>
      %c0_30 = arith.constant 0 : index
      %c384 = arith.constant 384 : index
      %61 = vector.load %arg17[%c0_30, %c384] : memref<92x576xf32, #tpu.memory_space<vmem>>, vector<92x64xf32>
      tpu.vector_store %arg17[%c0_30, %c384], %60 {strides = array<i32>} : memref<92x576xf32, #tpu.memory_space<vmem>>, vector<92x64xf32>,
      %62 = vector.extract_strided_slice %47 {offsets = [34, 0], sizes = [92, 64], strides = [1, 1]} : vector<128x64xf32> to vector<92x64xf32>
      %c0_31 = arith.constant 0 : index
      %c448 = arith.constant 448 : index
      %63 = vector.load %arg17[%c0_31, %c448] : memref<92x576xf32, #tpu.memory_space<vmem>>, vector<92x64xf32>
      tpu.vector_store %arg17[%c0_31, %c448], %62 {strides = array<i32>} : memref<92x576xf32, #tpu.memory_space<vmem>>, vector<92x64xf32>,
      %64 = vector.extract_strided_slice %47 {offsets = [36, 0], sizes = [92, 64], strides = [1, 1]} : vector<128x64xf32> to vector<92x64xf32>
      %c0_32 = arith.constant 0 : index
      %c512 = arith.constant 512 : index
      %65 = vector.load %arg17[%c0_32, %c512] : memref<92x576xf32, #tpu.memory_space<vmem>>, vector<92x64xf32>
      tpu.vector_store %arg17[%c0_32, %c512], %64 {strides = array<i32>} : memref<92x576xf32, #tpu.memory_space<vmem>>, vector<92x64xf32>,
      %c0_33 = arith.constant 0 : index
      %c0_34 = arith.constant 0 : index
      %66 = vector.load %arg17[%c0_33, %c0_34] : memref<92x576xf32, #tpu.memory_space<vmem>>, vector<92x576xf32>
      %c0_35 = arith.constant 0 : index
      %c0_36 = arith.constant 0 : index
      %67 = vector.load %arg6[%c0_35, %c0_36] : memref<576x64xf32, #tpu.memory_space<vmem>>, vector<576x64xf32>
      %cst_37 = arith.constant dense<0.000000e+00> : vector<92x64xf32>
      %68 = tpu.matmul %66, %67, %cst_37 {dimension_numbers = #tpu.dot_dimension_numbers<[1], [0], [0], [1], [0, 0, 1, 1], [], []>} : vector<92x576xf32>, vector<576x64xf32>, vector<92x64xf32> -> vector<92x64xf32>
      %c0_38 = arith.constant 0 : index
      %c0_39 = arith.constant 0 : index
      %69 = vector.load %arg7[%c0_38, %c0_39] : memref<1x64xf32, #tpu.memory_space<vmem>>, vector<1x64xf32>
      %70 = vector.broadcast %69 : vector<1x64xf32> to vector<92x64xf32>
      %71 = arith.addf %68, %70 : vector<92x64xf32>
      %c0_40 = arith.constant 0 : index
      %c0_41 = arith.constant 0 : index
      %72 = vector.load %arg10[%c0_40, %c0_41] : memref<92x1xf32, #tpu.memory_space<vmem>>, vector<92x1xf32>
      %73 = vector.broadcast %72 : vector<92x1xf32> to vector<92x64xf32>
      %74 = arith.mulf %71, %73 : vector<92x64xf32>
      %cst_42 = arith.constant dense<0.000000e+00> : vector<64xf32>
      %75 = vector.multi_reduction <add>, %74, %cst_42 [0] : vector<92x64xf32> to vector<64xf32>
      %76 = vector.shape_cast %75 : vector<64xf32> to vector<1x64xf32>
      %cst_43 = arith.constant 0.013888889 : f32
      %77 = vector.broadcast %cst_43 : f32 to vector<1x64xf32>
      %78 = arith.mulf %76, %77 : vector<1x64xf32>
      %79 = arith.mulf %74, %71 : vector<92x64xf32>
      %cst_44 = arith.constant dense<0.000000e+00> : vector<64xf32>
      %80 = vector.multi_reduction <add>, %79, %cst_44 [0] : vector<92x64xf32> to vector<64xf32>
      %81 = vector.shape_cast %80 : vector<64xf32> to vector<1x64xf32>
      %cst_45 = arith.constant 0.013888889 : f32
      %82 = vector.broadcast %cst_45 : f32 to vector<1x64xf32>
      %83 = arith.mulf %81, %82 : vector<1x64xf32>
      %84 = arith.mulf %78, %78 : vector<1x64xf32>
      %85 = arith.subf %83, %84 : vector<1x64xf32>
      %c0_46 = arith.constant 0 : index
      %c0_47 = arith.constant 0 : index
      %86 = vector.load %arg8[%c0_46, %c0_47] : memref<1x64xf32, #tpu.memory_space<vmem>>, vector<1x64xf32>
      %cst_48 = arith.constant 9.99999974E-6 : f32
      %87 = vector.broadcast %cst_48 : f32 to vector<1x64xf32>
      %88 = arith.addf %85, %87 : vector<1x64xf32>
      %89 = math.rsqrt %88 : vector<1x64xf32>
      %90 = arith.mulf %86, %89 : vector<1x64xf32>
      %c0_49 = arith.constant 0 : index
      %c0_50 = arith.constant 0 : index
      %91 = vector.load %arg9[%c0_49, %c0_50] : memref<1x64xf32, #tpu.memory_space<vmem>>, vector<1x64xf32>
      %92 = arith.mulf %78, %90 : vector<1x64xf32>
      %93 = arith.subf %91, %92 : vector<1x64xf32>
      %94 = vector.broadcast %90 : vector<1x64xf32> to vector<92x64xf32>
      %95 = arith.mulf %71, %94 : vector<92x64xf32>
      %96 = vector.broadcast %93 : vector<1x64xf32> to vector<92x64xf32>
      %97 = arith.addf %95, %96 : vector<92x64xf32>
      %cst_51 = arith.constant 0.000000e+00 : f32
      %98 = vector.broadcast %cst_51 : f32 to vector<92x64xf32>
      %99 = arith.maximumf %97, %98 : vector<92x64xf32>
      %100 = vector.extract_strided_slice %99 {offsets = [0, 0], sizes = [74, 64], strides = [1, 1]} : vector<92x64xf32> to vector<74x64xf32>
      %101 = vector.extract_strided_slice %99 {offsets = [2, 0], sizes = [74, 64], strides = [1, 1]} : vector<92x64xf32> to vector<74x64xf32>
      %102 = arith.maximumf %100, %101 : vector<74x64xf32>
      %103 = vector.extract_strided_slice %99 {offsets = [16, 0], sizes = [74, 64], strides = [1, 1]} : vector<92x64xf32> to vector<74x64xf32>
      %104 = vector.extract_strided_slice %99 {offsets = [18, 0], sizes = [74, 64], strides = [1, 1]} : vector<92x64xf32> to vector<74x64xf32>
      %105 = arith.maximumf %103, %104 : vector<74x64xf32>
      %106 = arith.maximumf %102, %105 : vector<74x64xf32>
      %107 = vector.extract_strided_slice %106 {offsets = [0, 0], sizes = [2, 64], strides = [1, 1]} : vector<74x64xf32> to vector<2x64xf32>
      %c0_52 = arith.constant 0 : index
      %c0_53 = arith.constant 0 : index
      %108 = vector.load %arg18[%c0_52, %c0_53] : memref<2x576xf32, #tpu.memory_space<vmem>>, vector<2x64xf32>
      tpu.vector_store %arg18[%c0_52, %c0_53], %107 {strides = array<i32>} : memref<2x576xf32, #tpu.memory_space<vmem>>, vector<2x64xf32>,
      %109 = vector.extract_strided_slice %106 {offsets = [4, 0], sizes = [2, 64], strides = [1, 1]} : vector<74x64xf32> to vector<2x64xf32>
      %c0_54 = arith.constant 0 : index
      %c64_55 = arith.constant 64 : index
      %110 = vector.load %arg18[%c0_54, %c64_55] : memref<2x576xf32, #tpu.memory_space<vmem>>, vector<2x64xf32>
      tpu.vector_store %arg18[%c0_54, %c64_55], %109 {strides = array<i32>} : memref<2x576xf32, #tpu.memory_space<vmem>>, vector<2x64xf32>,
      %111 = vector.extract_strided_slice %106 {offsets = [8, 0], sizes = [2, 64], strides = [1, 1]} : vector<74x64xf32> to vector<2x64xf32>
      %c0_56 = arith.constant 0 : index
      %c128_57 = arith.constant 128 : index
      %112 = vector.load %arg18[%c0_56, %c128_57] : memref<2x576xf32, #tpu.memory_space<vmem>>, vector<2x64xf32>
      tpu.vector_store %arg18[%c0_56, %c128_57], %111 {strides = array<i32>} : memref<2x576xf32, #tpu.memory_space<vmem>>, vector<2x64xf32>,
      %113 = vector.extract_strided_slice %106 {offsets = [32, 0], sizes = [2, 64], strides = [1, 1]} : vector<74x64xf32> to vector<2x64xf32>
      %c0_58 = arith.constant 0 : index
      %c192_59 = arith.constant 192 : index
      %114 = vector.load %arg18[%c0_58, %c192_59] : memref<2x576xf32, #tpu.memory_space<vmem>>, vector<2x64xf32>
      tpu.vector_store %arg18[%c0_58, %c192_59], %113 {strides = array<i32>} : memref<2x576xf32, #tpu.memory_space<vmem>>, vector<2x64xf32>,
      %115 = vector.extract_strided_slice %106 {offsets = [36, 0], sizes = [2, 64], strides = [1, 1]} : vector<74x64xf32> to vector<2x64xf32>
      %c0_60 = arith.constant 0 : index
      %c256_61 = arith.constant 256 : index
      %116 = vector.load %arg18[%c0_60, %c256_61] : memref<2x576xf32, #tpu.memory_space<vmem>>, vector<2x64xf32>
      tpu.vector_store %arg18[%c0_60, %c256_61], %115 {strides = array<i32>} : memref<2x576xf32, #tpu.memory_space<vmem>>, vector<2x64xf32>,
      %117 = vector.extract_strided_slice %106 {offsets = [40, 0], sizes = [2, 64], strides = [1, 1]} : vector<74x64xf32> to vector<2x64xf32>
      %c0_62 = arith.constant 0 : index
      %c320_63 = arith.constant 320 : index
      %118 = vector.load %arg18[%c0_62, %c320_63] : memref<2x576xf32, #tpu.memory_space<vmem>>, vector<2x64xf32>
      tpu.vector_store %arg18[%c0_62, %c320_63], %117 {strides = array<i32>} : memref<2x576xf32, #tpu.memory_space<vmem>>, vector<2x64xf32>,
      %119 = vector.extract_strided_slice %106 {offsets = [64, 0], sizes = [2, 64], strides = [1, 1]} : vector<74x64xf32> to vector<2x64xf32>
      %c0_64 = arith.constant 0 : index
      %c384_65 = arith.constant 384 : index
      %120 = vector.load %arg18[%c0_64, %c384_65] : memref<2x576xf32, #tpu.memory_space<vmem>>, vector<2x64xf32>
      tpu.vector_store %arg18[%c0_64, %c384_65], %119 {strides = array<i32>} : memref<2x576xf32, #tpu.memory_space<vmem>>, vector<2x64xf32>,
      %121 = vector.extract_strided_slice %106 {offsets = [68, 0], sizes = [2, 64], strides = [1, 1]} : vector<74x64xf32> to vector<2x64xf32>
      %c0_66 = arith.constant 0 : index
      %c448_67 = arith.constant 448 : index
      %122 = vector.load %arg18[%c0_66, %c448_67] : memref<2x576xf32, #tpu.memory_space<vmem>>, vector<2x64xf32>
      tpu.vector_store %arg18[%c0_66, %c448_67], %121 {strides = array<i32>} : memref<2x576xf32, #tpu.memory_space<vmem>>, vector<2x64xf32>,
      %123 = vector.extract_strided_slice %106 {offsets = [72, 0], sizes = [2, 64], strides = [1, 1]} : vector<74x64xf32> to vector<2x64xf32>
      %c0_68 = arith.constant 0 : index
      %c512_69 = arith.constant 512 : index
      %124 = vector.load %arg18[%c0_68, %c512_69] : memref<2x576xf32, #tpu.memory_space<vmem>>, vector<2x64xf32>
      tpu.vector_store %arg18[%c0_68, %c512_69], %123 {strides = array<i32>} : memref<2x576xf32, #tpu.memory_space<vmem>>, vector<2x64xf32>,
      %c0_70 = arith.constant 0 : index
      %c0_71 = arith.constant 0 : index
      %125 = vector.load %arg18[%c0_70, %c0_71] : memref<2x576xf32, #tpu.memory_space<vmem>>, vector<2x576xf32>
      %c0_72 = arith.constant 0 : index
      %c0_73 = arith.constant 0 : index
      %126 = vector.load %arg11[%c0_72, %c0_73] : memref<576x32xf32, #tpu.memory_space<vmem>>, vector<576x32xf32>
      %cst_74 = arith.constant dense<0.000000e+00> : vector<2x32xf32>
      %127 = tpu.matmul %125, %126, %cst_74 {dimension_numbers = #tpu.dot_dimension_numbers<[1], [0], [0], [1], [0, 0, 1, 1], [], []>} : vector<2x576xf32>, vector<576x32xf32>, vector<2x32xf32> -> vector<2x32xf32>
      %c0_75 = arith.constant 0 : index
      %c0_76 = arith.constant 0 : index
      %128 = vector.load %arg12[%c0_75, %c0_76] : memref<1x32xf32, #tpu.memory_space<vmem>>, vector<1x32xf32>
      %129 = vector.broadcast %128 : vector<1x32xf32> to vector<2x32xf32>
      %130 = arith.addf %127, %129 : vector<2x32xf32>
      %cst_77 = arith.constant 0.000000e+00 : f32
      %131 = vector.broadcast %cst_77 : f32 to vector<2x32xf32>
      %132 = arith.maximumf %130, %131 : vector<2x32xf32>
      %c0_78 = arith.constant 0 : index
      %c0_79 = arith.constant 0 : index
      %133 = vector.load %arg13[%c0_78, %c0_79] : memref<1x32xf32, #tpu.memory_space<vmem>>, vector<1x32xf32>
      %134 = vector.broadcast %133 : vector<1x32xf32> to vector<2x32xf32>
      %135 = arith.mulf %132, %134 : vector<2x32xf32>
      %cst_80 = arith.constant dense<0.000000e+00> : vector<2xf32>
      %136 = vector.multi_reduction <add>, %135, %cst_80 [1] : vector<2x32xf32> to vector<2xf32>
      %137 = vector.shape_cast %136 : vector<2xf32> to vector<2x1xf32>
      %c0_81 = arith.constant 0 : index
      %c0_82 = arith.constant 0 : index
      %138 = vector.load %arg14[%c0_81, %c0_82] : memref<1x1xf32, #tpu.memory_space<vmem>>, vector<1x1xf32>
      %139 = vector.broadcast %138 : vector<1x1xf32> to vector<2x1xf32>
      %140 = arith.addf %137, %139 : vector<2x1xf32>
      %cst_83 = arith.constant 0.000000e+00 : f32
      %141 = vector.broadcast %cst_83 : f32 to vector<2x1xf32>
      %142 = arith.subf %141, %140 : vector<2x1xf32>
      %143 = math.exp %142 : vector<2x1xf32>
      %cst_84 = arith.constant 1.000000e+00 : f32
      %144 = vector.broadcast %cst_84 : f32 to vector<2x1xf32>
      %145 = arith.addf %144, %143 : vector<2x1xf32>
      %cst_85 = arith.constant 1.000000e+00 : f32
      %146 = vector.broadcast %cst_85 : f32 to vector<2x1xf32>
      %147 = arith.divf %146, %145 : vector<2x1xf32>
      %c0_86 = arith.constant 0 : index
      %c0_87 = arith.constant 0 : index
      %148 = vector.load %arg15[%c0_86, %c0_87] : memref<2x1xf32, #tpu.memory_space<vmem>>, vector<2x1xf32>
      tpu.vector_store %arg15[%c0_86, %c0_87], %147 {strides = array<i32>} : memref<2x1xf32, #tpu.memory_space<vmem>>, vector<2x1xf32>,
    } else {
    }
    return
  }
  func.func @transform_0(%arg0: i32) -> (i32, i32) {
    %c0_i32 = arith.constant 0 : i32
    %c0_i32_0 = arith.constant 0 : i32
    return %c0_i32, %arg0 : i32, i32
  }
  func.func @transform_1(%arg0: i32) -> (i32, i32) {
    %c0_i32 = arith.constant 0 : i32
    %c0_i32_0 = arith.constant 0 : i32
    return %arg0, %c0_i32 : i32, i32
  }
  func.func @transform_2(%arg0: i32) -> (i32, i32) {
    %c0_i32 = arith.constant 0 : i32
    %c0_i32_0 = arith.constant 0 : i32
    %c0_i32_1 = arith.constant 0 : i32
    return %c0_i32, %c0_i32_0 : i32, i32
  }
  func.func @transform_3(%arg0: i32) -> (i32, i32) {
    %c0_i32 = arith.constant 0 : i32
    %c0_i32_0 = arith.constant 0 : i32
    %c0_i32_1 = arith.constant 0 : i32
    return %c0_i32, %c0_i32_0 : i32, i32
  }
  func.func @transform_4(%arg0: i32) -> (i32, i32) {
    %c0_i32 = arith.constant 0 : i32
    %c0_i32_0 = arith.constant 0 : i32
    %c0_i32_1 = arith.constant 0 : i32
    return %c0_i32, %c0_i32_0 : i32, i32
  }
  func.func @transform_5(%arg0: i32) -> (i32, i32) {
    %c0_i32 = arith.constant 0 : i32
    %c0_i32_0 = arith.constant 0 : i32
    %c0_i32_1 = arith.constant 0 : i32
    return %c0_i32, %c0_i32_0 : i32, i32
  }
  func.func @transform_6(%arg0: i32) -> (i32, i32) {
    %c0_i32 = arith.constant 0 : i32
    %c0_i32_0 = arith.constant 0 : i32
    %c0_i32_1 = arith.constant 0 : i32
    return %c0_i32, %c0_i32_0 : i32, i32
  }
  func.func @transform_7(%arg0: i32) -> (i32, i32) {
    %c0_i32 = arith.constant 0 : i32
    %c0_i32_0 = arith.constant 0 : i32
    %c0_i32_1 = arith.constant 0 : i32
    return %c0_i32, %c0_i32_0 : i32, i32
  }
  func.func @transform_8(%arg0: i32) -> (i32, i32) {
    %c0_i32 = arith.constant 0 : i32
    %c0_i32_0 = arith.constant 0 : i32
    %c0_i32_1 = arith.constant 0 : i32
    return %c0_i32, %c0_i32_0 : i32, i32
  }
  func.func @transform_9(%arg0: i32) -> (i32, i32) {
    %c0_i32 = arith.constant 0 : i32
    %c0_i32_0 = arith.constant 0 : i32
    %c0_i32_1 = arith.constant 0 : i32
    return %c0_i32, %c0_i32_0 : i32, i32
  }
  func.func @transform_10(%arg0: i32) -> (i32, i32) {
    %c0_i32 = arith.constant 0 : i32
    %c0_i32_0 = arith.constant 0 : i32
    %c0_i32_1 = arith.constant 0 : i32
    return %c0_i32, %c0_i32_0 : i32, i32
  }
  func.func @transform_11(%arg0: i32) -> (i32, i32) {
    %c0_i32 = arith.constant 0 : i32
    %c0_i32_0 = arith.constant 0 : i32
    %c0_i32_1 = arith.constant 0 : i32
    return %c0_i32, %c0_i32_0 : i32, i32
  }
  func.func @transform_12(%arg0: i32) -> (i32, i32) {
    %c0_i32 = arith.constant 0 : i32
    %c0_i32_0 = arith.constant 0 : i32
    %c0_i32_1 = arith.constant 0 : i32
    return %c0_i32, %c0_i32_0 : i32, i32
  }
  func.func @transform_13(%arg0: i32) -> (i32, i32) {
    %c0_i32 = arith.constant 0 : i32
    %c0_i32_0 = arith.constant 0 : i32
    %c0_i32_1 = arith.constant 0 : i32
    return %c0_i32, %c0_i32_0 : i32, i32
  }
  func.func @transform_14(%arg0: i32) -> (i32, i32) {
    %c0_i32 = arith.constant 0 : i32
    %c0_i32_0 = arith.constant 0 : i32
    %c0_i32_1 = arith.constant 0 : i32
    return %c0_i32, %c0_i32_0 : i32, i32
  }
}

</mosaic_0001>

<llo_original>
// kernel: tpu_custom_call.1
$region0: #{tpu_custom_call.1}
  #allocation0 [shape = 'u32[]', space=smem, size = 0x4, offset = 0x4, fixed_abs, tag = 'smem constant byte address 0x4 - core index']
  #allocation1 [shape = 'u32[72,128]{1,0:T(1,128)}', space=vmem, size = 0x9000, scoped, tag = 'internal scratch']
  #allocation2 [shape = 'f32[578,64]{1,0:T(8,128)}', space=vmem, size = 0x49000, scoped, tag = 'scratch operand']
  #allocation3 [shape = 'f32[92,576]{1,0:T(8,128)}', space=vmem, size = 0x3c000, scoped, tag = 'scratch operand']
  #allocation4 [shape = 'f32[2,576]{1,0:T(2,128)}', space=vmem, size = 0x1400, scoped, tag = 'scratch operand']
  #allocation5 [shape = 'f32[1,1]{1,0:T(1,128)S(1)}', space=vmem, size = 0x200, scoped, tag = 'scoped memory for tpu_custom_call.1']
  %s0 = inlined_call_operand.hbm [shape: f32[578,1152], index: 0, kind: input, shape index: {}]
  %s1 = inlined_call_operand.vmem [shape: f32[1152,64], index: 1, kind: input, shape index: {}]
  %s2 = inlined_call_operand.hbm [shape: f32[1,64], index: 2, kind: input, shape index: {}]
  %s3 = inlined_call_operand.hbm [shape: f32[1,64], index: 3, kind: input, shape index: {}]
  %s4 = inlined_call_operand.hbm [shape: f32[1,64], index: 4, kind: input, shape index: {}]
  %s5 = inlined_call_operand.vmem [shape: f32[576,64], index: 5, kind: input, shape index: {}]
  %s6 = inlined_call_operand.hbm [shape: f32[1,64], index: 6, kind: input, shape index: {}]
  %s7 = inlined_call_operand.hbm [shape: f32[1,64], index: 7, kind: input, shape index: {}]
  %s8 = inlined_call_operand.hbm [shape: f32[1,64], index: 8, kind: input, shape index: {}]
  %s9 = inlined_call_operand.vmem [shape: f32[92,1], index: 9, kind: input, shape index: {}]
  %s10 = inlined_call_operand.vmem [shape: f32[576,32], index: 10, kind: input, shape index: {}]
  %s11 = inlined_call_operand.hbm [shape: f32[1,32], index: 11, kind: input, shape index: {}]
  %s12 = inlined_call_operand.hbm [shape: f32[1,32], index: 12, kind: input, shape index: {}]
  %s13 = inlined_call_operand.<no memory space> [shape: f32[1,1], index: 13, kind: input, shape index: {}]
  %s14 = inlined_call_operand.vmem [shape: f32[2,1], index: 14, kind: output, shape index: {}]
  %s15 = sld [smem:[#allocation0]]
  $region133: #{tpu_custom_call.1} parent=0
    _
  %s17 = ssub.s32 1, %s15
  %s18 = scalar_select 0, %s17, %s15
  %v19 = vstv %s13
  %20 = vst [vmem:[#allocation5] sm:$0x1] %v19
  $region1: #{tpu_custom_call.1} parent=0
    #allocation6 [shape = 'u8[1794048]{0}', space=vmem, size = 0x1b6000, scoped, tag = 'input window, operand 0']
    #allocation7 [shape = 's32[2]{0}', space=sflag, size = 0x8, scoped, tag = 'scoped memory for tpu_custom_call.1']
    #allocation8 [shape = 'u8[512]{0}', space=vmem, size = 0x400, scoped, tag = 'input window, operand 2, single buffered']
    #allocation9 [shape = 's32[1]{0}', space=sflag, size = 0x4, scoped, tag = 'scoped memory for tpu_custom_call.1']
    #allocation10 [shape = 'u8[512]{0}', space=vmem, size = 0x400, scoped, tag = 'input window, operand 3, single buffered']
    #allocation11 [shape = 'u8[512]{0}', space=vmem, size = 0x400, scoped, tag = 'input window, operand 4, single buffered']
    #allocation12 [shape = 's32[1]{0}', space=sflag, size = 0x4, scoped, tag = 'scoped memory for tpu_custom_call.1']
    #allocation13 [shape = 'u8[512]{0}', space=vmem, size = 0x400, scoped, tag = 'input window, operand 6, single buffered']
    #allocation14 [shape = 'u8[512]{0}', space=vmem, size = 0x400, scoped, tag = 'input window, operand 7, single buffered']
    #allocation15 [shape = 's32[1]{0}', space=sflag, size = 0x4, scoped, tag = 'scoped memory for tpu_custom_call.1']
    #allocation16 [shape = 'u8[512]{0}', space=vmem, size = 0x400, scoped, tag = 'input window, operand 8, single buffered']
    #allocation17 [shape = 'u8[512]{0}', space=vmem, size = 0x400, scoped, tag = 'input window, operand 11, single buffered']
    #allocation18 [shape = 's32[1]{0}', space=sflag, size = 0x4, scoped, tag = 'scoped memory for tpu_custom_call.1']
    #allocation19 [shape = 'u8[512]{0}', space=vmem, size = 0x400, scoped, tag = 'input window, operand 12, single buffered']
    %21 = vsyncpa [#allocation7], 0
    %s22 = scalar_lea.sflag [#allocation7], 1
    %23 = vsyncpa %s22, 0
    %24 = vsyncpa [#allocation9], 0
    %25 = vsyncpa [#allocation12], 0
    %26 = vsyncpa [#allocation15], 0
    %27 = vsyncpa [#allocation18], 0
    loop: start=0, step=1, limit=5
    $region2: #{tpu_custom_call.1} parent=1 // loop_pre_header
      _
    $region3: #{tpu_custom_call.1} parent=1 // loop_header
      %s29 = sphi 0, %s33
      %p30 = scmp.ge.s32.totalorder %s29, 5
      %s39 = sphi 0, %s41
      %s42 = sphi 0, %s39
      %s43 = sphi 0, %s42
      %s59 = sphi 0, %s43
      %s65 = sphi 0, %s67
      %s68 = sphi 0, %s65
      %s69 = sphi 0, %s68
      %s85 = sphi 0, %s69
      %s89 = sphi 0, %s89
      %s91 = sphi 0, %s89
      %s92 = sphi 0, %s91
      %s106 = sphi 0, %s92
      %s110 = sphi 0, %s110
      %s112 = sphi 0, %s110
      %s113 = sphi 0, %s112
      %s127 = sphi 0, %s113
      %s131 = sphi 0, %s131
      %s133 = sphi 0, %s131
      %s134 = sphi 0, %s133
      %s148 = sphi 0, %s134
      %s152 = sphi 0, %s152
      %s154 = sphi 0, %s152
      %s155 = sphi 0, %s154
      %s169 = sphi 0, %s155
      %s173 = sphi 0, %s173
      %s175 = sphi 0, %s173
      %s176 = sphi 0, %s175
      %s190 = sphi 0, %s176
      %s194 = sphi 0, %s194
      %s196 = sphi 0, %s194
      %s197 = sphi 0, %s196
      %s211 = sphi 0, %s197
      %s215 = sphi 0, %s215
      %s217 = sphi 0, %s215
      %s218 = sphi 0, %s217
      %s232 = sphi 0, %s218
      %s236 = sphi 0, %s236
      %s238 = sphi 0, %s236
      %s239 = sphi 0, %s238
      %s253 = sphi 0, %s239
      %s257 = sphi 0, %s257
      %s259 = sphi 0, %s257
      %s260 = sphi 0, %s259
      %s274 = sphi 0, %s260
      %s278 = sphi 0, %s278
      %s280 = sphi 0, %s278
      %s281 = sphi 0, %s280
      %s295 = sphi 0, %s281
      %s299 = sphi 0, %s299
      %s301 = sphi 0, %s299
      %s302 = sphi 0, %s301
      %s316 = sphi 0, %s302
      %s320 = sphi 0, %s320
      %s322 = sphi 0, %s320
      %s323 = sphi 0, %s322
      %s337 = sphi 0, %s323
      %s341 = sphi 0, %s341
      %s343 = sphi 0, %s341
      %s344 = sphi 0, %s343
      %s358 = sphi 0, %s344
    $region4: #{tpu_custom_call.1} parent=1 // loop_header_branch
      %32 = sbr.rel (%p30) target = $region8
    $region5: #{tpu_custom_call.1} parent=1 // loop_body
      %s34 = ssub.s32 %s29, 1
      %s35 = ssub.s32 %s29, 2
      %s36 = sadd.s32 %s29, 1
      %s37 = ssub.s32 %s29, %s36
      %p38 = scmp.eq.s32.totalorder %s37, 0
      %s40 = sadd.s32 %s39, 1
      %s41 = scalar_select %p38, %s39, %s40
      %p44 = pneg %p38
      %p45 = scmp.eq.s32.totalorder %s29, 2
      %p46 = por %p44, %p45
      %p47 = scmp.ne.s32.totalorder %s39, %s42
      %p48 = scmp.eq.s32.totalorder %s29, 0
      %p49 = por %p47, %p48
      %p50 = scmp.ne.s32.totalorder %s39, %s42
      %p51 = scmp.eq.s32.totalorder %s34, 2
      %p52 = por %p50, %p51
      %p53 = scmp.ne.s32.totalorder %s42, %s43
      %p54 = scmp.eq.s32.totalorder %s34, 0
      %p55 = por %p53, %p54
      %p56 = scmp.ne.s32.totalorder %s42, %s43
      %p57 = scmp.eq.s32.totalorder %s35, 2
      %p58 = por %p56, %p57
      %p60 = scmp.ne.s32.totalorder %s43, %s59
      %p61 = scmp.eq.s32.totalorder %s35, 0
      %p62 = por %p60, %p61
      %s63 = ssub.s32 %s29, %s36
      %p64 = scmp.eq.s32.totalorder %s63, 0
      %s66 = sadd.s32 %s65, 1
      %s67 = scalar_select %p64, %s65, %s66
      %p70 = pneg %p64
      %p71 = scmp.eq.s32.totalorder %s29, 2
      %p72 = por %p70, %p71
      %p73 = scmp.ne.s32.totalorder %s65, %s68
      %p74 = scmp.eq.s32.totalorder %s29, 0
      %p75 = por %p73, %p74
      %p76 = scmp.ne.s32.totalorder %s65, %s68
      %p77 = scmp.eq.s32.totalorder %s34, 2
      %p78 = por %p76, %p77
      %p79 = scmp.ne.s32.totalorder %s68, %s69
      %p80 = scmp.eq.s32.totalorder %s34, 0
      %p81 = por %p79, %p80
      %p82 = scmp.ne.s32.totalorder %s68, %s69
      %p83 = scmp.eq.s32.totalorder %s35, 2
      %p84 = por %p82, %p83
      %p86 = scmp.ne.s32.totalorder %s69, %s85
      %p87 = scmp.eq.s32.totalorder %s35, 0
      %p88 = por %p86, %p87
      %s90 = sadd.s32 %s89, 1
      %p93 = scmp.eq.s32.totalorder %s29, 2
      %p94 = scmp.ne.s32.totalorder %s89, %s91
      %p95 = scmp.eq.s32.totalorder %s29, 0
      %p96 = por %p94, %p95
      %p97 = scmp.ne.s32.totalorder %s89, %s91
      %p98 = scmp.eq.s32.totalorder %s34, 2
      %p99 = por %p97, %p98
      %p100 = scmp.ne.s32.totalorder %s91, %s92
      %p101 = scmp.eq.s32.totalorder %s34, 0
      %p102 = por %p100, %p101
      %p103 = scmp.ne.s32.totalorder %s91, %s92
      %p104 = scmp.eq.s32.totalorder %s35, 2
      %p105 = por %p103, %p104
      %p107 = scmp.ne.s32.totalorder %s92, %s106
      %p108 = scmp.eq.s32.totalorder %s35, 0
      %p109 = por %p107, %p108
      %s111 = sadd.s32 %s110, 1
      %p114 = scmp.eq.s32.totalorder %s29, 2
      %p115 = scmp.ne.s32.totalorder %s110, %s112
      %p116 = scmp.eq.s32.totalorder %s29, 0
      %p117 = por %p115, %p116
      %p118 = scmp.ne.s32.totalorder %s110, %s112
      %p119 = scmp.eq.s32.totalorder %s34, 2
      %p120 = por %p118, %p119
      %p121 = scmp.ne.s32.totalorder %s112, %s113
      %p122 = scmp.eq.s32.totalorder %s34, 0
      %p123 = por %p121, %p122
      %p124 = scmp.ne.s32.totalorder %s112, %s113
      %p125 = scmp.eq.s32.totalorder %s35, 2
      %p126 = por %p124, %p125
      %p128 = scmp.ne.s32.totalorder %s113, %s127
      %p129 = scmp.eq.s32.totalorder %s35, 0
      %p130 = por %p128, %p129
      %s132 = sadd.s32 %s131, 1
      %p135 = scmp.eq.s32.totalorder %s29, 2
      %p136 = scmp.ne.s32.totalorder %s131, %s133
      %p137 = scmp.eq.s32.totalorder %s29, 0
      %p138 = por %p136, %p137
      %p139 = scmp.ne.s32.totalorder %s131, %s133
      %p140 = scmp.eq.s32.totalorder %s34, 2
      %p141 = por %p139, %p140
      %p142 = scmp.ne.s32.totalorder %s133, %s134
      %p143 = scmp.eq.s32.totalorder %s34, 0
      %p144 = por %p142, %p143
      %p145 = scmp.ne.s32.totalorder %s133, %s134
      %p146 = scmp.eq.s32.totalorder %s35, 2
      %p147 = por %p145, %p146
      %p149 = scmp.ne.s32.totalorder %s134, %s148
      %p150 = scmp.eq.s32.totalorder %s35, 0
      %p151 = por %p149, %p150
      %s153 = sadd.s32 %s152, 1
      %p156 = scmp.eq.s32.totalorder %s29, 2
      %p157 = scmp.ne.s32.totalorder %s152, %s154
      %p158 = scmp.eq.s32.totalorder %s29, 0
      %p159 = por %p157, %p158
      %p160 = scmp.ne.s32.totalorder %s152, %s154
      %p161 = scmp.eq.s32.totalorder %s34, 2
      %p162 = por %p160, %p161
      %p163 = scmp.ne.s32.totalorder %s154, %s155
      %p164 = scmp.eq.s32.totalorder %s34, 0
      %p165 = por %p163, %p164
      %p166 = scmp.ne.s32.totalorder %s154, %s155
      %p167 = scmp.eq.s32.totalorder %s35, 2
      %p168 = por %p166, %p167
      %p170 = scmp.ne.s32.totalorder %s155, %s169
      %p171 = scmp.eq.s32.totalorder %s35, 0
      %p172 = por %p170, %p171
      %s174 = sadd.s32 %s173, 1
      %p177 = scmp.eq.s32.totalorder %s29, 2
      %p178 = scmp.ne.s32.totalorder %s173, %s175
      %p179 = scmp.eq.s32.totalorder %s29, 0
      %p180 = por %p178, %p179
      %p181 = scmp.ne.s32.totalorder %s173, %s175
      %p182 = scmp.eq.s32.totalorder %s34, 2
      %p183 = por %p181, %p182
      %p184 = scmp.ne.s32.totalorder %s175, %s176
      %p185 = scmp.eq.s32.totalorder %s34, 0
      %p186 = por %p184, %p185
      %p187 = scmp.ne.s32.totalorder %s175, %s176
      %p188 = scmp.eq.s32.totalorder %s35, 2
      %p189 = por %p187, %p188
      %p191 = scmp.ne.s32.totalorder %s176, %s190
      %p192 = scmp.eq.s32.totalorder %s35, 0
      %p193 = por %p191, %p192
      %s195 = sadd.s32 %s194, 1
      %p198 = scmp.eq.s32.totalorder %s29, 2
      %p199 = scmp.ne.s32.totalorder %s194, %s196
      %p200 = scmp.eq.s32.totalorder %s29, 0
      %p201 = por %p199, %p200
      %p202 = scmp.ne.s32.totalorder %s194, %s196
      %p203 = scmp.eq.s32.totalorder %s34, 2
      %p204 = por %p202, %p203
      %p205 = scmp.ne.s32.totalorder %s196, %s197
      %p206 = scmp.eq.s32.totalorder %s34, 0
      %p207 = por %p205, %p206
      %p208 = scmp.ne.s32.totalorder %s196, %s197
      %p209 = scmp.eq.s32.totalorder %s35, 2
      %p210 = por %p208, %p209
      %p212 = scmp.ne.s32.totalorder %s197, %s211
      %p213 = scmp.eq.s32.totalorder %s35, 0
      %p214 = por %p212, %p213
      %s216 = sadd.s32 %s215, 1
      %p219 = scmp.eq.s32.totalorder %s29, 2
      %p220 = scmp.ne.s32.totalorder %s215, %s217
      %p221 = scmp.eq.s32.totalorder %s29, 0
      %p222 = por %p220, %p221
      %p223 = scmp.ne.s32.totalorder %s215, %s217
      %p224 = scmp.eq.s32.totalorder %s34, 2
      %p225 = por %p223, %p224
      %p226 = scmp.ne.s32.totalorder %s217, %s218
      %p227 = scmp.eq.s32.totalorder %s34, 0
      %p228 = por %p226, %p227
      %p229 = scmp.ne.s32.totalorder %s217, %s218
      %p230 = scmp.eq.s32.totalorder %s35, 2
      %p231 = por %p229, %p230
      %p233 = scmp.ne.s32.totalorder %s218, %s232
      %p234 = scmp.eq.s32.totalorder %s35, 0
      %p235 = por %p233, %p234
      %s237 = sadd.s32 %s236, 1
      %p240 = scmp.eq.s32.totalorder %s29, 2
      %p241 = scmp.ne.s32.totalorder %s236, %s238
      %p242 = scmp.eq.s32.totalorder %s29, 0
      %p243 = por %p241, %p242
      %p244 = scmp.ne.s32.totalorder %s236, %s238
      %p245 = scmp.eq.s32.totalorder %s34, 2
      %p246 = por %p244, %p245
      %p247 = scmp.ne.s32.totalorder %s238, %s239
      %p248 = scmp.eq.s32.totalorder %s34, 0
      %p249 = por %p247, %p248
      %p250 = scmp.ne.s32.totalorder %s238, %s239
      %p251 = scmp.eq.s32.totalorder %s35, 2
      %p252 = por %p250, %p251
      %p254 = scmp.ne.s32.totalorder %s239, %s253
      %p255 = scmp.eq.s32.totalorder %s35, 0
      %p256 = por %p254, %p255
      %s258 = sadd.s32 %s257, 1
      %p261 = scmp.eq.s32.totalorder %s29, 2
      %p262 = scmp.ne.s32.totalorder %s257, %s259
      %p263 = scmp.eq.s32.totalorder %s29, 0
      %p264 = por %p262, %p263
      %p265 = scmp.ne.s32.totalorder %s257, %s259
      %p266 = scmp.eq.s32.totalorder %s34, 2
      %p267 = por %p265, %p266
      %p268 = scmp.ne.s32.totalorder %s259, %s260
      %p269 = scmp.eq.s32.totalorder %s34, 0
      %p270 = por %p268, %p269
      %p271 = scmp.ne.s32.totalorder %s259, %s260
      %p272 = scmp.eq.s32.totalorder %s35, 2
      %p273 = por %p271, %p272
      %p275 = scmp.ne.s32.totalorder %s260, %s274
      %p276 = scmp.eq.s32.totalorder %s35, 0
      %p277 = por %p275, %p276
      %s279 = sadd.s32 %s278, 1
      %p282 = scmp.eq.s32.totalorder %s29, 2
      %p283 = scmp.ne.s32.totalorder %s278, %s280
      %p284 = scmp.eq.s32.totalorder %s29, 0
      %p285 = por %p283, %p284
      %p286 = scmp.ne.s32.totalorder %s278, %s280
      %p287 = scmp.eq.s32.totalorder %s34, 2
      %p288 = por %p286, %p287
      %p289 = scmp.ne.s32.totalorder %s280, %s281
      %p290 = scmp.eq.s32.totalorder %s34, 0
      %p291 = por %p289, %p290
      %p292 = scmp.ne.s32.totalorder %s280, %s281
      %p293 = scmp.eq.s32.totalorder %s35, 2
      %p294 = por %p292, %p293
      %p296 = scmp.ne.s32.totalorder %s281, %s295
      %p297 = scmp.eq.s32.totalorder %s35, 0
      %p298 = por %p296, %p297
      %s300 = sadd.s32 %s299, 1
      %p303 = scmp.eq.s32.totalorder %s29, 2
      %p304 = scmp.ne.s32.totalorder %s299, %s301
      %p305 = scmp.eq.s32.totalorder %s29, 0
      %p306 = por %p304, %p305
      %p307 = scmp.ne.s32.totalorder %s299, %s301
      %p308 = scmp.eq.s32.totalorder %s34, 2
      %p309 = por %p307, %p308
      %p310 = scmp.ne.s32.totalorder %s301, %s302
      %p311 = scmp.eq.s32.totalorder %s34, 0
      %p312 = por %p310, %p311
      %p313 = scmp.ne.s32.totalorder %s301, %s302
      %p314 = scmp.eq.s32.totalorder %s35, 2
      %p315 = por %p313, %p314
      %p317 = scmp.ne.s32.totalorder %s302, %s316
      %p318 = scmp.eq.s32.totalorder %s35, 0
      %p319 = por %p317, %p318
      %s321 = sadd.s32 %s320, 1
      %p324 = scmp.eq.s32.totalorder %s29, 2
      %p325 = scmp.ne.s32.totalorder %s320, %s322
      %p326 = scmp.eq.s32.totalorder %s29, 0
      %p327 = por %p325, %p326
      %p328 = scmp.ne.s32.totalorder %s320, %s322
      %p329 = scmp.eq.s32.totalorder %s34, 2
      %p330 = por %p328, %p329
      %p331 = scmp.ne.s32.totalorder %s322, %s323
      %p332 = scmp.eq.s32.totalorder %s34, 0
      %p333 = por %p331, %p332
      %p334 = scmp.ne.s32.totalorder %s322, %s323
      %p335 = scmp.eq.s32.totalorder %s35, 2
      %p336 = por %p334, %p335
      %p338 = scmp.ne.s32.totalorder %s323, %s337
      %p339 = scmp.eq.s32.totalorder %s35, 0
      %p340 = por %p338, %p339
      %s342 = sadd.s32 %s341, 1
      %p345 = scmp.eq.s32.totalorder %s29, 2
      %p346 = scmp.ne.s32.totalorder %s341, %s343
      %p347 = scmp.eq.s32.totalorder %s29, 0
      %p348 = por %p346, %p347
      %p349 = scmp.ne.s32.totalorder %s341, %s343
      %p350 = scmp.eq.s32.totalorder %s34, 2
      %p351 = por %p349, %p350
      %p352 = scmp.ne.s32.totalorder %s343, %s344
      %p353 = scmp.eq.s32.totalorder %s34, 0
      %p354 = por %p352, %p353
      %p355 = scmp.ne.s32.totalorder %s343, %s344
      %p356 = scmp.eq.s32.totalorder %s35, 2
      %p357 = por %p355, %p356
      %p359 = scmp.ne.s32.totalorder %s344, %s358
      %p360 = scmp.eq.s32.totalorder %s35, 0
      %p361 = por %p359, %p360
      %p362 = scmp.le.s32.totalorder 1, %s29
      %p363 = scmp.lt.s32.totalorder %s29, 4
      %p364 = pnand %p362, %p363
      %p365 = pneg %p364
      // Predicated region
      $region9: #{tpu_custom_call.1} parent=5 // pred_check
        _
      $region10: #{tpu_custom_call.1} parent=5 // pred_check_branch
        %367 = sbr.rel (%p364) target = $region12
      $region11: #{tpu_custom_call.1} parent=5 // pred_region
        %s368 = ssub.s32 %s29, 1
        // Predicated region
        $region13: #{tpu_custom_call.1} parent=11 // pred_check
          %p369 = pneg %p102
        $region14: #{tpu_custom_call.1} parent=11 // pred_check_branch
          %371 = sbr.rel (%p369) target = $region16
        $region15: #{tpu_custom_call.1} parent=11 // pred_region
          %373 = vsyncadd [#allocation9], 0
          %s375 = sshll.u32 %s2, 4
          %s376 = int_to_ptr.hbm [resolvable:$true] %s375
          %s377 = sshll.u32 [#allocation8], 4
          %s378 = int_to_ptr.vmem [resolvable:$true] %s377
          %380 = dma.hbm_to_vmem [thread:$0]  %s376, 16, %s378, [#allocation9]
        $region16: #{tpu_custom_call.1} parent=11 // pred_fallthru
          _
        // Predicated region
        $region17: #{tpu_custom_call.1} parent=11 // pred_check
          %p381 = pneg %p123
        $region18: #{tpu_custom_call.1} parent=11 // pred_check_branch
          %383 = sbr.rel (%p381) target = $region20
        $region19: #{tpu_custom_call.1} parent=11 // pred_region
          %385 = vsyncadd [#allocation9], 0
          %s387 = sshll.u32 %s3, 4
          %s388 = int_to_ptr.hbm [resolvable:$true] %s387
          %s389 = sshll.u32 [#allocation10], 4
          %s390 = int_to_ptr.vmem [resolvable:$true] %s389
          %392 = dma.hbm_to_vmem [thread:$0]  %s388, 16, %s390, [#allocation9]
        $region20: #{tpu_custom_call.1} parent=11 // pred_fallthru
          _
        // Predicated region
        $region21: #{tpu_custom_call.1} parent=11 // pred_check
          %p393 = pneg %p144
        $region22: #{tpu_custom_call.1} parent=11 // pred_check_branch
          %395 = sbr.rel (%p393) target = $region24
        $region23: #{tpu_custom_call.1} parent=11 // pred_region
          %397 = vsyncadd [#allocation12], 0
          %s399 = sshll.u32 %s4, 4
          %s400 = int_to_ptr.hbm [resolvable:$true] %s399
          %s401 = sshll.u32 [#allocation11], 4
          %s402 = int_to_ptr.vmem [resolvable:$true] %s401
          %404 = dma.hbm_to_vmem [thread:$0]  %s400, 16, %s402, [#allocation12]
        $region24: #{tpu_custom_call.1} parent=11 // pred_fallthru
          _
        // Predicated region
        $region25: #{tpu_custom_call.1} parent=11 // pred_check
          %p405 = pneg %p165
        $region26: #{tpu_custom_call.1} parent=11 // pred_check_branch
          %407 = sbr.rel (%p405) target = $region28
        $region27: #{tpu_custom_call.1} parent=11 // pred_region
          _
        $region28: #{tpu_custom_call.1} parent=11 // pred_fallthru
          _
        // Predicated region
        $region29: #{tpu_custom_call.1} parent=11 // pred_check
          %p408 = pneg %p186
        $region30: #{tpu_custom_call.1} parent=11 // pred_check_branch
          %410 = sbr.rel (%p408) target = $region32
        $region31: #{tpu_custom_call.1} parent=11 // pred_region
          %412 = vsyncadd [#allocation12], 0
          %s414 = sshll.u32 %s6, 4
          %s415 = int_to_ptr.hbm [resolvable:$true] %s414
          %s416 = sshll.u32 [#allocation13], 4
          %s417 = int_to_ptr.vmem [resolvable:$true] %s416
          %419 = dma.hbm_to_vmem [thread:$0]  %s415, 16, %s417, [#allocation12]
        $region32: #{tpu_custom_call.1} parent=11 // pred_fallthru
          _
        // Predicated region
        $region33: #{tpu_custom_call.1} parent=11 // pred_check
          %p420 = pneg %p207
        $region34: #{tpu_custom_call.1} parent=11 // pred_check_branch
          %422 = sbr.rel (%p420) target = $region36
        $region35: #{tpu_custom_call.1} parent=11 // pred_region
          %424 = vsyncadd [#allocation15], 0
          %s426 = sshll.u32 %s7, 4
          %s427 = int_to_ptr.hbm [resolvable:$true] %s426
          %s428 = sshll.u32 [#allocation14], 4
          %s429 = int_to_ptr.vmem [resolvable:$true] %s428
          %431 = dma.hbm_to_vmem [thread:$0]  %s427, 16, %s429, [#allocation15]
        $region36: #{tpu_custom_call.1} parent=11 // pred_fallthru
          _
        // Predicated region
        $region37: #{tpu_custom_call.1} parent=11 // pred_check
          %p432 = pneg %p228
        $region38: #{tpu_custom_call.1} parent=11 // pred_check_branch
          %434 = sbr.rel (%p432) target = $region40
        $region39: #{tpu_custom_call.1} parent=11 // pred_region
          %436 = vsyncadd [#allocation15], 0
          %s438 = sshll.u32 %s8, 4
          %s439 = int_to_ptr.hbm [resolvable:$true] %s438
          %s440 = sshll.u32 [#allocation16], 4
          %s441 = int_to_ptr.vmem [resolvable:$true] %s440
          %443 = dma.hbm_to_vmem [thread:$0]  %s439, 16, %s441, [#allocation15]
        $region40: #{tpu_custom_call.1} parent=11 // pred_fallthru
          _
        // Predicated region
        $region41: #{tpu_custom_call.1} parent=11 // pred_check
          %p444 = pneg %p249
        $region42: #{tpu_custom_call.1} parent=11 // pred_check_branch
          %446 = sbr.rel (%p444) target = $region44
        $region43: #{tpu_custom_call.1} parent=11 // pred_region
          _
        $region44: #{tpu_custom_call.1} parent=11 // pred_fallthru
          _
        // Predicated region
        $region45: #{tpu_custom_call.1} parent=11 // pred_check
          %p447 = pneg %p270
        $region46: #{tpu_custom_call.1} parent=11 // pred_check_branch
          %449 = sbr.rel (%p447) target = $region48
        $region47: #{tpu_custom_call.1} parent=11 // pred_region
          _
        $region48: #{tpu_custom_call.1} parent=11 // pred_fallthru
          _
        // Predicated region
        $region49: #{tpu_custom_call.1} parent=11 // pred_check
          %p450 = pneg %p291
        $region50: #{tpu_custom_call.1} parent=11 // pred_check_branch
          %452 = sbr.rel (%p450) target = $region52
        $region51: #{tpu_custom_call.1} parent=11 // pred_region
          %454 = vsyncadd [#allocation18], 0
          %s456 = sshll.u32 %s11, 4
          %s457 = int_to_ptr.hbm [resolvable:$true] %s456
          %s458 = sshll.u32 [#allocation17], 4
          %s459 = int_to_ptr.vmem [resolvable:$true] %s458
          %461 = dma.hbm_to_vmem [thread:$0]  %s457, 16, %s459, [#allocation18]
        $region52: #{tpu_custom_call.1} parent=11 // pred_fallthru
          _
        // Predicated region
        $region53: #{tpu_custom_call.1} parent=11 // pred_check
          %p462 = pneg %p312
        $region54: #{tpu_custom_call.1} parent=11 // pred_check_branch
          %464 = sbr.rel (%p462) target = $region56
        $region55: #{tpu_custom_call.1} parent=11 // pred_region
          %466 = vsyncadd [#allocation18], 0
          %s468 = sshll.u32 %s12, 4
          %s469 = int_to_ptr.hbm [resolvable:$true] %s468
          %s470 = sshll.u32 [#allocation19], 4
          %s471 = int_to_ptr.vmem [resolvable:$true] %s470
          %473 = dma.hbm_to_vmem [thread:$0]  %s469, 16, %s471, [#allocation18]
        $region56: #{tpu_custom_call.1} parent=11 // pred_fallthru
          _
        // Predicated region
        $region57: #{tpu_custom_call.1} parent=11 // pred_check
          %p474 = pneg %p333
        $region58: #{tpu_custom_call.1} parent=11 // pred_check_branch
          %476 = sbr.rel (%p474) target = $region60
        $region59: #{tpu_custom_call.1} parent=11 // pred_region
          _
        $region60: #{tpu_custom_call.1} parent=11 // pred_fallthru
          _
      $region12: #{tpu_custom_call.1} parent=5 // pred_fallthru
        _
      %p477 = scmp.lt.s32.totalorder %s29, 3
      // Predicated region
      $region61: #{tpu_custom_call.1} parent=5 // pred_check
        %p478 = pneg %p477
      $region62: #{tpu_custom_call.1} parent=5 // pred_check_branch
        %480 = sbr.rel (%p478) target = $region64
      $region63: #{tpu_custom_call.1} parent=5 // pred_region
        // Predicated region
        $region65: #{tpu_custom_call.1} parent=63 // pred_check
          %p481 = pneg %p49
        $region66: #{tpu_custom_call.1} parent=63 // pred_check_branch
          %483 = sbr.rel (%p481) target = $region68
        $region67: #{tpu_custom_call.1} parent=63 // pred_region
          %s484 = sand.u32 %s39, 1
          %s485 = scalar_lea.sflag [#allocation7], %s484
          %s486 = sand.u32 %s39, 1
          %s487 = smul.addr %s486, 1752
          %s488 = scalar_lea.vmem [#allocation6], %s487
          %s489 = smul.u32 3, %s29
          %491 = vsyncadd %s485, 0
          %s492 = smul.addr %s489, 8
          %s493 = scalar_lea.hbm %s0, %s492
          %s494 = sshll.u32 %s493, 4
          %s495 = int_to_ptr.hbm [resolvable:$true] %s494
          %s496 = sshll.u32 %s488, 4
          %s497 = int_to_ptr.vmem [resolvable:$true] %s496
          %502 = dma.hbm_to_vmem [thread:$0]  %s495, 28032, %s497, %s485, 1152, 384, 24
        $region68: #{tpu_custom_call.1} parent=63 // pred_fallthru
          _
        // Predicated region
        $region69: #{tpu_custom_call.1} parent=63 // pred_check
          %p503 = pneg %p75
        $region70: #{tpu_custom_call.1} parent=63 // pred_check_branch
          %505 = sbr.rel (%p503) target = $region72
        $region71: #{tpu_custom_call.1} parent=63 // pred_region
          %s506 = smul.u32 48, %s29
          %p507 = scmp.lt.s32.totalorder %s506, 143
          %s508 = scalar_select %p507, %s506, 143
          %s509 = smul.addr %s508, 8
          %s510 = scalar_lea.vmem %s1, %s509
          %s511 = smul.u32 48, %s29
        $region72: #{tpu_custom_call.1} parent=63 // pred_fallthru
          _
      $region64: #{tpu_custom_call.1} parent=5 // pred_fallthru
        _
      %p512 = scmp.le.s32.totalorder 1, %s29
      %p513 = scmp.lt.s32.totalorder %s29, 4
      %p514 = pnand %p512, %p513
      %p515 = pneg %p514
      // Predicated region
      $region73: #{tpu_custom_call.1} parent=5 // pred_check
        _
      $region74: #{tpu_custom_call.1} parent=5 // pred_check_branch
        %517 = sbr.rel (%p514) target = $region76
      $region75: #{tpu_custom_call.1} parent=5 // pred_region
        %s518 = ssub.s32 %s29, 1
        %s519 = sand.u32 %s42, 1
        %s520 = scalar_lea.sflag [#allocation7], %s519
        %s521 = sand.u32 %s42, 1
        %s522 = smul.addr %s521, 1752
        %s523 = scalar_lea.vmem [#allocation6], %s522
        // Predicated region
        $region77: #{tpu_custom_call.1} parent=75 // pred_check
          %p524 = pneg %p55
        $region78: #{tpu_custom_call.1} parent=75 // pred_check_branch
          %526 = sbr.rel (%p524) target = $region80
        $region79: #{tpu_custom_call.1} parent=75 // pred_region
          %528 = dma.done %s520, 28032
        $region80: #{tpu_custom_call.1} parent=75 // pred_fallthru
          _
        // Predicated region
        $region81: #{tpu_custom_call.1} parent=75 // pred_check
          %p529 = pneg %p102
        $region82: #{tpu_custom_call.1} parent=75 // pred_check_branch
          %531 = sbr.rel (%p529) target = $region84
        $region83: #{tpu_custom_call.1} parent=75 // pred_region
          %533 = dma.done [#allocation9], 16
        $region84: #{tpu_custom_call.1} parent=75 // pred_fallthru
          _
        // Predicated region
        $region85: #{tpu_custom_call.1} parent=75 // pred_check
          %p534 = pneg %p123
        $region86: #{tpu_custom_call.1} parent=75 // pred_check_branch
          %536 = sbr.rel (%p534) target = $region88
        $region87: #{tpu_custom_call.1} parent=75 // pred_region
          %538 = dma.done [#allocation9], 16
        $region88: #{tpu_custom_call.1} parent=75 // pred_fallthru
          _
        // Predicated region
        $region89: #{tpu_custom_call.1} parent=75 // pred_check
          %p539 = pneg %p144
        $region90: #{tpu_custom_call.1} parent=75 // pred_check_branch
          %541 = sbr.rel (%p539) target = $region92
        $region91: #{tpu_custom_call.1} parent=75 // pred_region
          %543 = dma.done [#allocation12], 16
        $region92: #{tpu_custom_call.1} parent=75 // pred_fallthru
          _
        // Predicated region
        $region93: #{tpu_custom_call.1} parent=75 // pred_check
          %p544 = pneg %p186
        $region94: #{tpu_custom_call.1} parent=75 // pred_check_branch
          %546 = sbr.rel (%p544) target = $region96
        $region95: #{tpu_custom_call.1} parent=75 // pred_region
          %548 = dma.done [#allocation12], 16
        $region96: #{tpu_custom_call.1} parent=75 // pred_fallthru
          _
        // Predicated region
        $region97: #{tpu_custom_call.1} parent=75 // pred_check
          %p549 = pneg %p207
        $region98: #{tpu_custom_call.1} parent=75 // pred_check_branch
          %551 = sbr.rel (%p549) target = $region100
        $region99: #{tpu_custom_call.1} parent=75 // pred_region
          %553 = dma.done [#allocation15], 16
        $region100: #{tpu_custom_call.1} parent=75 // pred_fallthru
          _
        // Predicated region
        $region101: #{tpu_custom_call.1} parent=75 // pred_check
          %p554 = pneg %p228
        $region102: #{tpu_custom_call.1} parent=75 // pred_check_branch
          %556 = sbr.rel (%p554) target = $region104
        $region103: #{tpu_custom_call.1} parent=75 // pred_region
          %558 = dma.done [#allocation15], 16
        $region104: #{tpu_custom_call.1} parent=75 // pred_fallthru
          _
        // Predicated region
        $region105: #{tpu_custom_call.1} parent=75 // pred_check
          %p559 = pneg %p291
        $region106: #{tpu_custom_call.1} parent=75 // pred_check_branch
          %561 = sbr.rel (%p559) target = $region108
        $region107: #{tpu_custom_call.1} parent=75 // pred_region
          %563 = dma.done [#allocation18], 16
        $region108: #{tpu_custom_call.1} parent=75 // pred_fallthru
          _
        // Predicated region
        $region109: #{tpu_custom_call.1} parent=75 // pred_check
          %p564 = pneg %p312
        $region110: #{tpu_custom_call.1} parent=75 // pred_check_branch
          %566 = sbr.rel (%p564) target = $region112
        $region111: #{tpu_custom_call.1} parent=75 // pred_region
          %568 = dma.done [#allocation18], 16
        $region112: #{tpu_custom_call.1} parent=75 // pred_fallthru
          _
        %s569 = sand.u32 %s42, 1
        %s570 = scalar_lea.sflag [#allocation7], %s569
        %s571 = sand.u32 %s42, 1
        %s572 = smul.addr %s571, 1752
        %s573 = scalar_lea.vmem [#allocation6], %s572
        %p574 = pneg %p55
        %p575 = pneg %p52
        %s576 = smul.u32 48, %s34
        %p577 = scmp.lt.s32.totalorder %s576, 143
        %s578 = scalar_select %p577, %s576, 143
        %s579 = smul.addr %s578, 8
        %s580 = scalar_lea.vmem %s1, %s579
        %p581 = pneg %p81
        %p582 = pneg %p78
        %p583 = pneg %p102
        %p584 = pneg %p99
        %p585 = pneg %p123
        %p586 = pneg %p120
        %p587 = pneg %p144
        %p588 = pneg %p141
        %p589 = pneg %p165
        %p590 = pneg %p162
        %p591 = pneg %p186
        %p592 = pneg %p183
        %p593 = pneg %p207
        %p594 = pneg %p204
        %p595 = pneg %p228
        %p596 = pneg %p225
        %p597 = pneg %p249
        %p598 = pneg %p246
        %p599 = pneg %p270
        %p600 = pneg %p267
        %p601 = pneg %p291
        %p602 = pneg %p288
        %p603 = pneg %p312
        %p604 = pneg %p309
        %p605 = pneg %p333
        %p606 = pneg %p330
        %p607 = pneg %p354
        %p608 = pneg %p351
        %s609 = smul.u32 3, %s34
        %s610 = smul.u32 48, %s34
        %p611 = scmp.lt.s32.totalorder %s610, 143
        %s612 = scalar_select %p611, %s610, 143
        %s613 = smul.addr %s612, 8
        %s614 = scalar_lea.vmem %s1, %s613
        %s615 = smul.u32 48, %s34
        %p616 = scmp.eq.s32.totalorder %s34, 0
        // Predicated region
        $region113: #{tpu_custom_call.1} parent=75 // pred_check
          %p617 = pneg %p616
        $region114: #{tpu_custom_call.1} parent=75 // pred_check_branch
          %619 = sbr.rel (%p617) target = $region116
        $region115: #{tpu_custom_call.1} parent=75 // pred_region
          %vm620 = vcmask 523264
          %621 = vst.msk [vmem:[#allocation2] sm:$0xff] %vm620, 0.0
          %622 = vst.msk [vmem:[#allocation2 + $0x8] sm:$0xff] %vm620, 0.0
          %623 = vst.msk [vmem:[#allocation2 + $0x10] sm:$0xff] %vm620, 0.0
          %624 = vst.msk [vmem:[#allocation2 + $0x18] sm:$0xff] %vm620, 0.0
          %625 = vst.msk [vmem:[#allocation2 + $0x20] sm:$0xff] %vm620, 0.0
          %626 = vst.msk [vmem:[#allocation2 + $0x28] sm:$0xff] %vm620, 0.0
          %627 = vst.msk [vmem:[#allocation2 + $0x30] sm:$0xff] %vm620, 0.0
          %628 = vst.msk [vmem:[#allocation2 + $0x38] sm:$0xff] %vm620, 0.0
          %629 = vst.msk [vmem:[#allocation2 + $0x40] sm:$0xff] %vm620, 0.0
          %630 = vst.msk [vmem:[#allocation2 + $0x48] sm:$0xff] %vm620, 0.0
          %631 = vst.msk [vmem:[#allocation2 + $0x50] sm:$0xff] %vm620, 0.0
          %632 = vst.msk [vmem:[#allocation2 + $0x58] sm:$0xff] %vm620, 0.0
          %633 = vst.msk [vmem:[#allocation2 + $0x60] sm:$0xff] %vm620, 0.0
          %634 = vst.msk [vmem:[#allocation2 + $0x68] sm:$0xff] %vm620, 0.0
          %635 = vst.msk [vmem:[#allocation2 + $0x70] sm:$0xff] %vm620, 0.0
          %636 = vst.msk [vmem:[#allocation2 + $0x78] sm:$0xff] %vm620, 0.0
          %637 = vst.msk [vmem:[#allocation2 + $0x80] sm:$0xff] %vm620, 0.0
          %638 = vst.msk [vmem:[#allocation2 + $0x88] sm:$0xff] %vm620, 0.0
          %639 = vst.msk [vmem:[#allocation2 + $0x90] sm:$0xff] %vm620, 0.0
          %640 = vst.msk [vmem:[#allocation2 + $0x98] sm:$0xff] %vm620, 0.0
          %641 = vst.msk [vmem:[#allocation2 + $0xa0] sm:$0xff] %vm620, 0.0
          %642 = vst.msk [vmem:[#allocation2 + $0xa8] sm:$0xff] %vm620, 0.0
          %643 = vst.msk [vmem:[#allocation2 + $0xb0] sm:$0xff] %vm620, 0.0
          %644 = vst.msk [vmem:[#allocation2 + $0xb8] sm:$0xff] %vm620, 0.0
          %645 = vst.msk [vmem:[#allocation2 + $0xc0] sm:$0xff] %vm620, 0.0
          %646 = vst.msk [vmem:[#allocation2 + $0xc8] sm:$0xff] %vm620, 0.0
          %647 = vst.msk [vmem:[#allocation2 + $0xd0] sm:$0xff] %vm620, 0.0
          %648 = vst.msk [vmem:[#allocation2 + $0xd8] sm:$0xff] %vm620, 0.0
          %649 = vst.msk [vmem:[#allocation2 + $0xe0] sm:$0xff] %vm620, 0.0
          %650 = vst.msk [vmem:[#allocation2 + $0xe8] sm:$0xff] %vm620, 0.0
          %651 = vst.msk [vmem:[#allocation2 + $0xf0] sm:$0xff] %vm620, 0.0
          %652 = vst.msk [vmem:[#allocation2 + $0xf8] sm:$0xff] %vm620, 0.0
          %653 = vst.msk [vmem:[#allocation2 + $0x100] sm:$0xff] %vm620, 0.0
          %654 = vst.msk [vmem:[#allocation2 + $0x108] sm:$0xff] %vm620, 0.0
          %655 = vst.msk [vmem:[#allocation2 + $0x110] sm:$0xff] %vm620, 0.0
          %656 = vst.msk [vmem:[#allocation2 + $0x118] sm:$0xff] %vm620, 0.0
          %657 = vst.msk [vmem:[#allocation2 + $0x120] sm:$0xff] %vm620, 0.0
          %658 = vst.msk [vmem:[#allocation2 + $0x128] sm:$0xff] %vm620, 0.0
          %659 = vst.msk [vmem:[#allocation2 + $0x130] sm:$0xff] %vm620, 0.0
          %660 = vst.msk [vmem:[#allocation2 + $0x138] sm:$0xff] %vm620, 0.0
          %661 = vst.msk [vmem:[#allocation2 + $0x140] sm:$0xff] %vm620, 0.0
          %662 = vst.msk [vmem:[#allocation2 + $0x148] sm:$0xff] %vm620, 0.0
          %663 = vst.msk [vmem:[#allocation2 + $0x150] sm:$0xff] %vm620, 0.0
          %664 = vst.msk [vmem:[#allocation2 + $0x158] sm:$0xff] %vm620, 0.0
          %665 = vst.msk [vmem:[#allocation2 + $0x160] sm:$0xff] %vm620, 0.0
          %666 = vst.msk [vmem:[#allocation2 + $0x168] sm:$0xff] %vm620, 0.0
          %667 = vst.msk [vmem:[#allocation2 + $0x170] sm:$0xff] %vm620, 0.0
          %668 = vst.msk [vmem:[#allocation2 + $0x178] sm:$0xff] %vm620, 0.0
          %669 = vst.msk [vmem:[#allocation2 + $0x180] sm:$0xff] %vm620, 0.0
          %670 = vst.msk [vmem:[#allocation2 + $0x188] sm:$0xff] %vm620, 0.0
          %671 = vst.msk [vmem:[#allocation2 + $0x190] sm:$0xff] %vm620, 0.0
          %672 = vst.msk [vmem:[#allocation2 + $0x198] sm:$0xff] %vm620, 0.0
          %673 = vst.msk [vmem:[#allocation2 + $0x1a0] sm:$0xff] %vm620, 0.0
          %674 = vst.msk [vmem:[#allocation2 + $0x1a8] sm:$0xff] %vm620, 0.0
          %675 = vst.msk [vmem:[#allocation2 + $0x1b0] sm:$0xff] %vm620, 0.0
          %676 = vst.msk [vmem:[#allocation2 + $0x1b8] sm:$0xff] %vm620, 0.0
          %677 = vst.msk [vmem:[#allocation2 + $0x1c0] sm:$0xff] %vm620, 0.0
          %678 = vst.msk [vmem:[#allocation2 + $0x1c8] sm:$0xff] %vm620, 0.0
          %679 = vst.msk [vmem:[#allocation2 + $0x1d0] sm:$0xff] %vm620, 0.0
          %680 = vst.msk [vmem:[#allocation2 + $0x1d8] sm:$0xff] %vm620, 0.0
          %681 = vst.msk [vmem:[#allocation2 + $0x1e0] sm:$0xff] %vm620, 0.0
          %682 = vst.msk [vmem:[#allocation2 + $0x1e8] sm:$0xff] %vm620, 0.0
          %683 = vst.msk [vmem:[#allocation2 + $0x1f0] sm:$0xff] %vm620, 0.0
          %684 = vst.msk [vmem:[#allocation2 + $0x1f8] sm:$0xff] %vm620, 0.0
          %685 = vst.msk [vmem:[#allocation2 + $0x200] sm:$0xff] %vm620, 0.0
          %686 = vst.msk [vmem:[#allocation2 + $0x208] sm:$0xff] %vm620, 0.0
          %687 = vst.msk [vmem:[#allocation2 + $0x210] sm:$0xff] %vm620, 0.0
          %688 = vst.msk [vmem:[#allocation2 + $0x218] sm:$0xff] %vm620, 0.0
          %689 = vst.msk [vmem:[#allocation2 + $0x220] sm:$0xff] %vm620, 0.0
          %690 = vst.msk [vmem:[#allocation2 + $0x228] sm:$0xff] %vm620, 0.0
          %691 = vst.msk [vmem:[#allocation2 + $0x230] sm:$0xff] %vm620, 0.0
          %692 = vst.msk [vmem:[#allocation2 + $0x238] sm:$0xff] %vm620, 0.0
          %vm693 = vcmask 517120
          %694 = vst.msk [vmem:[#allocation2 + $0x240] sm:$0x3] %vm693, 0.0
        $region116: #{tpu_custom_call.1} parent=75 // pred_fallthru
          _
        %v695 = vld [vmem:[#allocation2] sm:$0xff]
        %v696 = vld [vmem:[#allocation2 + $0x8] sm:$0xff]
        %v697 = vld [vmem:[#allocation2 + $0x10] sm:$0xff]
        %v698 = vld [vmem:[#allocation2 + $0x18] sm:$0xff]
        %v699 = vld [vmem:[#allocation2 + $0x20] sm:$0xff]
        %v700 = vld [vmem:[#allocation2 + $0x28] sm:$0xff]
        %v701 = vld [vmem:[#allocation2 + $0x30] sm:$0xff]
        %v702 = vld [vmem:[#allocation2 + $0x38] sm:$0xff]
        %v703 = vld [vmem:[#allocation2 + $0x40] sm:$0xff]
        %v704 = vld [vmem:[#allocation2 + $0x48] sm:$0xff]
        %v705 = vld [vmem:[#allocation2 + $0x50] sm:$0xff]
        %v706 = vld [vmem:[#allocation2 + $0x58] sm:$0xff]
        %v707 = vld [vmem:[#allocation2 + $0x60] sm:$0xff]
        %v708 = vld [vmem:[#allocation2 + $0x68] sm:$0xff]
        %v709 = vld [vmem:[#allocation2 + $0x70] sm:$0xff]
        %v710 = vld [vmem:[#allocation2 + $0x78] sm:$0xff]
        %v711 = vld [vmem:[#allocation2 + $0x80] sm:$0xff]
        %v712 = vld [vmem:[#allocation2 + $0x88] sm:$0xff]
        %v713 = vld [vmem:[#allocation2 + $0x90] sm:$0xff]
        %v714 = vld [vmem:[#allocation2 + $0x98] sm:$0xff]
        %v715 = vld [vmem:[#allocation2 + $0xa0] sm:$0xff]
        %v716 = vld [vmem:[#allocation2 + $0xa8] sm:$0xff]
        %v717 = vld [vmem:[#allocation2 + $0xb0] sm:$0xff]
        %v718 = vld [vmem:[#allocation2 + $0xb8] sm:$0xff]
        %v719 = vld [vmem:[#allocation2 + $0xc0] sm:$0xff]
        %v720 = vld [vmem:[#allocation2 + $0xc8] sm:$0xff]
        %v721 = vld [vmem:[#allocation2 + $0xd0] sm:$0xff]
        %v722 = vld [vmem:[#allocation2 + $0xd8] sm:$0xff]
        %v723 = vld [vmem:[#allocation2 + $0xe0] sm:$0xff]
        %v724 = vld [vmem:[#allocation2 + $0xe8] sm:$0xff]
        %v725 = vld [vmem:[#allocation2 + $0xf0] sm:$0xff]
        %v726 = vld [vmem:[#allocation2 + $0xf8] sm:$0xff]
        %v727 = vld [vmem:[#allocation2 + $0x100] sm:$0xff]
        %v728 = vld [vmem:[#allocation2 + $0x108] sm:$0xff]
        %v729 = vld [vmem:[#allocation2 + $0x110] sm:$0xff]
        %v730 = vld [vmem:[#allocation2 + $0x118] sm:$0xff]
        %v731 = vld [vmem:[#allocation2 + $0x120] sm:$0xff]
        %v732 = vld [vmem:[#allocation2 + $0x128] sm:$0xff]
        %v733 = vld [vmem:[#allocation2 + $0x130] sm:$0xff]
        %v734 = vld [vmem:[#allocation2 + $0x138] sm:$0xff]
        %v735 = vld [vmem:[#allocation2 + $0x140] sm:$0xff]
        %v736 = vld [vmem:[#allocation2 + $0x148] sm:$0xff]
        %v737 = vld [vmem:[#allocation2 + $0x150] sm:$0xff]
        %v738 = vld [vmem:[#allocation2 + $0x158] sm:$0xff]
        %v739 = vld [vmem:[#allocation2 + $0x160] sm:$0xff]
        %v740 = vld [vmem:[#allocation2 + $0x168] sm:$0xff]
        %v741 = vld [vmem:[#allocation2 + $0x170] sm:$0xff]
        %v742 = vld [vmem:[#allocation2 + $0x178] sm:$0xff]
        %v743 = vld [vmem:[#allocation2 + $0x180] sm:$0xff]
        %v744 = vld [vmem:[#allocation2 + $0x188] sm:$0xff]
        %v745 = vld [vmem:[#allocation2 + $0x190] sm:$0xff]
        %v746 = vld [vmem:[#allocation2 + $0x198] sm:$0xff]
        %v747 = vld [vmem:[#allocation2 + $0x1a0] sm:$0xff]
        %v748 = vld [vmem:[#allocation2 + $0x1a8] sm:$0xff]
        %v749 = vld [vmem:[#allocation2 + $0x1b0] sm:$0xff]
        %v750 = vld [vmem:[#allocation2 + $0x1b8] sm:$0xff]
        %v751 = vld [vmem:[#allocation2 + $0x1c0] sm:$0xff]
        %v752 = vld [vmem:[#allocation2 + $0x1c8] sm:$0xff]
        %v753 = vld [vmem:[#allocation2 + $0x1d0] sm:$0xff]
        %v754 = vld [vmem:[#allocation2 + $0x1d8] sm:$0xff]
        %v755 = vld [vmem:[#allocation2 + $0x1e0] sm:$0xff]
        %v756 = vld [vmem:[#allocation2 + $0x1e8] sm:$0xff]
        %v757 = vld [vmem:[#allocation2 + $0x1f0] sm:$0xff]
        %v758 = vld [vmem:[#allocation2 + $0x1f8] sm:$0xff]
        %v759 = vld [vmem:[#allocation2 + $0x200] sm:$0xff]
        %v760 = vld [vmem:[#allocation2 + $0x208] sm:$0xff]
        %v761 = vld [vmem:[#allocation2 + $0x210] sm:$0xff]
        %v762 = vld [vmem:[#allocation2 + $0x218] sm:$0xff]
        %v763 = vld [vmem:[#allocation2 + $0x220] sm:$0xff]
        %v764 = vld [vmem:[#allocation2 + $0x228] sm:$0xff]
        %v765 = vld [vmem:[#allocation2 + $0x230] sm:$0xff]
        %v766 = vld [vmem:[#allocation2 + $0x238] sm:$0xff]
        %v767 = vld [vmem:[#allocation2 + $0x240] sm:$0x3]
        %v768 = vld [vmem:[%s523] sm:$0xff]
        %v769 = vld [vmem:[%s523 + $0x8] sm:$0xff]
        %v770 = vld [vmem:[%s523 + $0x10] sm:$0xff]
        %v771 = vld [vmem:[%s523 + $0x18] sm:$0xff]
        %v772 = vld [vmem:[%s523 + $0x20] sm:$0xff]
        %v773 = vld [vmem:[%s523 + $0x28] sm:$0xff]
        %v774 = vld [vmem:[%s523 + $0x30] sm:$0xff]
        %v775 = vld [vmem:[%s523 + $0x38] sm:$0xff]
        %v776 = vld [vmem:[%s523 + $0x40] sm:$0xff]
        %v777 = vld [vmem:[%s523 + $0x48] sm:$0xff]
        %v778 = vld [vmem:[%s523 + $0x50] sm:$0xff]
        %v779 = vld [vmem:[%s523 + $0x58] sm:$0xff]
        %v780 = vld [vmem:[%s523 + $0x60] sm:$0xff]
        %v781 = vld [vmem:[%s523 + $0x68] sm:$0xff]
        %v782 = vld [vmem:[%s523 + $0x70] sm:$0xff]
        %v783 = vld [vmem:[%s523 + $0x78] sm:$0xff]
        %v784 = vld [vmem:[%s523 + $0x80] sm:$0xff]
        %v785 = vld [vmem:[%s523 + $0x88] sm:$0xff]
        %v786 = vld [vmem:[%s523 + $0x90] sm:$0xff]
        %v787 = vld [vmem:[%s523 + $0x98] sm:$0xff]
        %v788 = vld [vmem:[%s523 + $0xa0] sm:$0xff]
        %v789 = vld [vmem:[%s523 + $0xa8] sm:$0xff]
        %v790 = vld [vmem:[%s523 + $0xb0] sm:$0xff]
        %v791 = vld [vmem:[%s523 + $0xb8] sm:$0xff]
        %v792 = vld [vmem:[%s523 + $0xc0] sm:$0xff]
        %v793 = vld [vmem:[%s523 + $0xc8] sm:$0xff]
        %v794 = vld [vmem:[%s523 + $0xd0] sm:$0xff]
        %v795 = vld [vmem:[%s523 + $0xd8] sm:$0xff]
        %v796 = vld [vmem:[%s523 + $0xe0] sm:$0xff]
        %v797 = vld [vmem:[%s523 + $0xe8] sm:$0xff]
        %v798 = vld [vmem:[%s523 + $0xf0] sm:$0xff]
        %v799 = vld [vmem:[%s523 + $0xf8] sm:$0xff]
        %v800 = vld [vmem:[%s523 + $0x100] sm:$0xff]
        %v801 = vld [vmem:[%s523 + $0x108] sm:$0xff]
        %v802 = vld [vmem:[%s523 + $0x110] sm:$0xff]
        %v803 = vld [vmem:[%s523 + $0x118] sm:$0xff]
        %v804 = vld [vmem:[%s523 + $0x120] sm:$0xff]
        %v805 = vld [vmem:[%s523 + $0x128] sm:$0xff]
        %v806 = vld [vmem:[%s523 + $0x130] sm:$0xff]
        %v807 = vld [vmem:[%s523 + $0x138] sm:$0xff]
        %v808 = vld [vmem:[%s523 + $0x140] sm:$0xff]
        %v809 = vld [vmem:[%s523 + $0x148] sm:$0xff]
        %v810 = vld [vmem:[%s523 + $0x150] sm:$0xff]
        %v811 = vld [vmem:[%s523 + $0x158] sm:$0xff]
        %v812 = vld [vmem:[%s523 + $0x160] sm:$0xff]
        %v813 = vld [vmem:[%s523 + $0x168] sm:$0xff]
        %v814 = vld [vmem:[%s523 + $0x170] sm:$0xff]
        %v815 = vld [vmem:[%s523 + $0x178] sm:$0xff]
        %v816 = vld [vmem:[%s523 + $0x180] sm:$0xff]
        %v817 = vld [vmem:[%s523 + $0x188] sm:$0xff]
        %v818 = vld [vmem:[%s523 + $0x190] sm:$0xff]
        %v819 = vld [vmem:[%s523 + $0x198] sm:$0xff]
        %v820 = vld [vmem:[%s523 + $0x1a0] sm:$0xff]
        %v821 = vld [vmem:[%s523 + $0x1a8] sm:$0xff]
        %v822 = vld [vmem:[%s523 + $0x1b0] sm:$0xff]
        %v823 = vld [vmem:[%s523 + $0x1b8] sm:$0xff]
        %v824 = vld [vmem:[%s523 + $0x1c0] sm:$0xff]
        %v825 = vld [vmem:[%s523 + $0x1c8] sm:$0xff]
        %v826 = vld [vmem:[%s523 + $0x1d0] sm:$0xff]
        %v827 = vld [vmem:[%s523 + $0x1d8] sm:$0xff]
        %v828 = vld [vmem:[%s523 + $0x1e0] sm:$0xff]
        %v829 = vld [vmem:[%s523 + $0x1e8] sm:$0xff]
        %v830 = vld [vmem:[%s523 + $0x1f0] sm:$0xff]
        %v831 = vld [vmem:[%s523 + $0x1f8] sm:$0xff]
        %v832 = vld [vmem:[%s523 + $0x200] sm:$0xff]
        %v833 = vld [vmem:[%s523 + $0x208] sm:$0xff]
        %v834 = vld [vmem:[%s523 + $0x210] sm:$0xff]
        %v835 = vld [vmem:[%s523 + $0x218] sm:$0xff]
        %v836 = vld [vmem:[%s523 + $0x220] sm:$0xff]
        %v837 = vld [vmem:[%s523 + $0x228] sm:$0xff]
        %v838 = vld [vmem:[%s523 + $0x230] sm:$0xff]
        %v839 = vld [vmem:[%s523 + $0x238] sm:$0xff]
        %v840 = vld [vmem:[%s523 + $0x240] sm:$0xff]
        %v841 = vld [vmem:[%s523 + $0x248] sm:$0xff]
        %v842 = vld [vmem:[%s523 + $0x250] sm:$0xff]
        %v843 = vld [vmem:[%s523 + $0x258] sm:$0xff]
        %v844 = vld [vmem:[%s523 + $0x260] sm:$0xff]
        %v845 = vld [vmem:[%s523 + $0x268] sm:$0xff]
        %v846 = vld [vmem:[%s523 + $0x270] sm:$0xff]
        %v847 = vld [vmem:[%s523 + $0x278] sm:$0xff]
        %v848 = vld [vmem:[%s523 + $0x280] sm:$0xff]
        %v849 = vld [vmem:[%s523 + $0x288] sm:$0xff]
        %v850 = vld [vmem:[%s523 + $0x290] sm:$0xff]
        %v851 = vld [vmem:[%s523 + $0x298] sm:$0xff]
        %v852 = vld [vmem:[%s523 + $0x2a0] sm:$0xff]
        %v853 = vld [vmem:[%s523 + $0x2a8] sm:$0xff]
        %v854 = vld [vmem:[%s523 + $0x2b0] sm:$0xff]
        %v855 = vld [vmem:[%s523 + $0x2b8] sm:$0xff]
        %v856 = vld [vmem:[%s523 + $0x2c0] sm:$0xff]
        %v857 = vld [vmem:[%s523 + $0x2c8] sm:$0xff]
        %v858 = vld [vmem:[%s523 + $0x2d0] sm:$0xff]
        %v859 = vld [vmem:[%s523 + $0x2d8] sm:$0xff]
        %v860 = vld [vmem:[%s523 + $0x2e0] sm:$0xff]
        %v861 = vld [vmem:[%s523 + $0x2e8] sm:$0xff]
        %v862 = vld [vmem:[%s523 + $0x2f0] sm:$0xff]
        %v863 = vld [vmem:[%s523 + $0x2f8] sm:$0xff]
        %v864 = vld [vmem:[%s523 + $0x300] sm:$0xff]
        %v865 = vld [vmem:[%s523 + $0x308] sm:$0xff]
        %v866 = vld [vmem:[%s523 + $0x310] sm:$0xff]
        %v867 = vld [vmem:[%s523 + $0x318] sm:$0xff]
        %v868 = vld [vmem:[%s523 + $0x320] sm:$0xff]
        %v869 = vld [vmem:[%s523 + $0x328] sm:$0xff]
        %v870 = vld [vmem:[%s523 + $0x330] sm:$0xff]
        %v871 = vld [vmem:[%s523 + $0x338] sm:$0xff]
        %v872 = vld [vmem:[%s523 + $0x340] sm:$0xff]
        %v873 = vld [vmem:[%s523 + $0x348] sm:$0xff]
        %v874 = vld [vmem:[%s523 + $0x350] sm:$0xff]
        %v875 = vld [vmem:[%s523 + $0x358] sm:$0xff]
        %v876 = vld [vmem:[%s523 + $0x360] sm:$0xff]
        %v877 = vld [vmem:[%s523 + $0x368] sm:$0xff]
        %v878 = vld [vmem:[%s523 + $0x370] sm:$0xff]
        %v879 = vld [vmem:[%s523 + $0x378] sm:$0xff]
        %v880 = vld [vmem:[%s523 + $0x380] sm:$0xff]
        %v881 = vld [vmem:[%s523 + $0x388] sm:$0xff]
        %v882 = vld [vmem:[%s523 + $0x390] sm:$0xff]
        %v883 = vld [vmem:[%s523 + $0x398] sm:$0xff]
        %v884 = vld [vmem:[%s523 + $0x3a0] sm:$0xff]
        %v885 = vld [vmem:[%s523 + $0x3a8] sm:$0xff]
        %v886 = vld [vmem:[%s523 + $0x3b0] sm:$0xff]
        %v887 = vld [vmem:[%s523 + $0x3b8] sm:$0xff]
        %v888 = vld [vmem:[%s523 + $0x3c0] sm:$0xff]
        %v889 = vld [vmem:[%s523 + $0x3c8] sm:$0xff]
        %v890 = vld [vmem:[%s523 + $0x3d0] sm:$0xff]
        %v891 = vld [vmem:[%s523 + $0x3d8] sm:$0xff]
        %v892 = vld [vmem:[%s523 + $0x3e0] sm:$0xff]
        %v893 = vld [vmem:[%s523 + $0x3e8] sm:$0xff]
        %v894 = vld [vmem:[%s523 + $0x3f0] sm:$0xff]
        %v895 = vld [vmem:[%s523 + $0x3f8] sm:$0xff]
        %v896 = vld [vmem:[%s523 + $0x400] sm:$0xff]
        %v897 = vld [vmem:[%s523 + $0x408] sm:$0xff]
        %v898 = vld [vmem:[%s523 + $0x410] sm:$0xff]
        %v899 = vld [vmem:[%s523 + $0x418] sm:$0xff]
        %v900 = vld [vmem:[%s523 + $0x420] sm:$0xff]
        %v901 = vld [vmem:[%s523 + $0x428] sm:$0xff]
        %v902 = vld [vmem:[%s523 + $0x430] sm:$0xff]
        %v903 = vld [vmem:[%s523 + $0x438] sm:$0xff]
        %v904 = vld [vmem:[%s523 + $0x440] sm:$0xff]
        %v905 = vld [vmem:[%s523 + $0x448] sm:$0xff]
        %v906 = vld [vmem:[%s523 + $0x450] sm:$0xff]
        %v907 = vld [vmem:[%s523 + $0x458] sm:$0xff]
        %v908 = vld [vmem:[%s523 + $0x460] sm:$0xff]
        %v909 = vld [vmem:[%s523 + $0x468] sm:$0xff]
        %v910 = vld [vmem:[%s523 + $0x470] sm:$0xff]
        %v911 = vld [vmem:[%s523 + $0x478] sm:$0xff]
        %v912 = vld [vmem:[%s523 + $0x480] sm:$0xff]
        %v913 = vld [vmem:[%s523 + $0x488] sm:$0xff]
        %v914 = vld [vmem:[%s523 + $0x490] sm:$0xff]
        %v915 = vld [vmem:[%s523 + $0x498] sm:$0xff]
        %v916 = vld [vmem:[%s523 + $0x4a0] sm:$0xff]
        %v917 = vld [vmem:[%s523 + $0x4a8] sm:$0xff]
        %v918 = vld [vmem:[%s523 + $0x4b0] sm:$0xff]
        %v919 = vld [vmem:[%s523 + $0x4b8] sm:$0xff]
        %v920 = vld [vmem:[%s523 + $0x4c0] sm:$0xff]
        %v921 = vld [vmem:[%s523 + $0x4c8] sm:$0xff]
        %v922 = vld [vmem:[%s523 + $0x4d0] sm:$0xff]
        %v923 = vld [vmem:[%s523 + $0x4d8] sm:$0xff]
        %v924 = vld [vmem:[%s523 + $0x4e0] sm:$0xff]
        %v925 = vld [vmem:[%s523 + $0x4e8] sm:$0xff]
        %v926 = vld [vmem:[%s523 + $0x4f0] sm:$0xff]
        %v927 = vld [vmem:[%s523 + $0x4f8] sm:$0xff]
        %v928 = vld [vmem:[%s523 + $0x500] sm:$0xff]
        %v929 = vld [vmem:[%s523 + $0x508] sm:$0xff]
        %v930 = vld [vmem:[%s523 + $0x510] sm:$0xff]
        %v931 = vld [vmem:[%s523 + $0x518] sm:$0xff]
        %v932 = vld [vmem:[%s523 + $0x520] sm:$0xff]
        %v933 = vld [vmem:[%s523 + $0x528] sm:$0xff]
        %v934 = vld [vmem:[%s523 + $0x530] sm:$0xff]
        %v935 = vld [vmem:[%s523 + $0x538] sm:$0xff]
        %v936 = vld [vmem:[%s523 + $0x540] sm:$0xff]
        %v937 = vld [vmem:[%s523 + $0x548] sm:$0xff]
        %v938 = vld [vmem:[%s523 + $0x550] sm:$0xff]
        %v939 = vld [vmem:[%s523 + $0x558] sm:$0xff]
        %v940 = vld [vmem:[%s523 + $0x560] sm:$0xff]
        %v941 = vld [vmem:[%s523 + $0x568] sm:$0xff]
        %v942 = vld [vmem:[%s523 + $0x570] sm:$0xff]
        %v943 = vld [vmem:[%s523 + $0x578] sm:$0xff]
        %v944 = vld [vmem:[%s523 + $0x580] sm:$0xff]
        %v945 = vld [vmem:[%s523 + $0x588] sm:$0xff]
        %v946 = vld [vmem:[%s523 + $0x590] sm:$0xff]
        %v947 = vld [vmem:[%s523 + $0x598] sm:$0xff]
        %v948 = vld [vmem:[%s523 + $0x5a0] sm:$0xff]
        %v949 = vld [vmem:[%s523 + $0x5a8] sm:$0xff]
        %v950 = vld [vmem:[%s523 + $0x5b0] sm:$0xff]
        %v951 = vld [vmem:[%s523 + $0x5b8] sm:$0xff]
        %v952 = vld [vmem:[%s523 + $0x5c0] sm:$0xff]
        %v953 = vld [vmem:[%s523 + $0x5c8] sm:$0xff]
        %v954 = vld [vmem:[%s523 + $0x5d0] sm:$0xff]
        %v955 = vld [vmem:[%s523 + $0x5d8] sm:$0xff]
        %v956 = vld [vmem:[%s523 + $0x5e0] sm:$0xff]
        %v957 = vld [vmem:[%s523 + $0x5e8] sm:$0xff]
        %v958 = vld [vmem:[%s523 + $0x5f0] sm:$0xff]
        %v959 = vld [vmem:[%s523 + $0x5f8] sm:$0xff]
        %v960 = vld [vmem:[%s523 + $0x600] sm:$0xff]
        %v961 = vld [vmem:[%s523 + $0x608] sm:$0xff]
        %v962 = vld [vmem:[%s523 + $0x610] sm:$0xff]
        %v963 = vld [vmem:[%s523 + $0x618] sm:$0xff]
        %v964 = vld [vmem:[%s523 + $0x620] sm:$0xff]
        %v965 = vld [vmem:[%s523 + $0x628] sm:$0xff]
        %v966 = vld [vmem:[%s523 + $0x630] sm:$0xff]
        %v967 = vld [vmem:[%s523 + $0x638] sm:$0xff]
        %v968 = vld [vmem:[%s523 + $0x640] sm:$0xff]
        %v969 = vld [vmem:[%s523 + $0x648] sm:$0xff]
        %v970 = vld [vmem:[%s523 + $0x650] sm:$0xff]
        %v971 = vld [vmem:[%s523 + $0x658] sm:$0xff]
        %v972 = vld [vmem:[%s523 + $0x660] sm:$0xff]
        %v973 = vld [vmem:[%s523 + $0x668] sm:$0xff]
        %v974 = vld [vmem:[%s523 + $0x670] sm:$0xff]
        %v975 = vld [vmem:[%s523 + $0x678] sm:$0xff]
        %v976 = vld [vmem:[%s523 + $0x680] sm:$0xff]
        %v977 = vld [vmem:[%s523 + $0x688] sm:$0xff]
        %v978 = vld [vmem:[%s523 + $0x690] sm:$0xff]
        %v979 = vld [vmem:[%s523 + $0x698] sm:$0xff]
        %v980 = vld [vmem:[%s523 + $0x6a0] sm:$0xff]
        %v981 = vld [vmem:[%s523 + $0x6a8] sm:$0xff]
        %v982 = vld [vmem:[%s523 + $0x6b0] sm:$0xff]
        %v983 = vld [vmem:[%s523 + $0x6b8] sm:$0xff]
        %v984 = vld [vmem:[%s523 + $0x6c0] sm:$0x3]
        %v985 = vld [vmem:[%s523 + $0x6c8] sm:$0x3]
        %v986 = vld [vmem:[%s523 + $0x6d0] sm:$0x3]
        %v987 = vld [vmem:[%s614] sm:$0xff]
        %v988 = vld [vmem:[%s614 + $0x8] sm:$0xff]
        %v989 = vld [vmem:[%s614 + $0x10] sm:$0xff]
        %v990 = vld [vmem:[%s614 + $0x18] sm:$0xff]
        %v991 = vld [vmem:[%s614 + $0x20] sm:$0xff]
        %v992 = vld [vmem:[%s614 + $0x28] sm:$0xff]
        %v993 = vld [vmem:[%s614 + $0x30] sm:$0xff]
        %v994 = vld [vmem:[%s614 + $0x38] sm:$0xff]
        %v995 = vld [vmem:[%s614 + $0x40] sm:$0xff]
        %v996 = vld [vmem:[%s614 + $0x48] sm:$0xff]
        %v997 = vld [vmem:[%s614 + $0x50] sm:$0xff]
        %v998 = vld [vmem:[%s614 + $0x58] sm:$0xff]
        %v999 = vld [vmem:[%s614 + $0x60] sm:$0xff]
        %v1000 = vld [vmem:[%s614 + $0x68] sm:$0xff]
        %v1001 = vld [vmem:[%s614 + $0x70] sm:$0xff]
        %v1002 = vld [vmem:[%s614 + $0x78] sm:$0xff]
        %v1003 = vld [vmem:[%s614 + $0x80] sm:$0xff]
        %v1004 = vld [vmem:[%s614 + $0x88] sm:$0xff]
        %v1005 = vld [vmem:[%s614 + $0x90] sm:$0xff]
        %v1006 = vld [vmem:[%s614 + $0x98] sm:$0xff]
        %v1007 = vld [vmem:[%s614 + $0xa0] sm:$0xff]
        %v1008 = vld [vmem:[%s614 + $0xa8] sm:$0xff]
        %v1009 = vld [vmem:[%s614 + $0xb0] sm:$0xff]
        %v1010 = vld [vmem:[%s614 + $0xb8] sm:$0xff]
        %v1011 = vld [vmem:[%s614 + $0xc0] sm:$0xff]
        %v1012 = vld [vmem:[%s614 + $0xc8] sm:$0xff]
        %v1013 = vld [vmem:[%s614 + $0xd0] sm:$0xff]
        %v1014 = vld [vmem:[%s614 + $0xd8] sm:$0xff]
        %v1015 = vld [vmem:[%s614 + $0xe0] sm:$0xff]
        %v1016 = vld [vmem:[%s614 + $0xe8] sm:$0xff]
        %v1017 = vld [vmem:[%s614 + $0xf0] sm:$0xff]
        %v1018 = vld [vmem:[%s614 + $0xf8] sm:$0xff]
        %v1019 = vld [vmem:[%s614 + $0x100] sm:$0xff]
        %v1020 = vld [vmem:[%s614 + $0x108] sm:$0xff]
        %v1021 = vld [vmem:[%s614 + $0x110] sm:$0xff]
        %v1022 = vld [vmem:[%s614 + $0x118] sm:$0xff]
        %v1023 = vld [vmem:[%s614 + $0x120] sm:$0xff]
        %v1024 = vld [vmem:[%s614 + $0x128] sm:$0xff]
        %v1025 = vld [vmem:[%s614 + $0x130] sm:$0xff]
        %v1026 = vld [vmem:[%s614 + $0x138] sm:$0xff]
        %v1027 = vld [vmem:[%s614 + $0x140] sm:$0xff]
        %v1028 = vld [vmem:[%s614 + $0x148] sm:$0xff]
        %v1029 = vld [vmem:[%s614 + $0x150] sm:$0xff]
        %v1030 = vld [vmem:[%s614 + $0x158] sm:$0xff]
        %v1031 = vld [vmem:[%s614 + $0x160] sm:$0xff]
        %v1032 = vld [vmem:[%s614 + $0x168] sm:$0xff]
        %v1033 = vld [vmem:[%s614 + $0x170] sm:$0xff]
        %v1034 = vld [vmem:[%s614 + $0x178] sm:$0xff]
        %1035 = vmatpush.msra.mxu0 %v1002
        %1036 = vmatpush.msra.mxu0 %v1001
        %1037 = vmatpush.msra.mxu0 %v1000
        %1038 = vmatpush.msra.mxu0 %v999
        %1039 = vmatpush.msra.mxu0 %v998
        %1040 = vmatpush.msra.mxu0 %v997
        %1041 = vmatpush.msra.mxu0 %v996
        %1042 = vmatpush.msra.mxu0 %v995
        %1043 = vmatpush.msra.mxu0 %v994
        %1044 = vmatpush.msra.mxu0 %v993
        %1045 = vmatpush.msra.mxu0 %v992
        %1046 = vmatpush.msra.mxu0 %v991
        %1047 = vmatpush.msra.mxu0 %v990
        %1048 = vmatpush.msra.mxu0 %v989
        %1049 = vmatpush.msra.mxu0 %v988
        %1050 = vmatpush.msra.mxu0 %v987
        %1051 = vmatmul.f32.gmra.mxu0 %v768
        %v1052 = vpop.f32.mrf.mxu0
        %v1053 = vadd.f32 0.0, %v1052
        %1054 = vmatmul.f32.gmra.mxu0 %v771
        %v1055 = vpop.f32.mrf.mxu0
        %v1056 = vadd.f32 0.0, %v1055
        %1057 = vmatmul.f32.gmra.mxu0 %v774
        %v1058 = vpop.f32.mrf.mxu0
        %v1059 = vadd.f32 0.0, %v1058
        %1060 = vmatmul.f32.gmra.mxu0 %v777
        %v1061 = vpop.f32.mrf.mxu0
        %v1062 = vadd.f32 0.0, %v1061
        %1063 = vmatmul.f32.gmra.mxu0 %v780
        %v1064 = vpop.f32.mrf.mxu0
        %v1065 = vadd.f32 0.0, %v1064
        %1066 = vmatmul.f32.gmra.mxu0 %v783
        %v1067 = vpop.f32.mrf.mxu0
        %v1068 = vadd.f32 0.0, %v1067
        %1069 = vmatmul.f32.gmra.mxu0 %v786
        %v1070 = vpop.f32.mrf.mxu0
        %v1071 = vadd.f32 0.0, %v1070
        %1072 = vmatmul.f32.gmra.mxu0 %v789
        %v1073 = vpop.f32.mrf.mxu0
        %v1074 = vadd.f32 0.0, %v1073
        %1075 = vmatmul.f32.gmra.mxu0 %v792
        %v1076 = vpop.f32.mrf.mxu0
        %v1077 = vadd.f32 0.0, %v1076
        %1078 = vmatmul.f32.gmra.mxu0 %v795
        %v1079 = vpop.f32.mrf.mxu0
        %v1080 = vadd.f32 0.0, %v1079
        %1081 = vmatmul.f32.gmra.mxu0 %v798
        %v1082 = vpop.f32.mrf.mxu0
        %v1083 = vadd.f32 0.0, %v1082
        %1084 = vmatmul.f32.gmra.mxu0 %v801
        %v1085 = vpop.f32.mrf.mxu0
        %v1086 = vadd.f32 0.0, %v1085
        %1087 = vmatmul.f32.gmra.mxu0 %v804
        %v1088 = vpop.f32.mrf.mxu0
        %v1089 = vadd.f32 0.0, %v1088
        %1090 = vmatmul.f32.gmra.mxu0 %v807
        %v1091 = vpop.f32.mrf.mxu0
        %v1092 = vadd.f32 0.0, %v1091
        %1093 = vmatmul.f32.gmra.mxu0 %v810
        %v1094 = vpop.f32.mrf.mxu0
        %v1095 = vadd.f32 0.0, %v1094
        %1096 = vmatmul.f32.gmra.mxu0 %v813
        %v1097 = vpop.f32.mrf.mxu0
        %v1098 = vadd.f32 0.0, %v1097
        %1099 = vmatmul.f32.gmra.mxu0 %v816
        %v1100 = vpop.f32.mrf.mxu0
        %v1101 = vadd.f32 0.0, %v1100
        %1102 = vmatmul.f32.gmra.mxu0 %v819
        %v1103 = vpop.f32.mrf.mxu0
        %v1104 = vadd.f32 0.0, %v1103
        %1105 = vmatmul.f32.gmra.mxu0 %v822
        %v1106 = vpop.f32.mrf.mxu0
        %v1107 = vadd.f32 0.0, %v1106
        %1108 = vmatmul.f32.gmra.mxu0 %v825
        %v1109 = vpop.f32.mrf.mxu0
        %v1110 = vadd.f32 0.0, %v1109
        %1111 = vmatmul.f32.gmra.mxu0 %v828
        %v1112 = vpop.f32.mrf.mxu0
        %v1113 = vadd.f32 0.0, %v1112
        %1114 = vmatmul.f32.gmra.mxu0 %v831
        %v1115 = vpop.f32.mrf.mxu0
        %v1116 = vadd.f32 0.0, %v1115
        %1117 = vmatmul.f32.gmra.mxu0 %v834
        %v1118 = vpop.f32.mrf.mxu0
        %v1119 = vadd.f32 0.0, %v1118
        %1120 = vmatmul.f32.gmra.mxu0 %v837
        %v1121 = vpop.f32.mrf.mxu0
        %v1122 = vadd.f32 0.0, %v1121
        %1123 = vmatmul.f32.gmra.mxu0 %v840
        %v1124 = vpop.f32.mrf.mxu0
        %v1125 = vadd.f32 0.0, %v1124
        %1126 = vmatmul.f32.gmra.mxu0 %v843
        %v1127 = vpop.f32.mrf.mxu0
        %v1128 = vadd.f32 0.0, %v1127
        %1129 = vmatmul.f32.gmra.mxu0 %v846
        %v1130 = vpop.f32.mrf.mxu0
        %v1131 = vadd.f32 0.0, %v1130
        %1132 = vmatmul.f32.gmra.mxu0 %v849
        %v1133 = vpop.f32.mrf.mxu0
        %v1134 = vadd.f32 0.0, %v1133
        %1135 = vmatmul.f32.gmra.mxu0 %v852
        %v1136 = vpop.f32.mrf.mxu0
        %v1137 = vadd.f32 0.0, %v1136
        %1138 = vmatmul.f32.gmra.mxu0 %v855
        %v1139 = vpop.f32.mrf.mxu0
        %v1140 = vadd.f32 0.0, %v1139
        %1141 = vmatmul.f32.gmra.mxu0 %v858
        %v1142 = vpop.f32.mrf.mxu0
        %v1143 = vadd.f32 0.0, %v1142
        %1144 = vmatmul.f32.gmra.mxu0 %v861
        %v1145 = vpop.f32.mrf.mxu0
        %v1146 = vadd.f32 0.0, %v1145
        %1147 = vmatmul.f32.gmra.mxu0 %v864
        %v1148 = vpop.f32.mrf.mxu0
        %v1149 = vadd.f32 0.0, %v1148
        %1150 = vmatmul.f32.gmra.mxu0 %v867
        %v1151 = vpop.f32.mrf.mxu0
        %v1152 = vadd.f32 0.0, %v1151
        %1153 = vmatmul.f32.gmra.mxu0 %v870
        %v1154 = vpop.f32.mrf.mxu0
        %v1155 = vadd.f32 0.0, %v1154
        %1156 = vmatmul.f32.gmra.mxu0 %v873
        %v1157 = vpop.f32.mrf.mxu0
        %v1158 = vadd.f32 0.0, %v1157
        %1159 = vmatmul.f32.gmra.mxu0 %v876
        %v1160 = vpop.f32.mrf.mxu0
        %v1161 = vadd.f32 0.0, %v1160
        %1162 = vmatmul.f32.gmra.mxu0 %v879
        %v1163 = vpop.f32.mrf.mxu0
        %v1164 = vadd.f32 0.0, %v1163
        %1165 = vmatmul.f32.gmra.mxu0 %v882
        %v1166 = vpop.f32.mrf.mxu0
        %v1167 = vadd.f32 0.0, %v1166
        %1168 = vmatmul.f32.gmra.mxu0 %v885
        %v1169 = vpop.f32.mrf.mxu0
        %v1170 = vadd.f32 0.0, %v1169
        %1171 = vmatmul.f32.gmra.mxu0 %v888
        %v1172 = vpop.f32.mrf.mxu0
        %v1173 = vadd.f32 0.0, %v1172
        %1174 = vmatmul.f32.gmra.mxu0 %v891
        %v1175 = vpop.f32.mrf.mxu0
        %v1176 = vadd.f32 0.0, %v1175
        %1177 = vmatmul.f32.gmra.mxu0 %v894
        %v1178 = vpop.f32.mrf.mxu0
        %v1179 = vadd.f32 0.0, %v1178
        %1180 = vmatmul.f32.gmra.mxu0 %v897
        %v1181 = vpop.f32.mrf.mxu0
        %v1182 = vadd.f32 0.0, %v1181
        %1183 = vmatmul.f32.gmra.mxu0 %v900
        %v1184 = vpop.f32.mrf.mxu0
        %v1185 = vadd.f32 0.0, %v1184
        %1186 = vmatmul.f32.gmra.mxu0 %v903
        %v1187 = vpop.f32.mrf.mxu0
        %v1188 = vadd.f32 0.0, %v1187
        %1189 = vmatmul.f32.gmra.mxu0 %v906
        %v1190 = vpop.f32.mrf.mxu0
        %v1191 = vadd.f32 0.0, %v1190
        %1192 = vmatmul.f32.gmra.mxu0 %v909
        %v1193 = vpop.f32.mrf.mxu0
        %v1194 = vadd.f32 0.0, %v1193
        %1195 = vmatmul.f32.gmra.mxu0 %v912
        %v1196 = vpop.f32.mrf.mxu0
        %v1197 = vadd.f32 0.0, %v1196
        %1198 = vmatmul.f32.gmra.mxu0 %v915
        %v1199 = vpop.f32.mrf.mxu0
        %v1200 = vadd.f32 0.0, %v1199
        %1201 = vmatmul.f32.gmra.mxu0 %v918
        %v1202 = vpop.f32.mrf.mxu0
        %v1203 = vadd.f32 0.0, %v1202
        %1204 = vmatmul.f32.gmra.mxu0 %v921
        %v1205 = vpop.f32.mrf.mxu0
        %v1206 = vadd.f32 0.0, %v1205
        %1207 = vmatmul.f32.gmra.mxu0 %v924
        %v1208 = vpop.f32.mrf.mxu0
        %v1209 = vadd.f32 0.0, %v1208
        %1210 = vmatmul.f32.gmra.mxu0 %v927
        %v1211 = vpop.f32.mrf.mxu0
        %v1212 = vadd.f32 0.0, %v1211
        %1213 = vmatmul.f32.gmra.mxu0 %v930
        %v1214 = vpop.f32.mrf.mxu0
        %v1215 = vadd.f32 0.0, %v1214
        %1216 = vmatmul.f32.gmra.mxu0 %v933
        %v1217 = vpop.f32.mrf.mxu0
        %v1218 = vadd.f32 0.0, %v1217
        %1219 = vmatmul.f32.gmra.mxu0 %v936
        %v1220 = vpop.f32.mrf.mxu0
        %v1221 = vadd.f32 0.0, %v1220
        %1222 = vmatmul.f32.gmra.mxu0 %v939
        %v1223 = vpop.f32.mrf.mxu0
        %v1224 = vadd.f32 0.0, %v1223
        %1225 = vmatmul.f32.gmra.mxu0 %v942
        %v1226 = vpop.f32.mrf.mxu0
        %v1227 = vadd.f32 0.0, %v1226
        %1228 = vmatmul.f32.gmra.mxu0 %v945
        %v1229 = vpop.f32.mrf.mxu0
        %v1230 = vadd.f32 0.0, %v1229
        %1231 = vmatmul.f32.gmra.mxu0 %v948
        %v1232 = vpop.f32.mrf.mxu0
        %v1233 = vadd.f32 0.0, %v1232
        %1234 = vmatmul.f32.gmra.mxu0 %v951
        %v1235 = vpop.f32.mrf.mxu0
        %v1236 = vadd.f32 0.0, %v1235
        %1237 = vmatmul.f32.gmra.mxu0 %v954
        %v1238 = vpop.f32.mrf.mxu0
        %v1239 = vadd.f32 0.0, %v1238
        %1240 = vmatmul.f32.gmra.mxu0 %v957
        %v1241 = vpop.f32.mrf.mxu0
        %v1242 = vadd.f32 0.0, %v1241
        %1243 = vmatmul.f32.gmra.mxu0 %v960
        %v1244 = vpop.f32.mrf.mxu0
        %v1245 = vadd.f32 0.0, %v1244
        %1246 = vmatmul.f32.gmra.mxu0 %v963
        %v1247 = vpop.f32.mrf.mxu0
        %v1248 = vadd.f32 0.0, %v1247
        %1249 = vmatmul.f32.gmra.mxu0 %v966
        %v1250 = vpop.f32.mrf.mxu0
        %v1251 = vadd.f32 0.0, %v1250
        %1252 = vmatmul.f32.gmra.mxu0 %v969
        %v1253 = vpop.f32.mrf.mxu0
        %v1254 = vadd.f32 0.0, %v1253
        %1255 = vmatmul.f32.gmra.mxu0 %v972
        %v1256 = vpop.f32.mrf.mxu0
        %v1257 = vadd.f32 0.0, %v1256
        %1258 = vmatmul.f32.gmra.mxu0 %v975
        %v1259 = vpop.f32.mrf.mxu0
        %v1260 = vadd.f32 0.0, %v1259
        %1261 = vmatmul.f32.gmra.mxu0 %v978
        %v1262 = vpop.f32.mrf.mxu0
        %v1263 = vadd.f32 0.0, %v1262
        %1264 = vmatmul.f32.gmra.mxu0 %v981
        %v1265 = vpop.f32.mrf.mxu0
        %v1266 = vadd.f32 0.0, %v1265
        %1267 = vmatmul.f32.gmra.mxu0 %v984
        %v1268 = vpop.f32.mrf.mxu0
        %v1269 = vadd.f32 0.0, %v1268
        %1270 = vdwg.mxu0
        %1271 = vmatpush.msra.mxu0 %v1018
        %1272 = vmatpush.msra.mxu0 %v1017
        %1273 = vmatpush.msra.mxu0 %v1016
        %1274 = vmatpush.msra.mxu0 %v1015
        %1275 = vmatpush.msra.mxu0 %v1014
        %1276 = vmatpush.msra.mxu0 %v1013
        %1277 = vmatpush.msra.mxu0 %v1012
        %1278 = vmatpush.msra.mxu0 %v1011
        %1279 = vmatpush.msra.mxu0 %v1010
        %1280 = vmatpush.msra.mxu0 %v1009
        %1281 = vmatpush.msra.mxu0 %v1008
        %1282 = vmatpush.msra.mxu0 %v1007
        %1283 = vmatpush.msra.mxu0 %v1006
        %1284 = vmatpush.msra.mxu0 %v1005
        %1285 = vmatpush.msra.mxu0 %v1004
        %1286 = vmatpush.msra.mxu0 %v1003
        %1287 = vmatmul.f32.gmra.mxu0 %v769
        %v1288 = vpop.f32.mrf.mxu0
        %v1289 = vadd.f32 %v1053, %v1288
        %1290 = vmatmul.f32.gmra.mxu0 %v772
        %v1291 = vpop.f32.mrf.mxu0
        %v1292 = vadd.f32 %v1056, %v1291
        %1293 = vmatmul.f32.gmra.mxu0 %v775
        %v1294 = vpop.f32.mrf.mxu0
        %v1295 = vadd.f32 %v1059, %v1294
        %1296 = vmatmul.f32.gmra.mxu0 %v778
        %v1297 = vpop.f32.mrf.mxu0
        %v1298 = vadd.f32 %v1062, %v1297
        %1299 = vmatmul.f32.gmra.mxu0 %v781
        %v1300 = vpop.f32.mrf.mxu0
        %v1301 = vadd.f32 %v1065, %v1300
        %1302 = vmatmul.f32.gmra.mxu0 %v784
        %v1303 = vpop.f32.mrf.mxu0
        %v1304 = vadd.f32 %v1068, %v1303
        %1305 = vmatmul.f32.gmra.mxu0 %v787
        %v1306 = vpop.f32.mrf.mxu0
        %v1307 = vadd.f32 %v1071, %v1306
        %1308 = vmatmul.f32.gmra.mxu0 %v790
        %v1309 = vpop.f32.mrf.mxu0
        %v1310 = vadd.f32 %v1074, %v1309
        %1311 = vmatmul.f32.gmra.mxu0 %v793
        %v1312 = vpop.f32.mrf.mxu0
        %v1313 = vadd.f32 %v1077, %v1312
        %1314 = vmatmul.f32.gmra.mxu0 %v796
        %v1315 = vpop.f32.mrf.mxu0
        %v1316 = vadd.f32 %v1080, %v1315
        %1317 = vmatmul.f32.gmra.mxu0 %v799
        %v1318 = vpop.f32.mrf.mxu0
        %v1319 = vadd.f32 %v1083, %v1318
        %1320 = vmatmul.f32.gmra.mxu0 %v802
        %v1321 = vpop.f32.mrf.mxu0
        %v1322 = vadd.f32 %v1086, %v1321
        %1323 = vmatmul.f32.gmra.mxu0 %v805
        %v1324 = vpop.f32.mrf.mxu0
        %v1325 = vadd.f32 %v1089, %v1324
        %1326 = vmatmul.f32.gmra.mxu0 %v808
        %v1327 = vpop.f32.mrf.mxu0
        %v1328 = vadd.f32 %v1092, %v1327
        %1329 = vmatmul.f32.gmra.mxu0 %v811
        %v1330 = vpop.f32.mrf.mxu0
        %v1331 = vadd.f32 %v1095, %v1330
        %1332 = vmatmul.f32.gmra.mxu0 %v814
        %v1333 = vpop.f32.mrf.mxu0
        %v1334 = vadd.f32 %v1098, %v1333
        %1335 = vmatmul.f32.gmra.mxu0 %v817
        %v1336 = vpop.f32.mrf.mxu0
        %v1337 = vadd.f32 %v1101, %v1336
        %1338 = vmatmul.f32.gmra.mxu0 %v820
        %v1339 = vpop.f32.mrf.mxu0
        %v1340 = vadd.f32 %v1104, %v1339
        %1341 = vmatmul.f32.gmra.mxu0 %v823
        %v1342 = vpop.f32.mrf.mxu0
        %v1343 = vadd.f32 %v1107, %v1342
        %1344 = vmatmul.f32.gmra.mxu0 %v826
        %v1345 = vpop.f32.mrf.mxu0
        %v1346 = vadd.f32 %v1110, %v1345
        %1347 = vmatmul.f32.gmra.mxu0 %v829
        %v1348 = vpop.f32.mrf.mxu0
        %v1349 = vadd.f32 %v1113, %v1348
        %1350 = vmatmul.f32.gmra.mxu0 %v832
        %v1351 = vpop.f32.mrf.mxu0
        %v1352 = vadd.f32 %v1116, %v1351
        %1353 = vmatmul.f32.gmra.mxu0 %v835
        %v1354 = vpop.f32.mrf.mxu0
        %v1355 = vadd.f32 %v1119, %v1354
        %1356 = vmatmul.f32.gmra.mxu0 %v838
        %v1357 = vpop.f32.mrf.mxu0
        %v1358 = vadd.f32 %v1122, %v1357
        %1359 = vmatmul.f32.gmra.mxu0 %v841
        %v1360 = vpop.f32.mrf.mxu0
        %v1361 = vadd.f32 %v1125, %v1360
        %1362 = vmatmul.f32.gmra.mxu0 %v844
        %v1363 = vpop.f32.mrf.mxu0
        %v1364 = vadd.f32 %v1128, %v1363
        %1365 = vmatmul.f32.gmra.mxu0 %v847
        %v1366 = vpop.f32.mrf.mxu0
        %v1367 = vadd.f32 %v1131, %v1366
        %1368 = vmatmul.f32.gmra.mxu0 %v850
        %v1369 = vpop.f32.mrf.mxu0
        %v1370 = vadd.f32 %v1134, %v1369
        %1371 = vmatmul.f32.gmra.mxu0 %v853
        %v1372 = vpop.f32.mrf.mxu0
        %v1373 = vadd.f32 %v1137, %v1372
        %1374 = vmatmul.f32.gmra.mxu0 %v856
        %v1375 = vpop.f32.mrf.mxu0
        %v1376 = vadd.f32 %v1140, %v1375
        %1377 = vmatmul.f32.gmra.mxu0 %v859
        %v1378 = vpop.f32.mrf.mxu0
        %v1379 = vadd.f32 %v1143, %v1378
        %1380 = vmatmul.f32.gmra.mxu0 %v862
        %v1381 = vpop.f32.mrf.mxu0
        %v1382 = vadd.f32 %v1146, %v1381
        %1383 = vmatmul.f32.gmra.mxu0 %v865
        %v1384 = vpop.f32.mrf.mxu0
        %v1385 = vadd.f32 %v1149, %v1384
        %1386 = vmatmul.f32.gmra.mxu0 %v868
        %v1387 = vpop.f32.mrf.mxu0
        %v1388 = vadd.f32 %v1152, %v1387
        %1389 = vmatmul.f32.gmra.mxu0 %v871
        %v1390 = vpop.f32.mrf.mxu0
        %v1391 = vadd.f32 %v1155, %v1390
        %1392 = vmatmul.f32.gmra.mxu0 %v874
        %v1393 = vpop.f32.mrf.mxu0
        %v1394 = vadd.f32 %v1158, %v1393
        %1395 = vmatmul.f32.gmra.mxu0 %v877
        %v1396 = vpop.f32.mrf.mxu0
        %v1397 = vadd.f32 %v1161, %v1396
        %1398 = vmatmul.f32.gmra.mxu0 %v880
        %v1399 = vpop.f32.mrf.mxu0
        %v1400 = vadd.f32 %v1164, %v1399
        %1401 = vmatmul.f32.gmra.mxu0 %v883
        %v1402 = vpop.f32.mrf.mxu0
        %v1403 = vadd.f32 %v1167, %v1402
        %1404 = vmatmul.f32.gmra.mxu0 %v886
        %v1405 = vpop.f32.mrf.mxu0
        %v1406 = vadd.f32 %v1170, %v1405
        %1407 = vmatmul.f32.gmra.mxu0 %v889
        %v1408 = vpop.f32.mrf.mxu0
        %v1409 = vadd.f32 %v1173, %v1408
        %1410 = vmatmul.f32.gmra.mxu0 %v892
        %v1411 = vpop.f32.mrf.mxu0
        %v1412 = vadd.f32 %v1176, %v1411
        %1413 = vmatmul.f32.gmra.mxu0 %v895
        %v1414 = vpop.f32.mrf.mxu0
        %v1415 = vadd.f32 %v1179, %v1414
        %1416 = vmatmul.f32.gmra.mxu0 %v898
        %v1417 = vpop.f32.mrf.mxu0
        %v1418 = vadd.f32 %v1182, %v1417
        %1419 = vmatmul.f32.gmra.mxu0 %v901
        %v1420 = vpop.f32.mrf.mxu0
        %v1421 = vadd.f32 %v1185, %v1420
        %1422 = vmatmul.f32.gmra.mxu0 %v904
        %v1423 = vpop.f32.mrf.mxu0
        %v1424 = vadd.f32 %v1188, %v1423
        %1425 = vmatmul.f32.gmra.mxu0 %v907
        %v1426 = vpop.f32.mrf.mxu0
        %v1427 = vadd.f32 %v1191, %v1426
        %1428 = vmatmul.f32.gmra.mxu0 %v910
        %v1429 = vpop.f32.mrf.mxu0
        %v1430 = vadd.f32 %v1194, %v1429
        %1431 = vmatmul.f32.gmra.mxu0 %v913
        %v1432 = vpop.f32.mrf.mxu0
        %v1433 = vadd.f32 %v1197, %v1432
        %1434 = vmatmul.f32.gmra.mxu0 %v916
        %v1435 = vpop.f32.mrf.mxu0
        %v1436 = vadd.f32 %v1200, %v1435
        %1437 = vmatmul.f32.gmra.mxu0 %v919
        %v1438 = vpop.f32.mrf.mxu0
        %v1439 = vadd.f32 %v1203, %v1438
        %1440 = vmatmul.f32.gmra.mxu0 %v922
        %v1441 = vpop.f32.mrf.mxu0
        %v1442 = vadd.f32 %v1206, %v1441
        %1443 = vmatmul.f32.gmra.mxu0 %v925
        %v1444 = vpop.f32.mrf.mxu0
        %v1445 = vadd.f32 %v1209, %v1444
        %1446 = vmatmul.f32.gmra.mxu0 %v928
        %v1447 = vpop.f32.mrf.mxu0
        %v1448 = vadd.f32 %v1212, %v1447
        %1449 = vmatmul.f32.gmra.mxu0 %v931
        %v1450 = vpop.f32.mrf.mxu0
        %v1451 = vadd.f32 %v1215, %v1450
        %1452 = vmatmul.f32.gmra.mxu0 %v934
        %v1453 = vpop.f32.mrf.mxu0
        %v1454 = vadd.f32 %v1218, %v1453
        %1455 = vmatmul.f32.gmra.mxu0 %v937
        %v1456 = vpop.f32.mrf.mxu0
        %v1457 = vadd.f32 %v1221, %v1456
        %1458 = vmatmul.f32.gmra.mxu0 %v940
        %v1459 = vpop.f32.mrf.mxu0
        %v1460 = vadd.f32 %v1224, %v1459
        %1461 = vmatmul.f32.gmra.mxu0 %v943
        %v1462 = vpop.f32.mrf.mxu0
        %v1463 = vadd.f32 %v1227, %v1462
        %1464 = vmatmul.f32.gmra.mxu0 %v946
        %v1465 = vpop.f32.mrf.mxu0
        %v1466 = vadd.f32 %v1230, %v1465
        %1467 = vmatmul.f32.gmra.mxu0 %v949
        %v1468 = vpop.f32.mrf.mxu0
        %v1469 = vadd.f32 %v1233, %v1468
        %1470 = vmatmul.f32.gmra.mxu0 %v952
        %v1471 = vpop.f32.mrf.mxu0
        %v1472 = vadd.f32 %v1236, %v1471
        %1473 = vmatmul.f32.gmra.mxu0 %v955
        %v1474 = vpop.f32.mrf.mxu0
        %v1475 = vadd.f32 %v1239, %v1474
        %1476 = vmatmul.f32.gmra.mxu0 %v958
        %v1477 = vpop.f32.mrf.mxu0
        %v1478 = vadd.f32 %v1242, %v1477
        %1479 = vmatmul.f32.gmra.mxu0 %v961
        %v1480 = vpop.f32.mrf.mxu0
        %v1481 = vadd.f32 %v1245, %v1480
        %1482 = vmatmul.f32.gmra.mxu0 %v964
        %v1483 = vpop.f32.mrf.mxu0
        %v1484 = vadd.f32 %v1248, %v1483
        %1485 = vmatmul.f32.gmra.mxu0 %v967
        %v1486 = vpop.f32.mrf.mxu0
        %v1487 = vadd.f32 %v1251, %v1486
        %1488 = vmatmul.f32.gmra.mxu0 %v970
        %v1489 = vpop.f32.mrf.mxu0
        %v1490 = vadd.f32 %v1254, %v1489
        %1491 = vmatmul.f32.gmra.mxu0 %v973
        %v1492 = vpop.f32.mrf.mxu0
        %v1493 = vadd.f32 %v1257, %v1492
        %1494 = vmatmul.f32.gmra.mxu0 %v976
        %v1495 = vpop.f32.mrf.mxu0
        %v1496 = vadd.f32 %v1260, %v1495
        %1497 = vmatmul.f32.gmra.mxu0 %v979
        %v1498 = vpop.f32.mrf.mxu0
        %v1499 = vadd.f32 %v1263, %v1498
        %1500 = vmatmul.f32.gmra.mxu0 %v982
        %v1501 = vpop.f32.mrf.mxu0
        %v1502 = vadd.f32 %v1266, %v1501
        %1503 = vmatmul.f32.gmra.mxu0 %v985
        %v1504 = vpop.f32.mrf.mxu0
        %v1505 = vadd.f32 %v1269, %v1504
        %1506 = vdwg.mxu0
        %1507 = vmatpush.msra.mxu0 %v1034
        %1508 = vmatpush.msra.mxu0 %v1033
        %1509 = vmatpush.msra.mxu0 %v1032
        %1510 = vmatpush.msra.mxu0 %v1031
        %1511 = vmatpush.msra.mxu0 %v1030
        %1512 = vmatpush.msra.mxu0 %v1029
        %1513 = vmatpush.msra.mxu0 %v1028
        %1514 = vmatpush.msra.mxu0 %v1027
        %1515 = vmatpush.msra.mxu0 %v1026
        %1516 = vmatpush.msra.mxu0 %v1025
        %1517 = vmatpush.msra.mxu0 %v1024
        %1518 = vmatpush.msra.mxu0 %v1023
        %1519 = vmatpush.msra.mxu0 %v1022
        %1520 = vmatpush.msra.mxu0 %v1021
        %1521 = vmatpush.msra.mxu0 %v1020
        %1522 = vmatpush.msra.mxu0 %v1019
        %1523 = vmatmul.f32.gmra.mxu0 %v770
        %v1524 = vpop.f32.mrf.mxu0
        %v1525 = vadd.f32 %v1289, %v1524
        %1526 = vmatmul.f32.gmra.mxu0 %v773
        %v1527 = vpop.f32.mrf.mxu0
        %v1528 = vadd.f32 %v1292, %v1527
        %1529 = vmatmul.f32.gmra.mxu0 %v776
        %v1530 = vpop.f32.mrf.mxu0
        %v1531 = vadd.f32 %v1295, %v1530
        %1532 = vmatmul.f32.gmra.mxu0 %v779
        %v1533 = vpop.f32.mrf.mxu0
        %v1534 = vadd.f32 %v1298, %v1533
        %1535 = vmatmul.f32.gmra.mxu0 %v782
        %v1536 = vpop.f32.mrf.mxu0
        %v1537 = vadd.f32 %v1301, %v1536
        %1538 = vmatmul.f32.gmra.mxu0 %v785
        %v1539 = vpop.f32.mrf.mxu0
        %v1540 = vadd.f32 %v1304, %v1539
        %1541 = vmatmul.f32.gmra.mxu0 %v788
        %v1542 = vpop.f32.mrf.mxu0
        %v1543 = vadd.f32 %v1307, %v1542
        %1544 = vmatmul.f32.gmra.mxu0 %v791
        %v1545 = vpop.f32.mrf.mxu0
        %v1546 = vadd.f32 %v1310, %v1545
        %1547 = vmatmul.f32.gmra.mxu0 %v794
        %v1548 = vpop.f32.mrf.mxu0
        %v1549 = vadd.f32 %v1313, %v1548
        %1550 = vmatmul.f32.gmra.mxu0 %v797
        %v1551 = vpop.f32.mrf.mxu0
        %v1552 = vadd.f32 %v1316, %v1551
        %1553 = vmatmul.f32.gmra.mxu0 %v800
        %v1554 = vpop.f32.mrf.mxu0
        %v1555 = vadd.f32 %v1319, %v1554
        %1556 = vmatmul.f32.gmra.mxu0 %v803
        %v1557 = vpop.f32.mrf.mxu0
        %v1558 = vadd.f32 %v1322, %v1557
        %1559 = vmatmul.f32.gmra.mxu0 %v806
        %v1560 = vpop.f32.mrf.mxu0
        %v1561 = vadd.f32 %v1325, %v1560
        %1562 = vmatmul.f32.gmra.mxu0 %v809
        %v1563 = vpop.f32.mrf.mxu0
        %v1564 = vadd.f32 %v1328, %v1563
        %1565 = vmatmul.f32.gmra.mxu0 %v812
        %v1566 = vpop.f32.mrf.mxu0
        %v1567 = vadd.f32 %v1331, %v1566
        %1568 = vmatmul.f32.gmra.mxu0 %v815
        %v1569 = vpop.f32.mrf.mxu0
        %v1570 = vadd.f32 %v1334, %v1569
        %1571 = vmatmul.f32.gmra.mxu0 %v818
        %v1572 = vpop.f32.mrf.mxu0
        %v1573 = vadd.f32 %v1337, %v1572
        %1574 = vmatmul.f32.gmra.mxu0 %v821
        %v1575 = vpop.f32.mrf.mxu0
        %v1576 = vadd.f32 %v1340, %v1575
        %1577 = vmatmul.f32.gmra.mxu0 %v824
        %v1578 = vpop.f32.mrf.mxu0
        %v1579 = vadd.f32 %v1343, %v1578
        %1580 = vmatmul.f32.gmra.mxu0 %v827
        %v1581 = vpop.f32.mrf.mxu0
        %v1582 = vadd.f32 %v1346, %v1581
        %1583 = vmatmul.f32.gmra.mxu0 %v830
        %v1584 = vpop.f32.mrf.mxu0
        %v1585 = vadd.f32 %v1349, %v1584
        %1586 = vmatmul.f32.gmra.mxu0 %v833
        %v1587 = vpop.f32.mrf.mxu0
        %v1588 = vadd.f32 %v1352, %v1587
        %1589 = vmatmul.f32.gmra.mxu0 %v836
        %v1590 = vpop.f32.mrf.mxu0
        %v1591 = vadd.f32 %v1355, %v1590
        %1592 = vmatmul.f32.gmra.mxu0 %v839
        %v1593 = vpop.f32.mrf.mxu0
        %v1594 = vadd.f32 %v1358, %v1593
        %1595 = vmatmul.f32.gmra.mxu0 %v842
        %v1596 = vpop.f32.mrf.mxu0
        %v1597 = vadd.f32 %v1361, %v1596
        %1598 = vmatmul.f32.gmra.mxu0 %v845
        %v1599 = vpop.f32.mrf.mxu0
        %v1600 = vadd.f32 %v1364, %v1599
        %1601 = vmatmul.f32.gmra.mxu0 %v848
        %v1602 = vpop.f32.mrf.mxu0
        %v1603 = vadd.f32 %v1367, %v1602
        %1604 = vmatmul.f32.gmra.mxu0 %v851
        %v1605 = vpop.f32.mrf.mxu0
        %v1606 = vadd.f32 %v1370, %v1605
        %1607 = vmatmul.f32.gmra.mxu0 %v854
        %v1608 = vpop.f32.mrf.mxu0
        %v1609 = vadd.f32 %v1373, %v1608
        %1610 = vmatmul.f32.gmra.mxu0 %v857
        %v1611 = vpop.f32.mrf.mxu0
        %v1612 = vadd.f32 %v1376, %v1611
        %1613 = vmatmul.f32.gmra.mxu0 %v860
        %v1614 = vpop.f32.mrf.mxu0
        %v1615 = vadd.f32 %v1379, %v1614
        %1616 = vmatmul.f32.gmra.mxu0 %v863
        %v1617 = vpop.f32.mrf.mxu0
        %v1618 = vadd.f32 %v1382, %v1617
        %1619 = vmatmul.f32.gmra.mxu0 %v866
        %v1620 = vpop.f32.mrf.mxu0
        %v1621 = vadd.f32 %v1385, %v1620
        %1622 = vmatmul.f32.gmra.mxu0 %v869
        %v1623 = vpop.f32.mrf.mxu0
        %v1624 = vadd.f32 %v1388, %v1623
        %1625 = vmatmul.f32.gmra.mxu0 %v872
        %v1626 = vpop.f32.mrf.mxu0
        %v1627 = vadd.f32 %v1391, %v1626
        %1628 = vmatmul.f32.gmra.mxu0 %v875
        %v1629 = vpop.f32.mrf.mxu0
        %v1630 = vadd.f32 %v1394, %v1629
        %1631 = vmatmul.f32.gmra.mxu0 %v878
        %v1632 = vpop.f32.mrf.mxu0
        %v1633 = vadd.f32 %v1397, %v1632
        %1634 = vmatmul.f32.gmra.mxu0 %v881
        %v1635 = vpop.f32.mrf.mxu0
        %v1636 = vadd.f32 %v1400, %v1635
        %1637 = vmatmul.f32.gmra.mxu0 %v884
        %v1638 = vpop.f32.mrf.mxu0
        %v1639 = vadd.f32 %v1403, %v1638
        %1640 = vmatmul.f32.gmra.mxu0 %v887
        %v1641 = vpop.f32.mrf.mxu0
        %v1642 = vadd.f32 %v1406, %v1641
        %1643 = vmatmul.f32.gmra.mxu0 %v890
        %v1644 = vpop.f32.mrf.mxu0
        %v1645 = vadd.f32 %v1409, %v1644
        %1646 = vmatmul.f32.gmra.mxu0 %v893
        %v1647 = vpop.f32.mrf.mxu0
        %v1648 = vadd.f32 %v1412, %v1647
        %1649 = vmatmul.f32.gmra.mxu0 %v896
        %v1650 = vpop.f32.mrf.mxu0
        %v1651 = vadd.f32 %v1415, %v1650
        %1652 = vmatmul.f32.gmra.mxu0 %v899
        %v1653 = vpop.f32.mrf.mxu0
        %v1654 = vadd.f32 %v1418, %v1653
        %1655 = vmatmul.f32.gmra.mxu0 %v902
        %v1656 = vpop.f32.mrf.mxu0
        %v1657 = vadd.f32 %v1421, %v1656
        %1658 = vmatmul.f32.gmra.mxu0 %v905
        %v1659 = vpop.f32.mrf.mxu0
        %v1660 = vadd.f32 %v1424, %v1659
        %1661 = vmatmul.f32.gmra.mxu0 %v908
        %v1662 = vpop.f32.mrf.mxu0
        %v1663 = vadd.f32 %v1427, %v1662
        %1664 = vmatmul.f32.gmra.mxu0 %v911
        %v1665 = vpop.f32.mrf.mxu0
        %v1666 = vadd.f32 %v1430, %v1665
        %1667 = vmatmul.f32.gmra.mxu0 %v914
        %v1668 = vpop.f32.mrf.mxu0
        %v1669 = vadd.f32 %v1433, %v1668
        %1670 = vmatmul.f32.gmra.mxu0 %v917
        %v1671 = vpop.f32.mrf.mxu0
        %v1672 = vadd.f32 %v1436, %v1671
        %1673 = vmatmul.f32.gmra.mxu0 %v920
        %v1674 = vpop.f32.mrf.mxu0
        %v1675 = vadd.f32 %v1439, %v1674
        %1676 = vmatmul.f32.gmra.mxu0 %v923
        %v1677 = vpop.f32.mrf.mxu0
        %v1678 = vadd.f32 %v1442, %v1677
        %1679 = vmatmul.f32.gmra.mxu0 %v926
        %v1680 = vpop.f32.mrf.mxu0
        %v1681 = vadd.f32 %v1445, %v1680
        %1682 = vmatmul.f32.gmra.mxu0 %v929
        %v1683 = vpop.f32.mrf.mxu0
        %v1684 = vadd.f32 %v1448, %v1683
        %1685 = vmatmul.f32.gmra.mxu0 %v932
        %v1686 = vpop.f32.mrf.mxu0
        %v1687 = vadd.f32 %v1451, %v1686
        %1688 = vmatmul.f32.gmra.mxu0 %v935
        %v1689 = vpop.f32.mrf.mxu0
        %v1690 = vadd.f32 %v1454, %v1689
        %1691 = vmatmul.f32.gmra.mxu0 %v938
        %v1692 = vpop.f32.mrf.mxu0
        %v1693 = vadd.f32 %v1457, %v1692
        %1694 = vmatmul.f32.gmra.mxu0 %v941
        %v1695 = vpop.f32.mrf.mxu0
        %v1696 = vadd.f32 %v1460, %v1695
        %1697 = vmatmul.f32.gmra.mxu0 %v944
        %v1698 = vpop.f32.mrf.mxu0
        %v1699 = vadd.f32 %v1463, %v1698
        %1700 = vmatmul.f32.gmra.mxu0 %v947
        %v1701 = vpop.f32.mrf.mxu0
        %v1702 = vadd.f32 %v1466, %v1701
        %1703 = vmatmul.f32.gmra.mxu0 %v950
        %v1704 = vpop.f32.mrf.mxu0
        %v1705 = vadd.f32 %v1469, %v1704
        %1706 = vmatmul.f32.gmra.mxu0 %v953
        %v1707 = vpop.f32.mrf.mxu0
        %v1708 = vadd.f32 %v1472, %v1707
        %1709 = vmatmul.f32.gmra.mxu0 %v956
        %v1710 = vpop.f32.mrf.mxu0
        %v1711 = vadd.f32 %v1475, %v1710
        %1712 = vmatmul.f32.gmra.mxu0 %v959
        %v1713 = vpop.f32.mrf.mxu0
        %v1714 = vadd.f32 %v1478, %v1713
        %1715 = vmatmul.f32.gmra.mxu0 %v962
        %v1716 = vpop.f32.mrf.mxu0
        %v1717 = vadd.f32 %v1481, %v1716
        %1718 = vmatmul.f32.gmra.mxu0 %v965
        %v1719 = vpop.f32.mrf.mxu0
        %v1720 = vadd.f32 %v1484, %v1719
        %1721 = vmatmul.f32.gmra.mxu0 %v968
        %v1722 = vpop.f32.mrf.mxu0
        %v1723 = vadd.f32 %v1487, %v1722
        %1724 = vmatmul.f32.gmra.mxu0 %v971
        %v1725 = vpop.f32.mrf.mxu0
        %v1726 = vadd.f32 %v1490, %v1725
        %1727 = vmatmul.f32.gmra.mxu0 %v974
        %v1728 = vpop.f32.mrf.mxu0
        %v1729 = vadd.f32 %v1493, %v1728
        %1730 = vmatmul.f32.gmra.mxu0 %v977
        %v1731 = vpop.f32.mrf.mxu0
        %v1732 = vadd.f32 %v1496, %v1731
        %1733 = vmatmul.f32.gmra.mxu0 %v980
        %v1734 = vpop.f32.mrf.mxu0
        %v1735 = vadd.f32 %v1499, %v1734
        %1736 = vmatmul.f32.gmra.mxu0 %v983
        %v1737 = vpop.f32.mrf.mxu0
        %v1738 = vadd.f32 %v1502, %v1737
        %1739 = vmatmul.f32.gmra.mxu0 %v986
        %v1740 = vpop.f32.mrf.mxu0
        %v1741 = vadd.f32 %v1505, %v1740
        %1742 = vdwg.mxu0
        %v1743 = vadd.f32 %v695, %v1525
        %v1744 = vadd.f32 %v696, %v1528
        %v1745 = vadd.f32 %v697, %v1531
        %v1746 = vadd.f32 %v698, %v1534
        %v1747 = vadd.f32 %v699, %v1537
        %v1748 = vadd.f32 %v700, %v1540
        %v1749 = vadd.f32 %v701, %v1543
        %v1750 = vadd.f32 %v702, %v1546
        %v1751 = vadd.f32 %v703, %v1549
        %v1752 = vadd.f32 %v704, %v1552
        %v1753 = vadd.f32 %v705, %v1555
        %v1754 = vadd.f32 %v706, %v1558
        %v1755 = vadd.f32 %v707, %v1561
        %v1756 = vadd.f32 %v708, %v1564
        %v1757 = vadd.f32 %v709, %v1567
        %v1758 = vadd.f32 %v710, %v1570
        %v1759 = vadd.f32 %v711, %v1573
        %v1760 = vadd.f32 %v712, %v1576
        %v1761 = vadd.f32 %v713, %v1579
        %v1762 = vadd.f32 %v714, %v1582
        %v1763 = vadd.f32 %v715, %v1585
        %v1764 = vadd.f32 %v716, %v1588
        %v1765 = vadd.f32 %v717, %v1591
        %v1766 = vadd.f32 %v718, %v1594
        %v1767 = vadd.f32 %v719, %v1597
        %v1768 = vadd.f32 %v720, %v1600
        %v1769 = vadd.f32 %v721, %v1603
        %v1770 = vadd.f32 %v722, %v1606
        %v1771 = vadd.f32 %v723, %v1609
        %v1772 = vadd.f32 %v724, %v1612
        %v1773 = vadd.f32 %v725, %v1615
        %v1774 = vadd.f32 %v726, %v1618
        %v1775 = vadd.f32 %v727, %v1621
        %v1776 = vadd.f32 %v728, %v1624
        %v1777 = vadd.f32 %v729, %v1627
        %v1778 = vadd.f32 %v730, %v1630
        %v1779 = vadd.f32 %v731, %v1633
        %v1780 = vadd.f32 %v732, %v1636
        %v1781 = vadd.f32 %v733, %v1639
        %v1782 = vadd.f32 %v734, %v1642
        %v1783 = vadd.f32 %v735, %v1645
        %v1784 = vadd.f32 %v736, %v1648
        %v1785 = vadd.f32 %v737, %v1651
        %v1786 = vadd.f32 %v738, %v1654
        %v1787 = vadd.f32 %v739, %v1657
        %v1788 = vadd.f32 %v740, %v1660
        %v1789 = vadd.f32 %v741, %v1663
        %v1790 = vadd.f32 %v742, %v1666
        %v1791 = vadd.f32 %v743, %v1669
        %v1792 = vadd.f32 %v744, %v1672
        %v1793 = vadd.f32 %v745, %v1675
        %v1794 = vadd.f32 %v746, %v1678
        %v1795 = vadd.f32 %v747, %v1681
        %v1796 = vadd.f32 %v748, %v1684
        %v1797 = vadd.f32 %v749, %v1687
        %v1798 = vadd.f32 %v750, %v1690
        %v1799 = vadd.f32 %v751, %v1693
        %v1800 = vadd.f32 %v752, %v1696
        %v1801 = vadd.f32 %v753, %v1699
        %v1802 = vadd.f32 %v754, %v1702
        %v1803 = vadd.f32 %v755, %v1705
        %v1804 = vadd.f32 %v756, %v1708
        %v1805 = vadd.f32 %v757, %v1711
        %v1806 = vadd.f32 %v758, %v1714
        %v1807 = vadd.f32 %v759, %v1717
        %v1808 = vadd.f32 %v760, %v1720
        %v1809 = vadd.f32 %v761, %v1723
        %v1810 = vadd.f32 %v762, %v1726
        %v1811 = vadd.f32 %v763, %v1729
        %v1812 = vadd.f32 %v764, %v1732
        %v1813 = vadd.f32 %v765, %v1735
        %v1814 = vadd.f32 %v766, %v1738
        %v1815 = vadd.f32 %v767, %v1741
        %vm1816 = vcmask 523264
        %1817 = vst.msk [vmem:[#allocation2] sm:$0xff] %vm1816, %v1743
        %1818 = vst.msk [vmem:[#allocation2 + $0x8] sm:$0xff] %vm1816, %v1744
        %1819 = vst.msk [vmem:[#allocation2 + $0x10] sm:$0xff] %vm1816, %v1745
        %1820 = vst.msk [vmem:[#allocation2 + $0x18] sm:$0xff] %vm1816, %v1746
        %1821 = vst.msk [vmem:[#allocation2 + $0x20] sm:$0xff] %vm1816, %v1747
        %1822 = vst.msk [vmem:[#allocation2 + $0x28] sm:$0xff] %vm1816, %v1748
        %1823 = vst.msk [vmem:[#allocation2 + $0x30] sm:$0xff] %vm1816, %v1749
        %1824 = vst.msk [vmem:[#allocation2 + $0x38] sm:$0xff] %vm1816, %v1750
        %1825 = vst.msk [vmem:[#allocation2 + $0x40] sm:$0xff] %vm1816, %v1751
        %1826 = vst.msk [vmem:[#allocation2 + $0x48] sm:$0xff] %vm1816, %v1752
        %1827 = vst.msk [vmem:[#allocation2 + $0x50] sm:$0xff] %vm1816, %v1753
        %1828 = vst.msk [vmem:[#allocation2 + $0x58] sm:$0xff] %vm1816, %v1754
        %1829 = vst.msk [vmem:[#allocation2 + $0x60] sm:$0xff] %vm1816, %v1755
        %1830 = vst.msk [vmem:[#allocation2 + $0x68] sm:$0xff] %vm1816, %v1756
        %1831 = vst.msk [vmem:[#allocation2 + $0x70] sm:$0xff] %vm1816, %v1757
        %1832 = vst.msk [vmem:[#allocation2 + $0x78] sm:$0xff] %vm1816, %v1758
        %1833 = vst.msk [vmem:[#allocation2 + $0x80] sm:$0xff] %vm1816, %v1759
        %1834 = vst.msk [vmem:[#allocation2 + $0x88] sm:$0xff] %vm1816, %v1760
        %1835 = vst.msk [vmem:[#allocation2 + $0x90] sm:$0xff] %vm1816, %v1761
        %1836 = vst.msk [vmem:[#allocation2 + $0x98] sm:$0xff] %vm1816, %v1762
        %1837 = vst.msk [vmem:[#allocation2 + $0xa0] sm:$0xff] %vm1816, %v1763
        %1838 = vst.msk [vmem:[#allocation2 + $0xa8] sm:$0xff] %vm1816, %v1764
        %1839 = vst.msk [vmem:[#allocation2 + $0xb0] sm:$0xff] %vm1816, %v1765
        %1840 = vst.msk [vmem:[#allocation2 + $0xb8] sm:$0xff] %vm1816, %v1766
        %1841 = vst.msk [vmem:[#allocation2 + $0xc0] sm:$0xff] %vm1816, %v1767
        %1842 = vst.msk [vmem:[#allocation2 + $0xc8] sm:$0xff] %vm1816, %v1768
        %1843 = vst.msk [vmem:[#allocation2 + $0xd0] sm:$0xff] %vm1816, %v1769
        %1844 = vst.msk [vmem:[#allocation2 + $0xd8] sm:$0xff] %vm1816, %v1770
        %1845 = vst.msk [vmem:[#allocation2 + $0xe0] sm:$0xff] %vm1816, %v1771
        %1846 = vst.msk [vmem:[#allocation2 + $0xe8] sm:$0xff] %vm1816, %v1772
        %1847 = vst.msk [vmem:[#allocation2 + $0xf0] sm:$0xff] %vm1816, %v1773
        %1848 = vst.msk [vmem:[#allocation2 + $0xf8] sm:$0xff] %vm1816, %v1774
        %1849 = vst.msk [vmem:[#allocation2 + $0x100] sm:$0xff] %vm1816, %v1775
        %1850 = vst.msk [vmem:[#allocation2 + $0x108] sm:$0xff] %vm1816, %v1776
        %1851 = vst.msk [vmem:[#allocation2 + $0x110] sm:$0xff] %vm1816, %v1777
        %1852 = vst.msk [vmem:[#allocation2 + $0x118] sm:$0xff] %vm1816, %v1778
        %1853 = vst.msk [vmem:[#allocation2 + $0x120] sm:$0xff] %vm1816, %v1779
        %1854 = vst.msk [vmem:[#allocation2 + $0x128] sm:$0xff] %vm1816, %v1780
        %1855 = vst.msk [vmem:[#allocation2 + $0x130] sm:$0xff] %vm1816, %v1781
        %1856 = vst.msk [vmem:[#allocation2 + $0x138] sm:$0xff] %vm1816, %v1782
        %1857 = vst.msk [vmem:[#allocation2 + $0x140] sm:$0xff] %vm1816, %v1783
        %1858 = vst.msk [vmem:[#allocation2 + $0x148] sm:$0xff] %vm1816, %v1784
        %1859 = vst.msk [vmem:[#allocation2 + $0x150] sm:$0xff] %vm1816, %v1785
        %1860 = vst.msk [vmem:[#allocation2 + $0x158] sm:$0xff] %vm1816, %v1786
        %1861 = vst.msk [vmem:[#allocation2 + $0x160] sm:$0xff] %vm1816, %v1787
        %1862 = vst.msk [vmem:[#allocation2 + $0x168] sm:$0xff] %vm1816, %v1788
        %1863 = vst.msk [vmem:[#allocation2 + $0x170] sm:$0xff] %vm1816, %v1789
        %1864 = vst.msk [vmem:[#allocation2 + $0x178] sm:$0xff] %vm1816, %v1790
        %1865 = vst.msk [vmem:[#allocation2 + $0x180] sm:$0xff] %vm1816, %v1791
        %1866 = vst.msk [vmem:[#allocation2 + $0x188] sm:$0xff] %vm1816, %v1792
        %1867 = vst.msk [vmem:[#allocation2 + $0x190] sm:$0xff] %vm1816, %v1793
        %1868 = vst.msk [vmem:[#allocation2 + $0x198] sm:$0xff] %vm1816, %v1794
        %1869 = vst.msk [vmem:[#allocation2 + $0x1a0] sm:$0xff] %vm1816, %v1795
        %1870 = vst.msk [vmem:[#allocation2 + $0x1a8] sm:$0xff] %vm1816, %v1796
        %1871 = vst.msk [vmem:[#allocation2 + $0x1b0] sm:$0xff] %vm1816, %v1797
        %1872 = vst.msk [vmem:[#allocation2 + $0x1b8] sm:$0xff] %vm1816, %v1798
        %1873 = vst.msk [vmem:[#allocation2 + $0x1c0] sm:$0xff] %vm1816, %v1799
        %1874 = vst.msk [vmem:[#allocation2 + $0x1c8] sm:$0xff] %vm1816, %v1800
        %1875 = vst.msk [vmem:[#allocation2 + $0x1d0] sm:$0xff] %vm1816, %v1801
        %1876 = vst.msk [vmem:[#allocation2 + $0x1d8] sm:$0xff] %vm1816, %v1802
        %1877 = vst.msk [vmem:[#allocation2 + $0x1e0] sm:$0xff] %vm1816, %v1803
        %1878 = vst.msk [vmem:[#allocation2 + $0x1e8] sm:$0xff] %vm1816, %v1804
        %1879 = vst.msk [vmem:[#allocation2 + $0x1f0] sm:$0xff] %vm1816, %v1805
        %1880 = vst.msk [vmem:[#allocation2 + $0x1f8] sm:$0xff] %vm1816, %v1806
        %1881 = vst.msk [vmem:[#allocation2 + $0x200] sm:$0xff] %vm1816, %v1807
        %1882 = vst.msk [vmem:[#allocation2 + $0x208] sm:$0xff] %vm1816, %v1808
        %1883 = vst.msk [vmem:[#allocation2 + $0x210] sm:$0xff] %vm1816, %v1809
        %1884 = vst.msk [vmem:[#allocation2 + $0x218] sm:$0xff] %vm1816, %v1810
        %1885 = vst.msk [vmem:[#allocation2 + $0x220] sm:$0xff] %vm1816, %v1811
        %1886 = vst.msk [vmem:[#allocation2 + $0x228] sm:$0xff] %vm1816, %v1812
        %1887 = vst.msk [vmem:[#allocation2 + $0x230] sm:$0xff] %vm1816, %v1813
        %1888 = vst.msk [vmem:[#allocation2 + $0x238] sm:$0xff] %vm1816, %v1814
        %vm1889 = vcmask 517120
        %1890 = vst.msk [vmem:[#allocation2 + $0x240] sm:$0x3] %vm1889, %v1815
        %p1891 = scmp.eq.s32.totalorder %s34, 2
        // Predicated region
        $region117: #{tpu_custom_call.1} parent=75 // pred_check
          %p1892 = pneg %p1891
        $region118: #{tpu_custom_call.1} parent=75 // pred_check_branch
          %1894 = sbr.rel (%p1892) target = $region120
        $region119: #{tpu_custom_call.1} parent=75 // pred_region
          %v1895 = vld [vmem:[#allocation2] sm:$0xff]
          %v1896 = vld [vmem:[#allocation2 + $0x8] sm:$0xff]
          %v1897 = vld [vmem:[#allocation2 + $0x10] sm:$0xff]
          %v1898 = vld [vmem:[#allocation2 + $0x18] sm:$0xff]
          %v1899 = vld [vmem:[#allocation2 + $0x20] sm:$0xff]
          %v1900 = vld [vmem:[#allocation2 + $0x28] sm:$0xff]
          %v1901 = vld [vmem:[#allocation2 + $0x30] sm:$0xff]
          %v1902 = vld [vmem:[#allocation2 + $0x38] sm:$0xff]
          %v1903 = vld [vmem:[#allocation2 + $0x40] sm:$0xff]
          %v1904 = vld [vmem:[#allocation2 + $0x48] sm:$0xff]
          %v1905 = vld [vmem:[#allocation2 + $0x50] sm:$0xff]
          %v1906 = vld [vmem:[#allocation2 + $0x58] sm:$0xff]
          %v1907 = vld [vmem:[#allocation2 + $0x60] sm:$0xff]
          %v1908 = vld [vmem:[#allocation2 + $0x68] sm:$0xff]
          %v1909 = vld [vmem:[#allocation2 + $0x70] sm:$0xff]
          %v1910 = vld [vmem:[#allocation2 + $0x78] sm:$0xff]
          %v1911 = vld [vmem:[#allocation2 + $0x80] sm:$0xff]
          %v1912 = vld [vmem:[#allocation2 + $0x88] sm:$0xff]
          %v1913 = vld [vmem:[#allocation2 + $0x90] sm:$0xff]
          %v1914 = vld [vmem:[#allocation2 + $0x98] sm:$0xff]
          %v1915 = vld [vmem:[#allocation2 + $0xa0] sm:$0xff]
          %v1916 = vld [vmem:[#allocation2 + $0xa8] sm:$0xff]
          %v1917 = vld [vmem:[#allocation2 + $0xb0] sm:$0xff]
          %v1918 = vld [vmem:[#allocation2 + $0xb8] sm:$0xff]
          %v1919 = vld [vmem:[#allocation2 + $0xc0] sm:$0xff]
          %v1920 = vld [vmem:[#allocation2 + $0xc8] sm:$0xff]
          %v1921 = vld [vmem:[#allocation2 + $0xd0] sm:$0xff]
          %v1922 = vld [vmem:[#allocation2 + $0xd8] sm:$0xff]
          %v1923 = vld [vmem:[#allocation2 + $0xe0] sm:$0xff]
          %v1924 = vld [vmem:[#allocation2 + $0xe8] sm:$0xff]
          %v1925 = vld [vmem:[#allocation2 + $0xf0] sm:$0xff]
          %v1926 = vld [vmem:[#allocation2 + $0xf8] sm:$0xff]
          %v1927 = vld [vmem:[#allocation2 + $0x100] sm:$0xff]
          %v1928 = vld [vmem:[#allocation2 + $0x108] sm:$0xff]
          %v1929 = vld [vmem:[#allocation2 + $0x110] sm:$0xff]
          %v1930 = vld [vmem:[#allocation2 + $0x118] sm:$0xff]
          %v1931 = vld [vmem:[#allocation2 + $0x120] sm:$0xff]
          %v1932 = vld [vmem:[#allocation2 + $0x128] sm:$0xff]
          %v1933 = vld [vmem:[#allocation2 + $0x130] sm:$0xff]
          %v1934 = vld [vmem:[#allocation2 + $0x138] sm:$0xff]
          %v1935 = vld [vmem:[#allocation2 + $0x140] sm:$0xff]
          %v1936 = vld [vmem:[#allocation2 + $0x148] sm:$0xff]
          %v1937 = vld [vmem:[#allocation2 + $0x150] sm:$0xff]
          %v1938 = vld [vmem:[#allocation2 + $0x158] sm:$0xff]
          %v1939 = vld [vmem:[#allocation2 + $0x160] sm:$0xff]
          %v1940 = vld [vmem:[#allocation2 + $0x168] sm:$0xff]
          %v1941 = vld [vmem:[#allocation2 + $0x170] sm:$0xff]
          %v1942 = vld [vmem:[#allocation2 + $0x178] sm:$0xff]
          %v1943 = vld [vmem:[#allocation2 + $0x180] sm:$0xff]
          %v1944 = vld [vmem:[#allocation2 + $0x188] sm:$0xff]
          %v1945 = vld [vmem:[#allocation2 + $0x190] sm:$0xff]
          %v1946 = vld [vmem:[#allocation2 + $0x198] sm:$0xff]
          %v1947 = vld [vmem:[#allocation2 + $0x1a0] sm:$0xff]
          %v1948 = vld [vmem:[#allocation2 + $0x1a8] sm:$0xff]
          %v1949 = vld [vmem:[#allocation2 + $0x1b0] sm:$0xff]
          %v1950 = vld [vmem:[#allocation2 + $0x1b8] sm:$0xff]
          %v1951 = vld [vmem:[#allocation2 + $0x1c0] sm:$0xff]
          %v1952 = vld [vmem:[#allocation2 + $0x1c8] sm:$0xff]
          %v1953 = vld [vmem:[#allocation2 + $0x1d0] sm:$0xff]
          %v1954 = vld [vmem:[#allocation2 + $0x1d8] sm:$0xff]
          %v1955 = vld [vmem:[#allocation2 + $0x1e0] sm:$0xff]
          %v1956 = vld [vmem:[#allocation2 + $0x1e8] sm:$0xff]
          %v1957 = vld [vmem:[#allocation2 + $0x1f0] sm:$0xff]
          %v1958 = vld [vmem:[#allocation2 + $0x1f8] sm:$0xff]
          %v1959 = vld [vmem:[#allocation2 + $0x200] sm:$0xff]
          %v1960 = vld [vmem:[#allocation2 + $0x208] sm:$0xff]
          %v1961 = vld [vmem:[#allocation2 + $0x210] sm:$0xff]
          %v1962 = vld [vmem:[#allocation2 + $0x218] sm:$0xff]
          %v1963 = vld [vmem:[#allocation2 + $0x220] sm:$0xff]
          %v1964 = vld [vmem:[#allocation2 + $0x228] sm:$0xff]
          %v1965 = vld [vmem:[#allocation2 + $0x230] sm:$0xff]
          %v1966 = vld [vmem:[#allocation2 + $0x238] sm:$0xff]
          %v1967 = vld [vmem:[#allocation2 + $0x240] sm:$0x3]
          %v1968 = vld [vmem:[#allocation8] sm:$0x1]
          %v1970 = vperm.slane %v1968, 0
          %v1972 = vadd.f32 %v1895, %v1970
          %v1973 = vadd.f32 %v1896, %v1970
          %v1974 = vadd.f32 %v1897, %v1970
          %v1975 = vadd.f32 %v1898, %v1970
          %v1976 = vadd.f32 %v1899, %v1970
          %v1977 = vadd.f32 %v1900, %v1970
          %v1978 = vadd.f32 %v1901, %v1970
          %v1979 = vadd.f32 %v1902, %v1970
          %v1980 = vadd.f32 %v1903, %v1970
          %v1981 = vadd.f32 %v1904, %v1970
          %v1982 = vadd.f32 %v1905, %v1970
          %v1983 = vadd.f32 %v1906, %v1970
          %v1984 = vadd.f32 %v1907, %v1970
          %v1985 = vadd.f32 %v1908, %v1970
          %v1986 = vadd.f32 %v1909, %v1970
          %v1987 = vadd.f32 %v1910, %v1970
          %v1988 = vadd.f32 %v1911, %v1970
          %v1989 = vadd.f32 %v1912, %v1970
          %v1990 = vadd.f32 %v1913, %v1970
          %v1991 = vadd.f32 %v1914, %v1970
          %v1992 = vadd.f32 %v1915, %v1970
          %v1993 = vadd.f32 %v1916, %v1970
          %v1994 = vadd.f32 %v1917, %v1970
          %v1995 = vadd.f32 %v1918, %v1970
          %v1996 = vadd.f32 %v1919, %v1970
          %v1997 = vadd.f32 %v1920, %v1970
          %v1998 = vadd.f32 %v1921, %v1970
          %v1999 = vadd.f32 %v1922, %v1970
          %v2000 = vadd.f32 %v1923, %v1970
          %v2001 = vadd.f32 %v1924, %v1970
          %v2002 = vadd.f32 %v1925, %v1970
          %v2003 = vadd.f32 %v1926, %v1970
          %v2004 = vadd.f32 %v1927, %v1970
          %v2005 = vadd.f32 %v1928, %v1970
          %v2006 = vadd.f32 %v1929, %v1970
          %v2007 = vadd.f32 %v1930, %v1970
          %v2008 = vadd.f32 %v1931, %v1970
          %v2009 = vadd.f32 %v1932, %v1970
          %v2010 = vadd.f32 %v1933, %v1970
          %v2011 = vadd.f32 %v1934, %v1970
          %v2012 = vadd.f32 %v1935, %v1970
          %v2013 = vadd.f32 %v1936, %v1970
          %v2014 = vadd.f32 %v1937, %v1970
          %v2015 = vadd.f32 %v1938, %v1970
          %v2016 = vadd.f32 %v1939, %v1970
          %v2017 = vadd.f32 %v1940, %v1970
          %v2018 = vadd.f32 %v1941, %v1970
          %v2019 = vadd.f32 %v1942, %v1970
          %v2020 = vadd.f32 %v1943, %v1970
          %v2021 = vadd.f32 %v1944, %v1970
          %v2022 = vadd.f32 %v1945, %v1970
          %v2023 = vadd.f32 %v1946, %v1970
          %v2024 = vadd.f32 %v1947, %v1970
          %v2025 = vadd.f32 %v1948, %v1970
          %v2026 = vadd.f32 %v1949, %v1970
          %v2027 = vadd.f32 %v1950, %v1970
          %v2028 = vadd.f32 %v1951, %v1970
          %v2029 = vadd.f32 %v1952, %v1970
          %v2030 = vadd.f32 %v1953, %v1970
          %v2031 = vadd.f32 %v1954, %v1970
          %v2032 = vadd.f32 %v1955, %v1970
          %v2033 = vadd.f32 %v1956, %v1970
          %v2034 = vadd.f32 %v1957, %v1970
          %v2035 = vadd.f32 %v1958, %v1970
          %v2036 = vadd.f32 %v1959, %v1970
          %v2037 = vadd.f32 %v1960, %v1970
          %v2038 = vadd.f32 %v1961, %v1970
          %v2039 = vadd.f32 %v1962, %v1970
          %v2040 = vadd.f32 %v1963, %v1970
          %v2041 = vadd.f32 %v1964, %v1970
          %v2042 = vadd.f32 %v1965, %v1970
          %v2043 = vadd.f32 %v1966, %v1970
          %v2044 = vadd.f32 %v1967, %v1970
          %v2045 = vsel %vm1816, %v1972, 0.0
          %v2046 = vsel %vm1816, %v1973, 0.0
          %v2047 = vadd.f32 %v2045, %v2046
          %v2048 = vsel %vm1816, %v1974, 0.0
          %v2049 = vadd.f32 %v2047, %v2048
          %v2050 = vsel %vm1816, %v1975, 0.0
          %v2051 = vadd.f32 %v2049, %v2050
          %v2052 = vsel %vm1816, %v1976, 0.0
          %v2053 = vadd.f32 %v2051, %v2052
          %v2054 = vsel %vm1816, %v1977, 0.0
          %v2055 = vadd.f32 %v2053, %v2054
          %v2056 = vsel %vm1816, %v1978, 0.0
          %v2057 = vadd.f32 %v2055, %v2056
          %v2058 = vsel %vm1816, %v1979, 0.0
          %v2059 = vadd.f32 %v2057, %v2058
          %v2060 = vsel %vm1816, %v1980, 0.0
          %v2061 = vadd.f32 %v2059, %v2060
          %v2062 = vsel %vm1816, %v1981, 0.0
          %v2063 = vadd.f32 %v2061, %v2062
          %v2064 = vsel %vm1816, %v1982, 0.0
          %v2065 = vadd.f32 %v2063, %v2064
          %v2066 = vsel %vm1816, %v1983, 0.0
          %v2067 = vadd.f32 %v2065, %v2066
          %v2068 = vsel %vm1816, %v1984, 0.0
          %v2069 = vadd.f32 %v2067, %v2068
          %v2070 = vsel %vm1816, %v1985, 0.0
          %v2071 = vadd.f32 %v2069, %v2070
          %v2072 = vsel %vm1816, %v1986, 0.0
          %v2073 = vadd.f32 %v2071, %v2072
          %v2074 = vsel %vm1816, %v1987, 0.0
          %v2075 = vadd.f32 %v2073, %v2074
          %v2076 = vsel %vm1816, %v1988, 0.0
          %v2077 = vadd.f32 %v2075, %v2076
          %v2078 = vsel %vm1816, %v1989, 0.0
          %v2079 = vadd.f32 %v2077, %v2078
          %v2080 = vsel %vm1816, %v1990, 0.0
          %v2081 = vadd.f32 %v2079, %v2080
          %v2082 = vsel %vm1816, %v1991, 0.0
          %v2083 = vadd.f32 %v2081, %v2082
          %v2084 = vsel %vm1816, %v1992, 0.0
          %v2085 = vadd.f32 %v2083, %v2084
          %v2086 = vsel %vm1816, %v1993, 0.0
          %v2087 = vadd.f32 %v2085, %v2086
          %v2088 = vsel %vm1816, %v1994, 0.0
          %v2089 = vadd.f32 %v2087, %v2088
          %v2090 = vsel %vm1816, %v1995, 0.0
          %v2091 = vadd.f32 %v2089, %v2090
          %v2092 = vsel %vm1816, %v1996, 0.0
          %v2093 = vadd.f32 %v2091, %v2092
          %v2094 = vsel %vm1816, %v1997, 0.0
          %v2095 = vadd.f32 %v2093, %v2094
          %v2096 = vsel %vm1816, %v1998, 0.0
          %v2097 = vadd.f32 %v2095, %v2096
          %v2098 = vsel %vm1816, %v1999, 0.0
          %v2099 = vadd.f32 %v2097, %v2098
          %v2100 = vsel %vm1816, %v2000, 0.0
          %v2101 = vadd.f32 %v2099, %v2100
          %v2102 = vsel %vm1816, %v2001, 0.0
          %v2103 = vadd.f32 %v2101, %v2102
          %v2104 = vsel %vm1816, %v2002, 0.0
          %v2105 = vadd.f32 %v2103, %v2104
          %v2106 = vsel %vm1816, %v2003, 0.0
          %v2107 = vadd.f32 %v2105, %v2106
          %v2108 = vsel %vm1816, %v2004, 0.0
          %v2109 = vadd.f32 %v2107, %v2108
          %v2110 = vsel %vm1816, %v2005, 0.0
          %v2111 = vadd.f32 %v2109, %v2110
          %v2112 = vsel %vm1816, %v2006, 0.0
          %v2113 = vadd.f32 %v2111, %v2112
          %v2114 = vsel %vm1816, %v2007, 0.0
          %v2115 = vadd.f32 %v2113, %v2114
          %v2116 = vsel %vm1816, %v2008, 0.0
          %v2117 = vadd.f32 %v2115, %v2116
          %v2118 = vsel %vm1816, %v2009, 0.0
          %v2119 = vadd.f32 %v2117, %v2118
          %v2120 = vsel %vm1816, %v2010, 0.0
          %v2121 = vadd.f32 %v2119, %v2120
          %v2122 = vsel %vm1816, %v2011, 0.0
          %v2123 = vadd.f32 %v2121, %v2122
          %v2124 = vsel %vm1816, %v2012, 0.0
          %v2125 = vadd.f32 %v2123, %v2124
          %v2126 = vsel %vm1816, %v2013, 0.0
          %v2127 = vadd.f32 %v2125, %v2126
          %v2128 = vsel %vm1816, %v2014, 0.0
          %v2129 = vadd.f32 %v2127, %v2128
          %v2130 = vsel %vm1816, %v2015, 0.0
          %v2131 = vadd.f32 %v2129, %v2130
          %v2132 = vsel %vm1816, %v2016, 0.0
          %v2133 = vadd.f32 %v2131, %v2132
          %v2134 = vsel %vm1816, %v2017, 0.0
          %v2135 = vadd.f32 %v2133, %v2134
          %v2136 = vsel %vm1816, %v2018, 0.0
          %v2137 = vadd.f32 %v2135, %v2136
          %v2138 = vsel %vm1816, %v2019, 0.0
          %v2139 = vadd.f32 %v2137, %v2138
          %v2140 = vsel %vm1816, %v2020, 0.0
          %v2141 = vadd.f32 %v2139, %v2140
          %v2142 = vsel %vm1816, %v2021, 0.0
          %v2143 = vadd.f32 %v2141, %v2142
          %v2144 = vsel %vm1816, %v2022, 0.0
          %v2145 = vadd.f32 %v2143, %v2144
          %v2146 = vsel %vm1816, %v2023, 0.0
          %v2147 = vadd.f32 %v2145, %v2146
          %v2148 = vsel %vm1816, %v2024, 0.0
          %v2149 = vadd.f32 %v2147, %v2148
          %v2150 = vsel %vm1816, %v2025, 0.0
          %v2151 = vadd.f32 %v2149, %v2150
          %v2152 = vsel %vm1816, %v2026, 0.0
          %v2153 = vadd.f32 %v2151, %v2152
          %v2154 = vsel %vm1816, %v2027, 0.0
          %v2155 = vadd.f32 %v2153, %v2154
          %v2156 = vsel %vm1816, %v2028, 0.0
          %v2157 = vadd.f32 %v2155, %v2156
          %v2158 = vsel %vm1816, %v2029, 0.0
          %v2159 = vadd.f32 %v2157, %v2158
          %v2160 = vsel %vm1816, %v2030, 0.0
          %v2161 = vadd.f32 %v2159, %v2160
          %v2162 = vsel %vm1816, %v2031, 0.0
          %v2163 = vadd.f32 %v2161, %v2162
          %v2164 = vsel %vm1816, %v2032, 0.0
          %v2165 = vadd.f32 %v2163, %v2164
          %v2166 = vsel %vm1816, %v2033, 0.0
          %v2167 = vadd.f32 %v2165, %v2166
          %v2168 = vsel %vm1816, %v2034, 0.0
          %v2169 = vadd.f32 %v2167, %v2168
          %v2170 = vsel %vm1816, %v2035, 0.0
          %v2171 = vadd.f32 %v2169, %v2170
          %v2172 = vsel %vm1816, %v2036, 0.0
          %v2173 = vadd.f32 %v2171, %v2172
          %v2174 = vsel %vm1816, %v2037, 0.0
          %v2175 = vadd.f32 %v2173, %v2174
          %v2176 = vsel %vm1816, %v2038, 0.0
          %v2177 = vadd.f32 %v2175, %v2176
          %v2178 = vsel %vm1816, %v2039, 0.0
          %v2179 = vadd.f32 %v2177, %v2178
          %v2180 = vsel %vm1816, %v2040, 0.0
          %v2181 = vadd.f32 %v2179, %v2180
          %v2182 = vsel %vm1816, %v2041, 0.0
          %v2183 = vadd.f32 %v2181, %v2182
          %v2184 = vsel %vm1816, %v2042, 0.0
          %v2185 = vadd.f32 %v2183, %v2184
          %v2186 = vsel %vm1816, %v2043, 0.0
          %v2187 = vadd.f32 %v2185, %v2186
          %v2188 = vsel %vm1889, %v2044, 0.0
          %v2189 = vadd.f32 %v2187, %v2188
          %v2190 = vrot.slane %v2189, 4
          %v2191 = vadd.f32 %v2189, %v2190
          %v2192 = vrot.slane %v2191, 2
          %v2193 = vadd.f32 %v2191, %v2192
          %v2194 = vrot.slane %v2193, 1
          %v2195 = vadd.f32 %v2193, %v2194
          %v2196 = vmul.f32 %v2195, 0.0017301039
          %v2197 = vmul.f32 %v1972, %v1972
          %v2198 = vmul.f32 %v1973, %v1973
          %v2199 = vmul.f32 %v1974, %v1974
          %v2200 = vmul.f32 %v1975, %v1975
          %v2201 = vmul.f32 %v1976, %v1976
          %v2202 = vmul.f32 %v1977, %v1977
          %v2203 = vmul.f32 %v1978, %v1978
          %v2204 = vmul.f32 %v1979, %v1979
          %v2205 = vmul.f32 %v1980, %v1980
          %v2206 = vmul.f32 %v1981, %v1981
          %v2207 = vmul.f32 %v1982, %v1982
          %v2208 = vmul.f32 %v1983, %v1983
          %v2209 = vmul.f32 %v1984, %v1984
          %v2210 = vmul.f32 %v1985, %v1985
          %v2211 = vmul.f32 %v1986, %v1986
          %v2212 = vmul.f32 %v1987, %v1987
          %v2213 = vmul.f32 %v1988, %v1988
          %v2214 = vmul.f32 %v1989, %v1989
          %v2215 = vmul.f32 %v1990, %v1990
          %v2216 = vmul.f32 %v1991, %v1991
          %v2217 = vmul.f32 %v1992, %v1992
          %v2218 = vmul.f32 %v1993, %v1993
          %v2219 = vmul.f32 %v1994, %v1994
          %v2220 = vmul.f32 %v1995, %v1995
          %v2221 = vmul.f32 %v1996, %v1996
          %v2222 = vmul.f32 %v1997, %v1997
          %v2223 = vmul.f32 %v1998, %v1998
          %v2224 = vmul.f32 %v1999, %v1999
          %v2225 = vmul.f32 %v2000, %v2000
          %v2226 = vmul.f32 %v2001, %v2001
          %v2227 = vmul.f32 %v2002, %v2002
          %v2228 = vmul.f32 %v2003, %v2003
          %v2229 = vmul.f32 %v2004, %v2004
          %v2230 = vmul.f32 %v2005, %v2005
          %v2231 = vmul.f32 %v2006, %v2006
          %v2232 = vmul.f32 %v2007, %v2007
          %v2233 = vmul.f32 %v2008, %v2008
          %v2234 = vmul.f32 %v2009, %v2009
          %v2235 = vmul.f32 %v2010, %v2010
          %v2236 = vmul.f32 %v2011, %v2011
          %v2237 = vmul.f32 %v2012, %v2012
          %v2238 = vmul.f32 %v2013, %v2013
          %v2239 = vmul.f32 %v2014, %v2014
          %v2240 = vmul.f32 %v2015, %v2015
          %v2241 = vmul.f32 %v2016, %v2016
          %v2242 = vmul.f32 %v2017, %v2017
          %v2243 = vmul.f32 %v2018, %v2018
          %v2244 = vmul.f32 %v2019, %v2019
          %v2245 = vmul.f32 %v2020, %v2020
          %v2246 = vmul.f32 %v2021, %v2021
          %v2247 = vmul.f32 %v2022, %v2022
          %v2248 = vmul.f32 %v2023, %v2023
          %v2249 = vmul.f32 %v2024, %v2024
          %v2250 = vmul.f32 %v2025, %v2025
          %v2251 = vmul.f32 %v2026, %v2026
          %v2252 = vmul.f32 %v2027, %v2027
          %v2253 = vmul.f32 %v2028, %v2028
          %v2254 = vmul.f32 %v2029, %v2029
          %v2255 = vmul.f32 %v2030, %v2030
          %v2256 = vmul.f32 %v2031, %v2031
          %v2257 = vmul.f32 %v2032, %v2032
          %v2258 = vmul.f32 %v2033, %v2033
          %v2259 = vmul.f32 %v2034, %v2034
          %v2260 = vmul.f32 %v2035, %v2035
          %v2261 = vmul.f32 %v2036, %v2036
          %v2262 = vmul.f32 %v2037, %v2037
          %v2263 = vmul.f32 %v2038, %v2038
          %v2264 = vmul.f32 %v2039, %v2039
          %v2265 = vmul.f32 %v2040, %v2040
          %v2266 = vmul.f32 %v2041, %v2041
          %v2267 = vmul.f32 %v2042, %v2042
          %v2268 = vmul.f32 %v2043, %v2043
          %v2269 = vmul.f32 %v2044, %v2044
          %v2270 = vsel %vm1816, %v2197, 0.0
          %v2271 = vsel %vm1816, %v2198, 0.0
          %v2272 = vadd.f32 %v2270, %v2271
          %v2273 = vsel %vm1816, %v2199, 0.0
          %v2274 = vadd.f32 %v2272, %v2273
          %v2275 = vsel %vm1816, %v2200, 0.0
          %v2276 = vadd.f32 %v2274, %v2275
          %v2277 = vsel %vm1816, %v2201, 0.0
          %v2278 = vadd.f32 %v2276, %v2277
          %v2279 = vsel %vm1816, %v2202, 0.0
          %v2280 = vadd.f32 %v2278, %v2279
          %v2281 = vsel %vm1816, %v2203, 0.0
          %v2282 = vadd.f32 %v2280, %v2281
          %v2283 = vsel %vm1816, %v2204, 0.0
          %v2284 = vadd.f32 %v2282, %v2283
          %v2285 = vsel %vm1816, %v2205, 0.0
          %v2286 = vadd.f32 %v2284, %v2285
          %v2287 = vsel %vm1816, %v2206, 0.0
          %v2288 = vadd.f32 %v2286, %v2287
          %v2289 = vsel %vm1816, %v2207, 0.0
          %v2290 = vadd.f32 %v2288, %v2289
          %v2291 = vsel %vm1816, %v2208, 0.0
          %v2292 = vadd.f32 %v2290, %v2291
          %v2293 = vsel %vm1816, %v2209, 0.0
          %v2294 = vadd.f32 %v2292, %v2293
          %v2295 = vsel %vm1816, %v2210, 0.0
          %v2296 = vadd.f32 %v2294, %v2295
          %v2297 = vsel %vm1816, %v2211, 0.0
          %v2298 = vadd.f32 %v2296, %v2297
          %v2299 = vsel %vm1816, %v2212, 0.0
          %v2300 = vadd.f32 %v2298, %v2299
          %v2301 = vsel %vm1816, %v2213, 0.0
          %v2302 = vadd.f32 %v2300, %v2301
          %v2303 = vsel %vm1816, %v2214, 0.0
          %v2304 = vadd.f32 %v2302, %v2303
          %v2305 = vsel %vm1816, %v2215, 0.0
          %v2306 = vadd.f32 %v2304, %v2305
          %v2307 = vsel %vm1816, %v2216, 0.0
          %v2308 = vadd.f32 %v2306, %v2307
          %v2309 = vsel %vm1816, %v2217, 0.0
          %v2310 = vadd.f32 %v2308, %v2309
          %v2311 = vsel %vm1816, %v2218, 0.0
          %v2312 = vadd.f32 %v2310, %v2311
          %v2313 = vsel %vm1816, %v2219, 0.0
          %v2314 = vadd.f32 %v2312, %v2313
          %v2315 = vsel %vm1816, %v2220, 0.0
          %v2316 = vadd.f32 %v2314, %v2315
          %v2317 = vsel %vm1816, %v2221, 0.0
          %v2318 = vadd.f32 %v2316, %v2317
          %v2319 = vsel %vm1816, %v2222, 0.0
          %v2320 = vadd.f32 %v2318, %v2319
          %v2321 = vsel %vm1816, %v2223, 0.0
          %v2322 = vadd.f32 %v2320, %v2321
          %v2323 = vsel %vm1816, %v2224, 0.0
          %v2324 = vadd.f32 %v2322, %v2323
          %v2325 = vsel %vm1816, %v2225, 0.0
          %v2326 = vadd.f32 %v2324, %v2325
          %v2327 = vsel %vm1816, %v2226, 0.0
          %v2328 = vadd.f32 %v2326, %v2327
          %v2329 = vsel %vm1816, %v2227, 0.0
          %v2330 = vadd.f32 %v2328, %v2329
          %v2331 = vsel %vm1816, %v2228, 0.0
          %v2332 = vadd.f32 %v2330, %v2331
          %v2333 = vsel %vm1816, %v2229, 0.0
          %v2334 = vadd.f32 %v2332, %v2333
          %v2335 = vsel %vm1816, %v2230, 0.0
          %v2336 = vadd.f32 %v2334, %v2335
          %v2337 = vsel %vm1816, %v2231, 0.0
          %v2338 = vadd.f32 %v2336, %v2337
          %v2339 = vsel %vm1816, %v2232, 0.0
          %v2340 = vadd.f32 %v2338, %v2339
          %v2341 = vsel %vm1816, %v2233, 0.0
          %v2342 = vadd.f32 %v2340, %v2341
          %v2343 = vsel %vm1816, %v2234, 0.0
          %v2344 = vadd.f32 %v2342, %v2343
          %v2345 = vsel %vm1816, %v2235, 0.0
          %v2346 = vadd.f32 %v2344, %v2345
          %v2347 = vsel %vm1816, %v2236, 0.0
          %v2348 = vadd.f32 %v2346, %v2347
          %v2349 = vsel %vm1816, %v2237, 0.0
          %v2350 = vadd.f32 %v2348, %v2349
          %v2351 = vsel %vm1816, %v2238, 0.0
          %v2352 = vadd.f32 %v2350, %v2351
          %v2353 = vsel %vm1816, %v2239, 0.0
          %v2354 = vadd.f32 %v2352, %v2353
          %v2355 = vsel %vm1816, %v2240, 0.0
          %v2356 = vadd.f32 %v2354, %v2355
          %v2357 = vsel %vm1816, %v2241, 0.0
          %v2358 = vadd.f32 %v2356, %v2357
          %v2359 = vsel %vm1816, %v2242, 0.0
          %v2360 = vadd.f32 %v2358, %v2359
          %v2361 = vsel %vm1816, %v2243, 0.0
          %v2362 = vadd.f32 %v2360, %v2361
          %v2363 = vsel %vm1816, %v2244, 0.0
          %v2364 = vadd.f32 %v2362, %v2363
          %v2365 = vsel %vm1816, %v2245, 0.0
          %v2366 = vadd.f32 %v2364, %v2365
          %v2367 = vsel %vm1816, %v2246, 0.0
          %v2368 = vadd.f32 %v2366, %v2367
          %v2369 = vsel %vm1816, %v2247, 0.0
          %v2370 = vadd.f32 %v2368, %v2369
          %v2371 = vsel %vm1816, %v2248, 0.0
          %v2372 = vadd.f32 %v2370, %v2371
          %v2373 = vsel %vm1816, %v2249, 0.0
          %v2374 = vadd.f32 %v2372, %v2373
          %v2375 = vsel %vm1816, %v2250, 0.0
          %v2376 = vadd.f32 %v2374, %v2375
          %v2377 = vsel %vm1816, %v2251, 0.0
          %v2378 = vadd.f32 %v2376, %v2377
          %v2379 = vsel %vm1816, %v2252, 0.0
          %v2380 = vadd.f32 %v2378, %v2379
          %v2381 = vsel %vm1816, %v2253, 0.0
          %v2382 = vadd.f32 %v2380, %v2381
          %v2383 = vsel %vm1816, %v2254, 0.0
          %v2384 = vadd.f32 %v2382, %v2383
          %v2385 = vsel %vm1816, %v2255, 0.0
          %v2386 = vadd.f32 %v2384, %v2385
          %v2387 = vsel %vm1816, %v2256, 0.0
          %v2388 = vadd.f32 %v2386, %v2387
          %v2389 = vsel %vm1816, %v2257, 0.0
          %v2390 = vadd.f32 %v2388, %v2389
          %v2391 = vsel %vm1816, %v2258, 0.0
          %v2392 = vadd.f32 %v2390, %v2391
          %v2393 = vsel %vm1816, %v2259, 0.0
          %v2394 = vadd.f32 %v2392, %v2393
          %v2395 = vsel %vm1816, %v2260, 0.0
          %v2396 = vadd.f32 %v2394, %v2395
          %v2397 = vsel %vm1816, %v2261, 0.0
          %v2398 = vadd.f32 %v2396, %v2397
          %v2399 = vsel %vm1816, %v2262, 0.0
          %v2400 = vadd.f32 %v2398, %v2399
          %v2401 = vsel %vm1816, %v2263, 0.0
          %v2402 = vadd.f32 %v2400, %v2401
          %v2403 = vsel %vm1816, %v2264, 0.0
          %v2404 = vadd.f32 %v2402, %v2403
          %v2405 = vsel %vm1816, %v2265, 0.0
          %v2406 = vadd.f32 %v2404, %v2405
          %v2407 = vsel %vm1816, %v2266, 0.0
          %v2408 = vadd.f32 %v2406, %v2407
          %v2409 = vsel %vm1816, %v2267, 0.0
          %v2410 = vadd.f32 %v2408, %v2409
          %v2411 = vsel %vm1816, %v2268, 0.0
          %v2412 = vadd.f32 %v2410, %v2411
          %v2413 = vsel %vm1889, %v2269, 0.0
          %v2414 = vadd.f32 %v2412, %v2413
          %v2415 = vrot.slane %v2414, 4
          %v2416 = vadd.f32 %v2414, %v2415
          %v2417 = vrot.slane %v2416, 2
          %v2418 = vadd.f32 %v2416, %v2417
          %v2419 = vrot.slane %v2418, 1
          %v2420 = vadd.f32 %v2418, %v2419
          %v2421 = vmul.f32 %v2420, 0.0017301039
          %v2422 = vmul.f32 %v2196, %v2196
          %v2423 = vsub.f32 %v2421, %v2422
          %v2424 = vld [vmem:[#allocation10] sm:$0x1]
          %v2425 = vadd.f32 %v2423, 1e-05
          %v2426 = vrsqrt.pop %v2425
          %v2427 = vmul.f32 %v2426, %v2425
          %v2428 = vmul.f32 %v2427, %v2426
          %v2429 = vmul.f32 0.5, %v2428
          %v2430 = vsub.f32 1.5, %v2429
          %v2431 = vmul.f32 %v2426, %v2430
          %vm2432 = vweird.f32 %v2425
          %vm2433 = vweird.f32 %v2426
          %vm2434 = vmor %vm2432, %vm2433
          %v2435 = vsel %vm2434, %v2426, %v2431
          %v2436 = vmul.f32 %v2424, %v2435
          %v2437 = vld [vmem:[#allocation11] sm:$0x1]
          %v2438 = vmul.f32 %v2196, %v2436
          %v2439 = vsub.f32 %v2437, %v2438
          %v2441 = vperm.slane %v2436, 0
          %v2443 = vmul.f32 %v1972, %v2441
          %v2444 = vmul.f32 %v1973, %v2441
          %v2445 = vmul.f32 %v1974, %v2441
          %v2446 = vmul.f32 %v1975, %v2441
          %v2447 = vmul.f32 %v1976, %v2441
          %v2448 = vmul.f32 %v1977, %v2441
          %v2449 = vmul.f32 %v1978, %v2441
          %v2450 = vmul.f32 %v1979, %v2441
          %v2451 = vmul.f32 %v1980, %v2441
          %v2452 = vmul.f32 %v1981, %v2441
          %v2453 = vmul.f32 %v1982, %v2441
          %v2454 = vmul.f32 %v1983, %v2441
          %v2455 = vmul.f32 %v1984, %v2441
          %v2456 = vmul.f32 %v1985, %v2441
          %v2457 = vmul.f32 %v1986, %v2441
          %v2458 = vmul.f32 %v1987, %v2441
          %v2459 = vmul.f32 %v1988, %v2441
          %v2460 = vmul.f32 %v1989, %v2441
          %v2461 = vmul.f32 %v1990, %v2441
          %v2462 = vmul.f32 %v1991, %v2441
          %v2463 = vmul.f32 %v1992, %v2441
          %v2464 = vmul.f32 %v1993, %v2441
          %v2465 = vmul.f32 %v1994, %v2441
          %v2466 = vmul.f32 %v1995, %v2441
          %v2467 = vmul.f32 %v1996, %v2441
          %v2468 = vmul.f32 %v1997, %v2441
          %v2469 = vmul.f32 %v1998, %v2441
          %v2470 = vmul.f32 %v1999, %v2441
          %v2471 = vmul.f32 %v2000, %v2441
          %v2472 = vmul.f32 %v2001, %v2441
          %v2473 = vmul.f32 %v2002, %v2441
          %v2474 = vmul.f32 %v2003, %v2441
          %v2475 = vmul.f32 %v2004, %v2441
          %v2476 = vmul.f32 %v2005, %v2441
          %v2477 = vmul.f32 %v2006, %v2441
          %v2478 = vmul.f32 %v2007, %v2441
          %v2479 = vmul.f32 %v2008, %v2441
          %v2480 = vmul.f32 %v2009, %v2441
          %v2481 = vmul.f32 %v2010, %v2441
          %v2482 = vmul.f32 %v2011, %v2441
          %v2483 = vmul.f32 %v2012, %v2441
          %v2484 = vmul.f32 %v2013, %v2441
          %v2485 = vmul.f32 %v2014, %v2441
          %v2486 = vmul.f32 %v2015, %v2441
          %v2487 = vmul.f32 %v2016, %v2441
          %v2488 = vmul.f32 %v2017, %v2441
          %v2489 = vmul.f32 %v2018, %v2441
          %v2490 = vmul.f32 %v2019, %v2441
          %v2491 = vmul.f32 %v2020, %v2441
          %v2492 = vmul.f32 %v2021, %v2441
          %v2493 = vmul.f32 %v2022, %v2441
          %v2494 = vmul.f32 %v2023, %v2441
          %v2495 = vmul.f32 %v2024, %v2441
          %v2496 = vmul.f32 %v2025, %v2441
          %v2497 = vmul.f32 %v2026, %v2441
          %v2498 = vmul.f32 %v2027, %v2441
          %v2499 = vmul.f32 %v2028, %v2441
          %v2500 = vmul.f32 %v2029, %v2441
          %v2501 = vmul.f32 %v2030, %v2441
          %v2502 = vmul.f32 %v2031, %v2441
          %v2503 = vmul.f32 %v2032, %v2441
          %v2504 = vmul.f32 %v2033, %v2441
          %v2505 = vmul.f32 %v2034, %v2441
          %v2506 = vmul.f32 %v2035, %v2441
          %v2508 = vperm.slane %v2439, 0
          %v2510 = vadd.f32 %v2443, %v2508
          %v2511 = vadd.f32 %v2444, %v2508
          %v2512 = vadd.f32 %v2445, %v2508
          %v2513 = vadd.f32 %v2446, %v2508
          %v2514 = vadd.f32 %v2447, %v2508
          %v2515 = vadd.f32 %v2448, %v2508
          %v2516 = vadd.f32 %v2449, %v2508
          %v2517 = vadd.f32 %v2450, %v2508
          %v2518 = vadd.f32 %v2451, %v2508
          %v2519 = vadd.f32 %v2452, %v2508
          %v2520 = vadd.f32 %v2453, %v2508
          %v2521 = vadd.f32 %v2454, %v2508
          %v2522 = vadd.f32 %v2455, %v2508
          %v2523 = vadd.f32 %v2456, %v2508
          %v2524 = vadd.f32 %v2457, %v2508
          %v2525 = vadd.f32 %v2458, %v2508
          %v2526 = vadd.f32 %v2459, %v2508
          %v2527 = vadd.f32 %v2460, %v2508
          %v2528 = vadd.f32 %v2461, %v2508
          %v2529 = vadd.f32 %v2462, %v2508
          %v2530 = vadd.f32 %v2463, %v2508
          %v2531 = vadd.f32 %v2464, %v2508
          %v2532 = vadd.f32 %v2465, %v2508
          %v2533 = vadd.f32 %v2466, %v2508
          %v2534 = vadd.f32 %v2467, %v2508
          %v2535 = vadd.f32 %v2468, %v2508
          %v2536 = vadd.f32 %v2469, %v2508
          %v2537 = vadd.f32 %v2470, %v2508
          %v2538 = vadd.f32 %v2471, %v2508
          %v2539 = vadd.f32 %v2472, %v2508
          %v2540 = vadd.f32 %v2473, %v2508
          %v2541 = vadd.f32 %v2474, %v2508
          %v2542 = vadd.f32 %v2475, %v2508
          %v2543 = vadd.f32 %v2476, %v2508
          %v2544 = vadd.f32 %v2477, %v2508
          %v2545 = vadd.f32 %v2478, %v2508
          %v2546 = vadd.f32 %v2479, %v2508
          %v2547 = vadd.f32 %v2480, %v2508
          %v2548 = vadd.f32 %v2481, %v2508
          %v2549 = vadd.f32 %v2482, %v2508
          %v2550 = vadd.f32 %v2483, %v2508
          %v2551 = vadd.f32 %v2484, %v2508
          %v2552 = vadd.f32 %v2485, %v2508
          %v2553 = vadd.f32 %v2486, %v2508
          %v2554 = vadd.f32 %v2487, %v2508
          %v2555 = vadd.f32 %v2488, %v2508
          %v2556 = vadd.f32 %v2489, %v2508
          %v2557 = vadd.f32 %v2490, %v2508
          %v2558 = vadd.f32 %v2491, %v2508
          %v2559 = vadd.f32 %v2492, %v2508
          %v2560 = vadd.f32 %v2493, %v2508
          %v2561 = vadd.f32 %v2494, %v2508
          %v2562 = vadd.f32 %v2495, %v2508
          %v2563 = vadd.f32 %v2496, %v2508
          %v2564 = vadd.f32 %v2497, %v2508
          %v2565 = vadd.f32 %v2498, %v2508
          %v2566 = vadd.f32 %v2499, %v2508
          %v2567 = vadd.f32 %v2500, %v2508
          %v2568 = vadd.f32 %v2501, %v2508
          %v2569 = vadd.f32 %v2502, %v2508
          %v2570 = vadd.f32 %v2503, %v2508
          %v2571 = vadd.f32 %v2504, %v2508
          %v2572 = vadd.f32 %v2505, %v2508
          %v2573 = vadd.f32 %v2506, %v2508
          %v2574 = vmax.f32 %v2510, 0.0
          %v2575 = vmax.f32 %v2511, 0.0
          %v2576 = vmax.f32 %v2512, 0.0
          %v2577 = vmax.f32 %v2513, 0.0
          %v2578 = vmax.f32 %v2514, 0.0
          %v2579 = vmax.f32 %v2515, 0.0
          %v2580 = vmax.f32 %v2516, 0.0
          %v2581 = vmax.f32 %v2517, 0.0
          %v2582 = vmax.f32 %v2518, 0.0
          %v2583 = vmax.f32 %v2519, 0.0
          %v2584 = vmax.f32 %v2520, 0.0
          %v2585 = vmax.f32 %v2521, 0.0
          %v2586 = vmax.f32 %v2522, 0.0
          %v2587 = vmax.f32 %v2523, 0.0
          %v2588 = vmax.f32 %v2524, 0.0
          %v2589 = vmax.f32 %v2525, 0.0
          %v2590 = vmax.f32 %v2526, 0.0
          %v2591 = vmax.f32 %v2527, 0.0
          %v2592 = vmax.f32 %v2528, 0.0
          %v2593 = vmax.f32 %v2529, 0.0
          %v2594 = vmax.f32 %v2530, 0.0
          %v2595 = vmax.f32 %v2531, 0.0
          %v2596 = vmax.f32 %v2532, 0.0
          %v2597 = vmax.f32 %v2533, 0.0
          %v2598 = vmax.f32 %v2534, 0.0
          %v2599 = vmax.f32 %v2535, 0.0
          %v2600 = vmax.f32 %v2536, 0.0
          %v2601 = vmax.f32 %v2537, 0.0
          %v2602 = vmax.f32 %v2538, 0.0
          %v2603 = vmax.f32 %v2539, 0.0
          %v2604 = vmax.f32 %v2540, 0.0
          %v2605 = vmax.f32 %v2541, 0.0
          %v2606 = vmax.f32 %v2542, 0.0
          %v2607 = vmax.f32 %v2543, 0.0
          %v2608 = vmax.f32 %v2544, 0.0
          %v2609 = vmax.f32 %v2545, 0.0
          %v2610 = vmax.f32 %v2546, 0.0
          %v2611 = vmax.f32 %v2547, 0.0
          %v2612 = vmax.f32 %v2548, 0.0
          %v2613 = vmax.f32 %v2549, 0.0
          %v2614 = vmax.f32 %v2550, 0.0
          %v2615 = vmax.f32 %v2551, 0.0
          %v2616 = vmax.f32 %v2552, 0.0
          %v2617 = vmax.f32 %v2553, 0.0
          %v2618 = vmax.f32 %v2554, 0.0
          %v2619 = vmax.f32 %v2555, 0.0
          %v2620 = vmax.f32 %v2556, 0.0
          %v2621 = vmax.f32 %v2557, 0.0
          %v2622 = vmax.f32 %v2558, 0.0
          %v2623 = vmax.f32 %v2559, 0.0
          %v2624 = vmax.f32 %v2560, 0.0
          %v2625 = vmax.f32 %v2561, 0.0
          %v2626 = vmax.f32 %v2562, 0.0
          %v2627 = vmax.f32 %v2563, 0.0
          %v2628 = vmax.f32 %v2564, 0.0
          %v2629 = vmax.f32 %v2565, 0.0
          %v2630 = vmax.f32 %v2566, 0.0
          %v2631 = vmax.f32 %v2567, 0.0
          %v2632 = vmax.f32 %v2568, 0.0
          %v2633 = vmax.f32 %v2569, 0.0
          %v2634 = vmax.f32 %v2570, 0.0
          %v2635 = vmax.f32 %v2571, 0.0
          %v2636 = vmax.f32 %v2572, 0.0
          %v2637 = vmax.f32 %v2573, 0.0
          %v2638 = vmax.f32 %v2574, %v2590
          %v2639 = vmax.f32 %v2575, %v2591
          %v2640 = vmax.f32 %v2576, %v2592
          %v2641 = vmax.f32 %v2577, %v2593
          %v2642 = vmax.f32 %v2578, %v2594
          %v2643 = vmax.f32 %v2579, %v2595
          %v2644 = vmax.f32 %v2580, %v2596
          %v2645 = vmax.f32 %v2581, %v2597
          %v2646 = vmax.f32 %v2582, %v2598
          %v2647 = vmax.f32 %v2583, %v2599
          %v2648 = vmax.f32 %v2584, %v2600
          %v2649 = vmax.f32 %v2585, %v2601
          %v2650 = vmax.f32 %v2586, %v2602
          %v2651 = vmax.f32 %v2587, %v2603
          %v2652 = vmax.f32 %v2588, %v2604
          %v2653 = vmax.f32 %v2589, %v2605
          %v2654 = vmax.f32 %v2606, %v2622
          %v2655 = vmax.f32 %v2607, %v2623
          %v2656 = vmax.f32 %v2608, %v2624
          %v2657 = vmax.f32 %v2609, %v2625
          %v2658 = vmax.f32 %v2610, %v2626
          %v2659 = vmax.f32 %v2611, %v2627
          %v2660 = vmax.f32 %v2612, %v2628
          %v2661 = vmax.f32 %v2613, %v2629
          %v2662 = vmax.f32 %v2614, %v2630
          %v2663 = vmax.f32 %v2615, %v2631
          %v2664 = vmax.f32 %v2616, %v2632
          %v2665 = vmax.f32 %v2617, %v2633
          %v2666 = vmax.f32 %v2618, %v2634
          %v2667 = vmax.f32 %v2619, %v2635
          %v2668 = vmax.f32 %v2620, %v2636
          %v2669 = vmax.f32 %v2621, %v2637
          %v2670 = vmax.f32 %v2638, %v2654
          %v2671 = vmax.f32 %v2639, %v2655
          %v2672 = vmax.f32 %v2640, %v2656
          %v2673 = vmax.f32 %v2641, %v2657
          %v2674 = vmax.f32 %v2642, %v2658
          %v2675 = vmax.f32 %v2643, %v2659
          %v2676 = vmax.f32 %v2644, %v2660
          %v2677 = vmax.f32 %v2645, %v2661
          %v2678 = vmax.f32 %v2646, %v2662
          %v2679 = vmax.f32 %v2647, %v2663
          %v2680 = vmax.f32 %v2648, %v2664
          %v2681 = vmax.f32 %v2649, %v2665
          %v2682 = vmax.f32 %v2650, %v2666
          %v2683 = vmax.f32 %v2651, %v2667
          %v2684 = vmax.f32 %v2652, %v2668
          %v2685 = vmax.f32 %v2653, %v2669
          %2686 = vst.msk [vmem:[#allocation3] sm:$0xff] %vm1816, %v2670
          %2687 = vst.msk [vmem:[#allocation3 + $0x28] sm:$0xff] %vm1816, %v2671
          %2688 = vst.msk [vmem:[#allocation3 + $0x50] sm:$0xff] %vm1816, %v2672
          %2689 = vst.msk [vmem:[#allocation3 + $0x78] sm:$0xff] %vm1816, %v2673
          %2690 = vst.msk [vmem:[#allocation3 + $0xa0] sm:$0xff] %vm1816, %v2674
          %2691 = vst.msk [vmem:[#allocation3 + $0xc8] sm:$0xff] %vm1816, %v2675
          %2692 = vst.msk [vmem:[#allocation3 + $0xf0] sm:$0xff] %vm1816, %v2676
          %2693 = vst.msk [vmem:[#allocation3 + $0x118] sm:$0xff] %vm1816, %v2677
          %2694 = vst.msk [vmem:[#allocation3 + $0x140] sm:$0xff] %vm1816, %v2678
          %2695 = vst.msk [vmem:[#allocation3 + $0x168] sm:$0xff] %vm1816, %v2679
          %2696 = vst.msk [vmem:[#allocation3 + $0x190] sm:$0xff] %vm1816, %v2680
          %vm2697 = vcmask 519168
          %2698 = vst.msk [vmem:[#allocation3 + $0x1b8] sm:$0xf] %vm2697, %v2681
          %vm2711 = vcmask 1045504
          %v2712 = vrot.slane %v2670, 2
          %v2713 = vrot.slane %v2671, 2
          %v2714 = vsel %vm2711, %v2712, %v2713
          %v2715 = vrot.slane %v2672, 2
          %v2716 = vsel %vm2711, %v2713, %v2715
          %v2717 = vrot.slane %v2673, 2
          %v2718 = vsel %vm2711, %v2715, %v2717
          %v2719 = vrot.slane %v2674, 2
          %v2720 = vsel %vm2711, %v2717, %v2719
          %v2721 = vrot.slane %v2675, 2
          %v2722 = vsel %vm2711, %v2719, %v2721
          %v2723 = vrot.slane %v2676, 2
          %v2724 = vsel %vm2711, %v2721, %v2723
          %v2725 = vrot.slane %v2677, 2
          %v2726 = vsel %vm2711, %v2723, %v2725
          %v2727 = vrot.slane %v2678, 2
          %v2728 = vsel %vm2711, %v2725, %v2727
          %v2729 = vrot.slane %v2679, 2
          %v2730 = vsel %vm2711, %v2727, %v2729
          %v2731 = vrot.slane %v2680, 2
          %v2732 = vsel %vm2711, %v2729, %v2731
          %v2733 = vrot.slane %v2681, 2
          %v2734 = vsel %vm2711, %v2731, %v2733
          %2735 = vrot.lane.b32.xlu0 %v2714, 64
          %v2736 = vpop.permute.xlu0 %2735
          %2737 = vrot.lane.b32.xlu0 %v2716, 64
          %v2738 = vpop.permute.xlu0 %2737
          %2739 = vrot.lane.b32.xlu0 %v2718, 64
          %v2740 = vpop.permute.xlu0 %2739
          %2741 = vrot.lane.b32.xlu0 %v2720, 64
          %v2742 = vpop.permute.xlu0 %2741
          %2743 = vrot.lane.b32.xlu0 %v2722, 64
          %v2744 = vpop.permute.xlu0 %2743
          %2745 = vrot.lane.b32.xlu0 %v2724, 64
          %v2746 = vpop.permute.xlu0 %2745
          %2747 = vrot.lane.b32.xlu0 %v2726, 64
          %v2748 = vpop.permute.xlu0 %2747
          %2749 = vrot.lane.b32.xlu0 %v2728, 64
          %v2750 = vpop.permute.xlu0 %2749
          %2751 = vrot.lane.b32.xlu0 %v2730, 64
          %v2752 = vpop.permute.xlu0 %2751
          %2753 = vrot.lane.b32.xlu0 %v2732, 64
          %v2754 = vpop.permute.xlu0 %2753
          %2755 = vrot.lane.b32.xlu0 %v2734, 64
          %v2756 = vpop.permute.xlu0 %2755
          %2757 = vrot.lane.b32.xlu0 %v2733, 64
          %v2758 = vpop.permute.xlu0 %2757
          %vm2771 = vcmask 1048064
          %2772 = vst.msk [vmem:[#allocation3] sm:$0xff] %vm2771, %v2736
          %2773 = vst.msk [vmem:[#allocation3 + $0x28] sm:$0xff] %vm2771, %v2738
          %2774 = vst.msk [vmem:[#allocation3 + $0x50] sm:$0xff] %vm2771, %v2740
          %2775 = vst.msk [vmem:[#allocation3 + $0x78] sm:$0xff] %vm2771, %v2742
          %2776 = vst.msk [vmem:[#allocation3 + $0xa0] sm:$0xff] %vm2771, %v2744
          %2777 = vst.msk [vmem:[#allocation3 + $0xc8] sm:$0xff] %vm2771, %v2746
          %2778 = vst.msk [vmem:[#allocation3 + $0xf0] sm:$0xff] %vm2771, %v2748
          %2779 = vst.msk [vmem:[#allocation3 + $0x118] sm:$0xff] %vm2771, %v2750
          %2780 = vst.msk [vmem:[#allocation3 + $0x140] sm:$0xff] %vm2771, %v2752
          %2781 = vst.msk [vmem:[#allocation3 + $0x168] sm:$0xff] %vm2771, %v2754
          %2782 = vst.msk [vmem:[#allocation3 + $0x190] sm:$0xff] %vm2771, %v2756
          %vm2783 = vcmask 1043968
          %2784 = vst.msk [vmem:[#allocation3 + $0x1b8] sm:$0xf] %vm2783, %v2758
          %vm2785 = vcmask 1043456
          %v2786 = vrot.slane %v2670, 4
          %v2787 = vrot.slane %v2671, 4
          %v2788 = vsel %vm2785, %v2786, %v2787
          %v2789 = vrot.slane %v2672, 4
          %v2790 = vsel %vm2785, %v2787, %v2789
          %v2791 = vrot.slane %v2673, 4
          %v2792 = vsel %vm2785, %v2789, %v2791
          %v2793 = vrot.slane %v2674, 4
          %v2794 = vsel %vm2785, %v2791, %v2793
          %v2795 = vrot.slane %v2675, 4
          %v2796 = vsel %vm2785, %v2793, %v2795
          %v2797 = vrot.slane %v2676, 4
          %v2798 = vsel %vm2785, %v2795, %v2797
          %v2799 = vrot.slane %v2677, 4
          %v2800 = vsel %vm2785, %v2797, %v2799
          %v2801 = vrot.slane %v2678, 4
          %v2802 = vsel %vm2785, %v2799, %v2801
          %v2803 = vrot.slane %v2679, 4
          %v2804 = vsel %vm2785, %v2801, %v2803
          %v2805 = vrot.slane %v2680, 4
          %v2806 = vsel %vm2785, %v2803, %v2805
          %v2807 = vrot.slane %v2681, 4
          %v2808 = vsel %vm2785, %v2805, %v2807
          %2821 = vst.msk [vmem:[#allocation3 + $0x8] sm:$0xff] %vm1816, %v2788
          %2822 = vst.msk [vmem:[#allocation3 + $0x30] sm:$0xff] %vm1816, %v2790
          %2823 = vst.msk [vmem:[#allocation3 + $0x58] sm:$0xff] %vm1816, %v2792
          %2824 = vst.msk [vmem:[#allocation3 + $0x80] sm:$0xff] %vm1816, %v2794
          %2825 = vst.msk [vmem:[#allocation3 + $0xa8] sm:$0xff] %vm1816, %v2796
          %2826 = vst.msk [vmem:[#allocation3 + $0xd0] sm:$0xff] %vm1816, %v2798
          %2827 = vst.msk [vmem:[#allocation3 + $0xf8] sm:$0xff] %vm1816, %v2800
          %2828 = vst.msk [vmem:[#allocation3 + $0x120] sm:$0xff] %vm1816, %v2802
          %2829 = vst.msk [vmem:[#allocation3 + $0x148] sm:$0xff] %vm1816, %v2804
          %2830 = vst.msk [vmem:[#allocation3 + $0x170] sm:$0xff] %vm1816, %v2806
          %2831 = vst.msk [vmem:[#allocation3 + $0x198] sm:$0xff] %vm1816, %v2808
          %2832 = vst.msk [vmem:[#allocation3 + $0x1c0] sm:$0xf] %vm2697, %v2807
          %2835 = vrot.lane.b32.xlu0 %v2672, 64
          %v2836 = vpop.permute.xlu0 %2835
          %2837 = vrot.lane.b32.xlu0 %v2673, 64
          %v2838 = vpop.permute.xlu0 %2837
          %2839 = vrot.lane.b32.xlu0 %v2674, 64
          %v2840 = vpop.permute.xlu0 %2839
          %2841 = vrot.lane.b32.xlu0 %v2675, 64
          %v2842 = vpop.permute.xlu0 %2841
          %2843 = vrot.lane.b32.xlu0 %v2676, 64
          %v2844 = vpop.permute.xlu0 %2843
          %2845 = vrot.lane.b32.xlu0 %v2677, 64
          %v2846 = vpop.permute.xlu0 %2845
          %2847 = vrot.lane.b32.xlu0 %v2678, 64
          %v2848 = vpop.permute.xlu0 %2847
          %2849 = vrot.lane.b32.xlu0 %v2679, 64
          %v2850 = vpop.permute.xlu0 %2849
          %2851 = vrot.lane.b32.xlu0 %v2680, 64
          %v2852 = vpop.permute.xlu0 %2851
          %2853 = vrot.lane.b32.xlu0 %v2681, 64
          %v2854 = vpop.permute.xlu0 %2853
          %2855 = vrot.lane.b32.xlu0 %v2682, 64
          %v2856 = vpop.permute.xlu0 %2855
          %2857 = vrot.lane.b32.xlu0 %v2683, 64
          %v2858 = vpop.permute.xlu0 %2857
          %2871 = vst.msk [vmem:[#allocation3 + $0x8] sm:$0xff] %vm2771, %v2836
          %2872 = vst.msk [vmem:[#allocation3 + $0x30] sm:$0xff] %vm2771, %v2838
          %2873 = vst.msk [vmem:[#allocation3 + $0x58] sm:$0xff] %vm2771, %v2840
          %2874 = vst.msk [vmem:[#allocation3 + $0x80] sm:$0xff] %vm2771, %v2842
          %2875 = vst.msk [vmem:[#allocation3 + $0xa8] sm:$0xff] %vm2771, %v2844
          %2876 = vst.msk [vmem:[#allocation3 + $0xd0] sm:$0xff] %vm2771, %v2846
          %2877 = vst.msk [vmem:[#allocation3 + $0xf8] sm:$0xff] %vm2771, %v2848
          %2878 = vst.msk [vmem:[#allocation3 + $0x120] sm:$0xff] %vm2771, %v2850
          %2879 = vst.msk [vmem:[#allocation3 + $0x148] sm:$0xff] %vm2771, %v2852
          %2880 = vst.msk [vmem:[#allocation3 + $0x170] sm:$0xff] %vm2771, %v2854
          %2881 = vst.msk [vmem:[#allocation3 + $0x198] sm:$0xff] %vm2771, %v2856
          %2882 = vst.msk [vmem:[#allocation3 + $0x1c0] sm:$0xf] %vm2783, %v2858
          %v2883 = vrot.slane %v2682, 2
          %v2884 = vsel %vm2711, %v2733, %v2883
          %v2885 = vrot.slane %v2683, 2
          %v2886 = vsel %vm2711, %v2883, %v2885
          %2899 = vst.msk [vmem:[#allocation3 + $0x10] sm:$0xff] %vm1816, %v2718
          %2900 = vst.msk [vmem:[#allocation3 + $0x38] sm:$0xff] %vm1816, %v2720
          %2901 = vst.msk [vmem:[#allocation3 + $0x60] sm:$0xff] %vm1816, %v2722
          %2902 = vst.msk [vmem:[#allocation3 + $0x88] sm:$0xff] %vm1816, %v2724
          %2903 = vst.msk [vmem:[#allocation3 + $0xb0] sm:$0xff] %vm1816, %v2726
          %2904 = vst.msk [vmem:[#allocation3 + $0xd8] sm:$0xff] %vm1816, %v2728
          %2905 = vst.msk [vmem:[#allocation3 + $0x100] sm:$0xff] %vm1816, %v2730
          %2906 = vst.msk [vmem:[#allocation3 + $0x128] sm:$0xff] %vm1816, %v2732
          %2907 = vst.msk [vmem:[#allocation3 + $0x150] sm:$0xff] %vm1816, %v2734
          %2908 = vst.msk [vmem:[#allocation3 + $0x178] sm:$0xff] %vm1816, %v2884
          %2909 = vst.msk [vmem:[#allocation3 + $0x1a0] sm:$0xff] %vm1816, %v2886
          %2910 = vst.msk [vmem:[#allocation3 + $0x1c8] sm:$0xf] %vm2697, %v2885
          %v2911 = vrot.slane %v2682, 4
          %v2912 = vsel %vm2785, %v2807, %v2911
          %v2913 = vrot.slane %v2683, 4
          %v2914 = vsel %vm2785, %v2911, %v2913
          %2915 = vrot.lane.b32.xlu0 %v2792, 64
          %v2916 = vpop.permute.xlu0 %2915
          %2917 = vrot.lane.b32.xlu0 %v2794, 64
          %v2918 = vpop.permute.xlu0 %2917
          %2919 = vrot.lane.b32.xlu0 %v2796, 64
          %v2920 = vpop.permute.xlu0 %2919
          %2921 = vrot.lane.b32.xlu0 %v2798, 64
          %v2922 = vpop.permute.xlu0 %2921
          %2923 = vrot.lane.b32.xlu0 %v2800, 64
          %v2924 = vpop.permute.xlu0 %2923
          %2925 = vrot.lane.b32.xlu0 %v2802, 64
          %v2926 = vpop.permute.xlu0 %2925
          %2927 = vrot.lane.b32.xlu0 %v2804, 64
          %v2928 = vpop.permute.xlu0 %2927
          %2929 = vrot.lane.b32.xlu0 %v2806, 64
          %v2930 = vpop.permute.xlu0 %2929
          %2931 = vrot.lane.b32.xlu0 %v2808, 64
          %v2932 = vpop.permute.xlu0 %2931
          %2933 = vrot.lane.b32.xlu0 %v2912, 64
          %v2934 = vpop.permute.xlu0 %2933
          %2935 = vrot.lane.b32.xlu0 %v2914, 64
          %v2936 = vpop.permute.xlu0 %2935
          %2937 = vrot.lane.b32.xlu0 %v2913, 64
          %v2938 = vpop.permute.xlu0 %2937
          %2951 = vst.msk [vmem:[#allocation3 + $0x10] sm:$0xff] %vm2771, %v2916
          %2952 = vst.msk [vmem:[#allocation3 + $0x38] sm:$0xff] %vm2771, %v2918
          %2953 = vst.msk [vmem:[#allocation3 + $0x60] sm:$0xff] %vm2771, %v2920
          %2954 = vst.msk [vmem:[#allocation3 + $0x88] sm:$0xff] %vm2771, %v2922
          %2955 = vst.msk [vmem:[#allocation3 + $0xb0] sm:$0xff] %vm2771, %v2924
          %2956 = vst.msk [vmem:[#allocation3 + $0xd8] sm:$0xff] %vm2771, %v2926
          %2957 = vst.msk [vmem:[#allocation3 + $0x100] sm:$0xff] %vm2771, %v2928
          %2958 = vst.msk [vmem:[#allocation3 + $0x128] sm:$0xff] %vm2771, %v2930
          %2959 = vst.msk [vmem:[#allocation3 + $0x150] sm:$0xff] %vm2771, %v2932
          %2960 = vst.msk [vmem:[#allocation3 + $0x178] sm:$0xff] %vm2771, %v2934
          %2961 = vst.msk [vmem:[#allocation3 + $0x1a0] sm:$0xff] %vm2771, %v2936
          %2962 = vst.msk [vmem:[#allocation3 + $0x1c8] sm:$0xf] %vm2783, %v2938
          %2963 = vst.msk [vmem:[#allocation3 + $0x18] sm:$0xff] %vm1816, %v2674
          %2964 = vst.msk [vmem:[#allocation3 + $0x40] sm:$0xff] %vm1816, %v2675
          %2965 = vst.msk [vmem:[#allocation3 + $0x68] sm:$0xff] %vm1816, %v2676
          %2966 = vst.msk [vmem:[#allocation3 + $0x90] sm:$0xff] %vm1816, %v2677
          %2967 = vst.msk [vmem:[#allocation3 + $0xb8] sm:$0xff] %vm1816, %v2678
          %2968 = vst.msk [vmem:[#allocation3 + $0xe0] sm:$0xff] %vm1816, %v2679
          %2969 = vst.msk [vmem:[#allocation3 + $0x108] sm:$0xff] %vm1816, %v2680
          %2970 = vst.msk [vmem:[#allocation3 + $0x130] sm:$0xff] %vm1816, %v2681
          %2971 = vst.msk [vmem:[#allocation3 + $0x158] sm:$0xff] %vm1816, %v2682
          %2972 = vst.msk [vmem:[#allocation3 + $0x180] sm:$0xff] %vm1816, %v2683
          %2973 = vst.msk [vmem:[#allocation3 + $0x1a8] sm:$0xff] %vm1816, %v2684
          %2974 = vst.msk [vmem:[#allocation3 + $0x1d0] sm:$0xf] %vm2697, %v2685
          %v2977 = vrot.slane %v2684, 2
          %v2978 = vsel %vm2711, %v2885, %v2977
          %v2979 = vrot.slane %v2685, 2
          %v2980 = vsel %vm2711, %v2977, %v2979
          %2981 = vrot.lane.b32.xlu0 %v2884, 64
          %v2982 = vpop.permute.xlu0 %2981
          %2983 = vrot.lane.b32.xlu0 %v2886, 64
          %v2984 = vpop.permute.xlu0 %2983
          %2985 = vrot.lane.b32.xlu0 %v2978, 64
          %v2986 = vpop.permute.xlu0 %2985
          %2987 = vrot.lane.b32.xlu0 %v2980, 64
          %v2988 = vpop.permute.xlu0 %2987
          %2989 = vrot.lane.b32.xlu0 %v2979, 64
          %v2990 = vpop.permute.xlu0 %2989
          %2996 = vst.msk [vmem:[#allocation3 + $0x18] sm:$0xff] %vm2771, %v2744
          %2997 = vst.msk [vmem:[#allocation3 + $0x40] sm:$0xff] %vm2771, %v2746
          %2998 = vst.msk [vmem:[#allocation3 + $0x68] sm:$0xff] %vm2771, %v2748
          %2999 = vst.msk [vmem:[#allocation3 + $0x90] sm:$0xff] %vm2771, %v2750
          %3000 = vst.msk [vmem:[#allocation3 + $0xb8] sm:$0xff] %vm2771, %v2752
          %3001 = vst.msk [vmem:[#allocation3 + $0xe0] sm:$0xff] %vm2771, %v2754
          %3002 = vst.msk [vmem:[#allocation3 + $0x108] sm:$0xff] %vm2771, %v2756
          %3003 = vst.msk [vmem:[#allocation3 + $0x130] sm:$0xff] %vm2771, %v2982
          %3004 = vst.msk [vmem:[#allocation3 + $0x158] sm:$0xff] %vm2771, %v2984
          %3005 = vst.msk [vmem:[#allocation3 + $0x180] sm:$0xff] %vm2771, %v2986
          %3006 = vst.msk [vmem:[#allocation3 + $0x1a8] sm:$0xff] %vm2771, %v2988
          %3007 = vst.msk [vmem:[#allocation3 + $0x1d0] sm:$0xf] %vm2783, %v2990
          %v3008 = vrot.slane %v2684, 4
          %v3009 = vsel %vm2785, %v2913, %v3008
          %v3010 = vrot.slane %v2685, 4
          %v3011 = vsel %vm2785, %v3008, %v3010
          %3017 = vst.msk [vmem:[#allocation3 + $0x20] sm:$0xff] %vm1816, %v2796
          %3018 = vst.msk [vmem:[#allocation3 + $0x48] sm:$0xff] %vm1816, %v2798
          %3019 = vst.msk [vmem:[#allocation3 + $0x70] sm:$0xff] %vm1816, %v2800
          %3020 = vst.msk [vmem:[#allocation3 + $0x98] sm:$0xff] %vm1816, %v2802
          %3021 = vst.msk [vmem:[#allocation3 + $0xc0] sm:$0xff] %vm1816, %v2804
          %3022 = vst.msk [vmem:[#allocation3 + $0xe8] sm:$0xff] %vm1816, %v2806
          %3023 = vst.msk [vmem:[#allocation3 + $0x110] sm:$0xff] %vm1816, %v2808
          %3024 = vst.msk [vmem:[#allocation3 + $0x138] sm:$0xff] %vm1816, %v2912
          %3025 = vst.msk [vmem:[#allocation3 + $0x160] sm:$0xff] %vm1816, %v2914
          %3026 = vst.msk [vmem:[#allocation3 + $0x188] sm:$0xff] %vm1816, %v3009
          %3027 = vst.msk [vmem:[#allocation3 + $0x1b0] sm:$0xff] %vm1816, %v3011
          %3028 = vst.msk [vmem:[#allocation3 + $0x1d8] sm:$0xf] %vm2697, %v3010
          %v3029 = vld [vmem:[#allocation3] sm:$0xff]
          %v3030 = vld [vmem:[#allocation3 + $0x8] sm:$0xff]
          %v3031 = vld [vmem:[#allocation3 + $0x10] sm:$0xff]
          %v3032 = vld [vmem:[#allocation3 + $0x18] sm:$0xff]
          %v3033 = vld [vmem:[#allocation3 + $0x20] sm:$0xff]
          %v3034 = vld [vmem:[#allocation3 + $0x28] sm:$0xff]
          %v3035 = vld [vmem:[#allocation3 + $0x30] sm:$0xff]
          %v3036 = vld [vmem:[#allocation3 + $0x38] sm:$0xff]
          %v3037 = vld [vmem:[#allocation3 + $0x40] sm:$0xff]
          %v3038 = vld [vmem:[#allocation3 + $0x48] sm:$0xff]
          %v3039 = vld [vmem:[#allocation3 + $0x50] sm:$0xff]
          %v3040 = vld [vmem:[#allocation3 + $0x58] sm:$0xff]
          %v3041 = vld [vmem:[#allocation3 + $0x60] sm:$0xff]
          %v3042 = vld [vmem:[#allocation3 + $0x68] sm:$0xff]
          %v3043 = vld [vmem:[#allocation3 + $0x70] sm:$0xff]
          %v3044 = vld [vmem:[#allocation3 + $0x78] sm:$0xff]
          %v3045 = vld [vmem:[#allocation3 + $0x80] sm:$0xff]
          %v3046 = vld [vmem:[#allocation3 + $0x88] sm:$0xff]
          %v3047 = vld [vmem:[#allocation3 + $0x90] sm:$0xff]
          %v3048 = vld [vmem:[#allocation3 + $0x98] sm:$0xff]
          %v3049 = vld [vmem:[#allocation3 + $0xa0] sm:$0xff]
          %v3050 = vld [vmem:[#allocation3 + $0xa8] sm:$0xff]
          %v3051 = vld [vmem:[#allocation3 + $0xb0] sm:$0xff]
          %v3052 = vld [vmem:[#allocation3 + $0xb8] sm:$0xff]
          %v3053 = vld [vmem:[#allocation3 + $0xc0] sm:$0xff]
          %v3054 = vld [vmem:[#allocation3 + $0xc8] sm:$0xff]
          %v3055 = vld [vmem:[#allocation3 + $0xd0] sm:$0xff]
          %v3056 = vld [vmem:[#allocation3 + $0xd8] sm:$0xff]
          %v3057 = vld [vmem:[#allocation3 + $0xe0] sm:$0xff]
          %v3058 = vld [vmem:[#allocation3 + $0xe8] sm:$0xff]
          %v3059 = vld [vmem:[#allocation3 + $0xf0] sm:$0xff]
          %v3060 = vld [vmem:[#allocation3 + $0xf8] sm:$0xff]
          %v3061 = vld [vmem:[#allocation3 + $0x100] sm:$0xff]
          %v3062 = vld [vmem:[#allocation3 + $0x108] sm:$0xff]
          %v3063 = vld [vmem:[#allocation3 + $0x110] sm:$0xff]
          %v3064 = vld [vmem:[#allocation3 + $0x118] sm:$0xff]
          %v3065 = vld [vmem:[#allocation3 + $0x120] sm:$0xff]
          %v3066 = vld [vmem:[#allocation3 + $0x128] sm:$0xff]
          %v3067 = vld [vmem:[#allocation3 + $0x130] sm:$0xff]
          %v3068 = vld [vmem:[#allocation3 + $0x138] sm:$0xff]
          %v3069 = vld [vmem:[#allocation3 + $0x140] sm:$0xff]
          %v3070 = vld [vmem:[#allocation3 + $0x148] sm:$0xff]
          %v3071 = vld [vmem:[#allocation3 + $0x150] sm:$0xff]
          %v3072 = vld [vmem:[#allocation3 + $0x158] sm:$0xff]
          %v3073 = vld [vmem:[#allocation3 + $0x160] sm:$0xff]
          %v3074 = vld [vmem:[#allocation3 + $0x168] sm:$0xff]
          %v3075 = vld [vmem:[#allocation3 + $0x170] sm:$0xff]
          %v3076 = vld [vmem:[#allocation3 + $0x178] sm:$0xff]
          %v3077 = vld [vmem:[#allocation3 + $0x180] sm:$0xff]
          %v3078 = vld [vmem:[#allocation3 + $0x188] sm:$0xff]
          %v3079 = vld [vmem:[#allocation3 + $0x190] sm:$0xff]
          %v3080 = vld [vmem:[#allocation3 + $0x198] sm:$0xff]
          %v3081 = vld [vmem:[#allocation3 + $0x1a0] sm:$0xff]
          %v3082 = vld [vmem:[#allocation3 + $0x1a8] sm:$0xff]
          %v3083 = vld [vmem:[#allocation3 + $0x1b0] sm:$0xff]
          %v3084 = vld [vmem:[#allocation3 + $0x1b8] sm:$0xf]
          %v3085 = vld [vmem:[#allocation3 + $0x1c0] sm:$0xf]
          %v3086 = vld [vmem:[#allocation3 + $0x1c8] sm:$0xf]
          %v3087 = vld [vmem:[#allocation3 + $0x1d0] sm:$0xf]
          %v3088 = vld [vmem:[#allocation3 + $0x1d8] sm:$0xf]
          %v3089 = vld [vmem:[%s5] sm:$0xff]
          %v3090 = vld [vmem:[%s5 + $0x8] sm:$0xff]
          %v3091 = vld [vmem:[%s5 + $0x10] sm:$0xff]
          %v3092 = vld [vmem:[%s5 + $0x18] sm:$0xff]
          %v3093 = vld [vmem:[%s5 + $0x20] sm:$0xff]
          %v3094 = vld [vmem:[%s5 + $0x28] sm:$0xff]
          %v3095 = vld [vmem:[%s5 + $0x30] sm:$0xff]
          %v3096 = vld [vmem:[%s5 + $0x38] sm:$0xff]
          %v3097 = vld [vmem:[%s5 + $0x40] sm:$0xff]
          %v3098 = vld [vmem:[%s5 + $0x48] sm:$0xff]
          %v3099 = vld [vmem:[%s5 + $0x50] sm:$0xff]
          %v3100 = vld [vmem:[%s5 + $0x58] sm:$0xff]
          %v3101 = vld [vmem:[%s5 + $0x60] sm:$0xff]
          %v3102 = vld [vmem:[%s5 + $0x68] sm:$0xff]
          %v3103 = vld [vmem:[%s5 + $0x70] sm:$0xff]
          %v3104 = vld [vmem:[%s5 + $0x78] sm:$0xff]
          %v3105 = vld [vmem:[%s5 + $0x80] sm:$0xff]
          %v3106 = vld [vmem:[%s5 + $0x88] sm:$0xff]
          %v3107 = vld [vmem:[%s5 + $0x90] sm:$0xff]
          %v3108 = vld [vmem:[%s5 + $0x98] sm:$0xff]
          %v3109 = vld [vmem:[%s5 + $0xa0] sm:$0xff]
          %v3110 = vld [vmem:[%s5 + $0xa8] sm:$0xff]
          %v3111 = vld [vmem:[%s5 + $0xb0] sm:$0xff]
          %v3112 = vld [vmem:[%s5 + $0xb8] sm:$0xff]
          %v3113 = vld [vmem:[%s5 + $0xc0] sm:$0xff]
          %v3114 = vld [vmem:[%s5 + $0xc8] sm:$0xff]
          %v3115 = vld [vmem:[%s5 + $0xd0] sm:$0xff]
          %v3116 = vld [vmem:[%s5 + $0xd8] sm:$0xff]
          %v3117 = vld [vmem:[%s5 + $0xe0] sm:$0xff]
          %v3118 = vld [vmem:[%s5 + $0xe8] sm:$0xff]
          %v3119 = vld [vmem:[%s5 + $0xf0] sm:$0xff]
          %v3120 = vld [vmem:[%s5 + $0xf8] sm:$0xff]
          %v3121 = vld [vmem:[%s5 + $0x100] sm:$0xff]
          %v3122 = vld [vmem:[%s5 + $0x108] sm:$0xff]
          %v3123 = vld [vmem:[%s5 + $0x110] sm:$0xff]
          %v3124 = vld [vmem:[%s5 + $0x118] sm:$0xff]
          %v3125 = vld [vmem:[%s5 + $0x120] sm:$0xff]
          %v3126 = vld [vmem:[%s5 + $0x128] sm:$0xff]
          %v3127 = vld [vmem:[%s5 + $0x130] sm:$0xff]
          %v3128 = vld [vmem:[%s5 + $0x138] sm:$0xff]
          %v3129 = vld [vmem:[%s5 + $0x140] sm:$0xff]
          %v3130 = vld [vmem:[%s5 + $0x148] sm:$0xff]
          %v3131 = vld [vmem:[%s5 + $0x150] sm:$0xff]
          %v3132 = vld [vmem:[%s5 + $0x158] sm:$0xff]
          %v3133 = vld [vmem:[%s5 + $0x160] sm:$0xff]
          %v3134 = vld [vmem:[%s5 + $0x168] sm:$0xff]
          %v3135 = vld [vmem:[%s5 + $0x170] sm:$0xff]
          %v3136 = vld [vmem:[%s5 + $0x178] sm:$0xff]
          %v3137 = vld [vmem:[%s5 + $0x180] sm:$0xff]
          %v3138 = vld [vmem:[%s5 + $0x188] sm:$0xff]
          %v3139 = vld [vmem:[%s5 + $0x190] sm:$0xff]
          %v3140 = vld [vmem:[%s5 + $0x198] sm:$0xff]
          %v3141 = vld [vmem:[%s5 + $0x1a0] sm:$0xff]
          %v3142 = vld [vmem:[%s5 + $0x1a8] sm:$0xff]
          %v3143 = vld [vmem:[%s5 + $0x1b0] sm:$0xff]
          %v3144 = vld [vmem:[%s5 + $0x1b8] sm:$0xff]
          %v3145 = vld [vmem:[%s5 + $0x1c0] sm:$0xff]
          %v3146 = vld [vmem:[%s5 + $0x1c8] sm:$0xff]
          %v3147 = vld [vmem:[%s5 + $0x1d0] sm:$0xff]
          %v3148 = vld [vmem:[%s5 + $0x1d8] sm:$0xff]
          %v3149 = vld [vmem:[%s5 + $0x1e0] sm:$0xff]
          %v3150 = vld [vmem:[%s5 + $0x1e8] sm:$0xff]
          %v3151 = vld [vmem:[%s5 + $0x1f0] sm:$0xff]
          %v3152 = vld [vmem:[%s5 + $0x1f8] sm:$0xff]
          %v3153 = vld [vmem:[%s5 + $0x200] sm:$0xff]
          %v3154 = vld [vmem:[%s5 + $0x208] sm:$0xff]
          %v3155 = vld [vmem:[%s5 + $0x210] sm:$0xff]
          %v3156 = vld [vmem:[%s5 + $0x218] sm:$0xff]
          %v3157 = vld [vmem:[%s5 + $0x220] sm:$0xff]
          %v3158 = vld [vmem:[%s5 + $0x228] sm:$0xff]
          %v3159 = vld [vmem:[%s5 + $0x230] sm:$0xff]
          %v3160 = vld [vmem:[%s5 + $0x238] sm:$0xff]
          %v3161 = vld [vmem:[#allocation13] sm:$0x1]
          %v3163 = vperm.slane %v3161, 0
          %v3166 = vsel %vm1816, %v3033, 0
          %v3169 = vsel %vm1816, %v3038, 0
          %v3172 = vsel %vm1816, %v3043, 0
          %v3175 = vsel %vm1816, %v3048, 0
          %v3178 = vsel %vm1816, %v3053, 0
          %v3181 = vsel %vm1816, %v3058, 0
          %v3184 = vsel %vm1816, %v3063, 0
          %v3187 = vsel %vm1816, %v3068, 0
          %v3190 = vsel %vm1816, %v3073, 0
          %v3193 = vsel %vm1816, %v3078, 0
          %v3196 = vsel %vm1816, %v3083, 0
          %v3199 = vsel %vm1816, %v3088, 0
          %3201 = vmatpush.msra.mxu0 %v3104
          %3202 = vmatpush.msra.mxu0 %v3103
          %3203 = vmatpush.msra.mxu0 %v3102
          %3204 = vmatpush.msra.mxu0 %v3101
          %3205 = vmatpush.msra.mxu0 %v3100
          %3206 = vmatpush.msra.mxu0 %v3099
          %3207 = vmatpush.msra.mxu0 %v3098
          %3208 = vmatpush.msra.mxu0 %v3097
          %3209 = vmatpush.msra.mxu0 %v3096
          %3210 = vmatpush.msra.mxu0 %v3095
          %3211 = vmatpush.msra.mxu0 %v3094
          %3212 = vmatpush.msra.mxu0 %v3093
          %3213 = vmatpush.msra.mxu0 %v3092
          %3214 = vmatpush.msra.mxu0 %v3091
          %3215 = vmatpush.msra.mxu0 %v3090
          %3216 = vmatpush.msra.mxu0 %v3089
          %3217 = vmatmul.f32.gmra.mxu0 %v3029
          %v3218 = vpop.f32.mrf.mxu0
          %v3219 = vadd.f32 %v3163, %v3218
          %3220 = vmatmul.f32.gmra.mxu0 %v3034
          %v3221 = vpop.f32.mrf.mxu0
          %v3222 = vadd.f32 %v3163, %v3221
          %3223 = vmatmul.f32.gmra.mxu0 %v3039
          %v3224 = vpop.f32.mrf.mxu0
          %v3225 = vadd.f32 %v3163, %v3224
          %3226 = vmatmul.f32.gmra.mxu0 %v3044
          %v3227 = vpop.f32.mrf.mxu0
          %v3228 = vadd.f32 %v3163, %v3227
          %3229 = vmatmul.f32.gmra.mxu0 %v3049
          %v3230 = vpop.f32.mrf.mxu0
          %v3231 = vadd.f32 %v3163, %v3230
          %3232 = vmatmul.f32.gmra.mxu0 %v3054
          %v3233 = vpop.f32.mrf.mxu0
          %v3234 = vadd.f32 %v3163, %v3233
          %3235 = vmatmul.f32.gmra.mxu0 %v3059
          %v3236 = vpop.f32.mrf.mxu0
          %v3237 = vadd.f32 %v3163, %v3236
          %3238 = vmatmul.f32.gmra.mxu0 %v3064
          %v3239 = vpop.f32.mrf.mxu0
          %v3240 = vadd.f32 %v3163, %v3239
          %3241 = vmatmul.f32.gmra.mxu0 %v3069
          %v3242 = vpop.f32.mrf.mxu0
          %v3243 = vadd.f32 %v3163, %v3242
          %3244 = vmatmul.f32.gmra.mxu0 %v3074
          %v3245 = vpop.f32.mrf.mxu0
          %v3246 = vadd.f32 %v3163, %v3245
          %3247 = vmatmul.f32.gmra.mxu0 %v3079
          %v3248 = vpop.f32.mrf.mxu0
          %v3249 = vadd.f32 %v3163, %v3248
          %3250 = vmatmul.f32.gmra.mxu0 %v3084
          %v3251 = vpop.f32.mrf.mxu0
          %v3252 = vadd.f32 %v3163, %v3251
          %3253 = vdwg.mxu0
          %3254 = vmatpush.msra.mxu0 %v3120
          %3255 = vmatpush.msra.mxu0 %v3119
          %3256 = vmatpush.msra.mxu0 %v3118
          %3257 = vmatpush.msra.mxu0 %v3117
          %3258 = vmatpush.msra.mxu0 %v3116
          %3259 = vmatpush.msra.mxu0 %v3115
          %3260 = vmatpush.msra.mxu0 %v3114
          %3261 = vmatpush.msra.mxu0 %v3113
          %3262 = vmatpush.msra.mxu0 %v3112
          %3263 = vmatpush.msra.mxu0 %v3111
          %3264 = vmatpush.msra.mxu0 %v3110
          %3265 = vmatpush.msra.mxu0 %v3109
          %3266 = vmatpush.msra.mxu0 %v3108
          %3267 = vmatpush.msra.mxu0 %v3107
          %3268 = vmatpush.msra.mxu0 %v3106
          %3269 = vmatpush.msra.mxu0 %v3105
          %3270 = vmatmul.f32.gmra.mxu0 %v3030
          %v3271 = vpop.f32.mrf.mxu0
          %v3272 = vadd.f32 %v3219, %v3271
          %3273 = vmatmul.f32.gmra.mxu0 %v3035
          %v3274 = vpop.f32.mrf.mxu0
          %v3275 = vadd.f32 %v3222, %v3274
          %3276 = vmatmul.f32.gmra.mxu0 %v3040
          %v3277 = vpop.f32.mrf.mxu0
          %v3278 = vadd.f32 %v3225, %v3277
          %3279 = vmatmul.f32.gmra.mxu0 %v3045
          %v3280 = vpop.f32.mrf.mxu0
          %v3281 = vadd.f32 %v3228, %v3280
          %3282 = vmatmul.f32.gmra.mxu0 %v3050
          %v3283 = vpop.f32.mrf.mxu0
          %v3284 = vadd.f32 %v3231, %v3283
          %3285 = vmatmul.f32.gmra.mxu0 %v3055
          %v3286 = vpop.f32.mrf.mxu0
          %v3287 = vadd.f32 %v3234, %v3286
          %3288 = vmatmul.f32.gmra.mxu0 %v3060
          %v3289 = vpop.f32.mrf.mxu0
          %v3290 = vadd.f32 %v3237, %v3289
          %3291 = vmatmul.f32.gmra.mxu0 %v3065
          %v3292 = vpop.f32.mrf.mxu0
          %v3293 = vadd.f32 %v3240, %v3292
          %3294 = vmatmul.f32.gmra.mxu0 %v3070
          %v3295 = vpop.f32.mrf.mxu0
          %v3296 = vadd.f32 %v3243, %v3295
          %3297 = vmatmul.f32.gmra.mxu0 %v3075
          %v3298 = vpop.f32.mrf.mxu0
          %v3299 = vadd.f32 %v3246, %v3298
          %3300 = vmatmul.f32.gmra.mxu0 %v3080
          %v3301 = vpop.f32.mrf.mxu0
          %v3302 = vadd.f32 %v3249, %v3301
          %3303 = vmatmul.f32.gmra.mxu0 %v3085
          %v3304 = vpop.f32.mrf.mxu0
          %v3305 = vadd.f32 %v3252, %v3304
          %3306 = vdwg.mxu0
          %3307 = vmatpush.msra.mxu0 %v3136
          %3308 = vmatpush.msra.mxu0 %v3135
          %3309 = vmatpush.msra.mxu0 %v3134
          %3310 = vmatpush.msra.mxu0 %v3133
          %3311 = vmatpush.msra.mxu0 %v3132
          %3312 = vmatpush.msra.mxu0 %v3131
          %3313 = vmatpush.msra.mxu0 %v3130
          %3314 = vmatpush.msra.mxu0 %v3129
          %3315 = vmatpush.msra.mxu0 %v3128
          %3316 = vmatpush.msra.mxu0 %v3127
          %3317 = vmatpush.msra.mxu0 %v3126
          %3318 = vmatpush.msra.mxu0 %v3125
          %3319 = vmatpush.msra.mxu0 %v3124
          %3320 = vmatpush.msra.mxu0 %v3123
          %3321 = vmatpush.msra.mxu0 %v3122
          %3322 = vmatpush.msra.mxu0 %v3121
          %3323 = vmatmul.f32.gmra.mxu0 %v3031
          %v3324 = vpop.f32.mrf.mxu0
          %v3325 = vadd.f32 %v3272, %v3324
          %3326 = vmatmul.f32.gmra.mxu0 %v3036
          %v3327 = vpop.f32.mrf.mxu0
          %v3328 = vadd.f32 %v3275, %v3327
          %3329 = vmatmul.f32.gmra.mxu0 %v3041
          %v3330 = vpop.f32.mrf.mxu0
          %v3331 = vadd.f32 %v3278, %v3330
          %3332 = vmatmul.f32.gmra.mxu0 %v3046
          %v3333 = vpop.f32.mrf.mxu0
          %v3334 = vadd.f32 %v3281, %v3333
          %3335 = vmatmul.f32.gmra.mxu0 %v3051
          %v3336 = vpop.f32.mrf.mxu0
          %v3337 = vadd.f32 %v3284, %v3336
          %3338 = vmatmul.f32.gmra.mxu0 %v3056
          %v3339 = vpop.f32.mrf.mxu0
          %v3340 = vadd.f32 %v3287, %v3339
          %3341 = vmatmul.f32.gmra.mxu0 %v3061
          %v3342 = vpop.f32.mrf.mxu0
          %v3343 = vadd.f32 %v3290, %v3342
          %3344 = vmatmul.f32.gmra.mxu0 %v3066
          %v3345 = vpop.f32.mrf.mxu0
          %v3346 = vadd.f32 %v3293, %v3345
          %3347 = vmatmul.f32.gmra.mxu0 %v3071
          %v3348 = vpop.f32.mrf.mxu0
          %v3349 = vadd.f32 %v3296, %v3348
          %3350 = vmatmul.f32.gmra.mxu0 %v3076
          %v3351 = vpop.f32.mrf.mxu0
          %v3352 = vadd.f32 %v3299, %v3351
          %3353 = vmatmul.f32.gmra.mxu0 %v3081
          %v3354 = vpop.f32.mrf.mxu0
          %v3355 = vadd.f32 %v3302, %v3354
          %3356 = vmatmul.f32.gmra.mxu0 %v3086
          %v3357 = vpop.f32.mrf.mxu0
          %v3358 = vadd.f32 %v3305, %v3357
          %3359 = vdwg.mxu0
          %3360 = vmatpush.msra.mxu0 %v3152
          %3361 = vmatpush.msra.mxu0 %v3151
          %3362 = vmatpush.msra.mxu0 %v3150
          %3363 = vmatpush.msra.mxu0 %v3149
          %3364 = vmatpush.msra.mxu0 %v3148
          %3365 = vmatpush.msra.mxu0 %v3147
          %3366 = vmatpush.msra.mxu0 %v3146
          %3367 = vmatpush.msra.mxu0 %v3145
          %3368 = vmatpush.msra.mxu0 %v3144
          %3369 = vmatpush.msra.mxu0 %v3143
          %3370 = vmatpush.msra.mxu0 %v3142
          %3371 = vmatpush.msra.mxu0 %v3141
          %3372 = vmatpush.msra.mxu0 %v3140
          %3373 = vmatpush.msra.mxu0 %v3139
          %3374 = vmatpush.msra.mxu0 %v3138
          %3375 = vmatpush.msra.mxu0 %v3137
          %3376 = vmatmul.f32.gmra.mxu0 %v3032
          %v3377 = vpop.f32.mrf.mxu0
          %v3378 = vadd.f32 %v3325, %v3377
          %3379 = vmatmul.f32.gmra.mxu0 %v3037
          %v3380 = vpop.f32.mrf.mxu0
          %v3381 = vadd.f32 %v3328, %v3380
          %3382 = vmatmul.f32.gmra.mxu0 %v3042
          %v3383 = vpop.f32.mrf.mxu0
          %v3384 = vadd.f32 %v3331, %v3383
          %3385 = vmatmul.f32.gmra.mxu0 %v3047
          %v3386 = vpop.f32.mrf.mxu0
          %v3387 = vadd.f32 %v3334, %v3386
          %3388 = vmatmul.f32.gmra.mxu0 %v3052
          %v3389 = vpop.f32.mrf.mxu0
          %v3390 = vadd.f32 %v3337, %v3389
          %3391 = vmatmul.f32.gmra.mxu0 %v3057
          %v3392 = vpop.f32.mrf.mxu0
          %v3393 = vadd.f32 %v3340, %v3392
          %3394 = vmatmul.f32.gmra.mxu0 %v3062
          %v3395 = vpop.f32.mrf.mxu0
          %v3396 = vadd.f32 %v3343, %v3395
          %3397 = vmatmul.f32.gmra.mxu0 %v3067
          %v3398 = vpop.f32.mrf.mxu0
          %v3399 = vadd.f32 %v3346, %v3398
          %3400 = vmatmul.f32.gmra.mxu0 %v3072
          %v3401 = vpop.f32.mrf.mxu0
          %v3402 = vadd.f32 %v3349, %v3401
          %3403 = vmatmul.f32.gmra.mxu0 %v3077
          %v3404 = vpop.f32.mrf.mxu0
          %v3405 = vadd.f32 %v3352, %v3404
          %3406 = vmatmul.f32.gmra.mxu0 %v3082
          %v3407 = vpop.f32.mrf.mxu0
          %v3408 = vadd.f32 %v3355, %v3407
          %3409 = vmatmul.f32.gmra.mxu0 %v3087
          %v3410 = vpop.f32.mrf.mxu0
          %v3411 = vadd.f32 %v3358, %v3410
          %3412 = vdwg.mxu0
          %3413 = vmatpush.msra.mxu0 0.0
          %3414 = vmatpush.msra.mxu0 0.0
          %3415 = vmatpush.msra.mxu0 0.0
          %3416 = vmatpush.msra.mxu0 0.0
          %3417 = vmatpush.msra.mxu0 0.0
          %3418 = vmatpush.msra.mxu0 0.0
          %3419 = vmatpush.msra.mxu0 0.0
          %3420 = vmatpush.msra.mxu0 0.0
          %3421 = vmatpush.msra.mxu0 %v3160
          %3422 = vmatpush.msra.mxu0 %v3159
          %3423 = vmatpush.msra.mxu0 %v3158
          %3424 = vmatpush.msra.mxu0 %v3157
          %3425 = vmatpush.msra.mxu0 %v3156
          %3426 = vmatpush.msra.mxu0 %v3155
          %3427 = vmatpush.msra.mxu0 %v3154
          %3428 = vmatpush.msra.mxu0 %v3153
          %3429 = vmatmul.f32.gmra.mxu0 %v3166
          %v3430 = vpop.f32.mrf.mxu0
          %v3431 = vadd.f32 %v3378, %v3430
          %3432 = vmatmul.f32.gmra.mxu0 %v3169
          %v3433 = vpop.f32.mrf.mxu0
          %v3434 = vadd.f32 %v3381, %v3433
          %3435 = vmatmul.f32.gmra.mxu0 %v3172
          %v3436 = vpop.f32.mrf.mxu0
          %v3437 = vadd.f32 %v3384, %v3436
          %3438 = vmatmul.f32.gmra.mxu0 %v3175
          %v3439 = vpop.f32.mrf.mxu0
          %v3440 = vadd.f32 %v3387, %v3439
          %3441 = vmatmul.f32.gmra.mxu0 %v3178
          %v3442 = vpop.f32.mrf.mxu0
          %v3443 = vadd.f32 %v3390, %v3442
          %3444 = vmatmul.f32.gmra.mxu0 %v3181
          %v3445 = vpop.f32.mrf.mxu0
          %v3446 = vadd.f32 %v3393, %v3445
          %3447 = vmatmul.f32.gmra.mxu0 %v3184
          %v3448 = vpop.f32.mrf.mxu0
          %v3449 = vadd.f32 %v3396, %v3448
          %3450 = vmatmul.f32.gmra.mxu0 %v3187
          %v3451 = vpop.f32.mrf.mxu0
          %v3452 = vadd.f32 %v3399, %v3451
          %3453 = vmatmul.f32.gmra.mxu0 %v3190
          %v3454 = vpop.f32.mrf.mxu0
          %v3455 = vadd.f32 %v3402, %v3454
          %3456 = vmatmul.f32.gmra.mxu0 %v3193
          %v3457 = vpop.f32.mrf.mxu0
          %v3458 = vadd.f32 %v3405, %v3457
          %3459 = vmatmul.f32.gmra.mxu0 %v3196
          %v3460 = vpop.f32.mrf.mxu0
          %v3461 = vadd.f32 %v3408, %v3460
          %3462 = vmatmul.f32.gmra.mxu0 %v3199
          %v3463 = vpop.f32.mrf.mxu0
          %v3464 = vadd.f32 %v3411, %v3463
          %3465 = vdwg.mxu0
          %v3466 = vld [vmem:[%s9] sm:$0xff]
          %v3467 = vld [vmem:[%s9 + $0x8] sm:$0xff]
          %v3468 = vld [vmem:[%s9 + $0x10] sm:$0xff]
          %v3469 = vld [vmem:[%s9 + $0x18] sm:$0xff]
          %v3470 = vld [vmem:[%s9 + $0x20] sm:$0xff]
          %v3471 = vld [vmem:[%s9 + $0x28] sm:$0xff]
          %v3472 = vld [vmem:[%s9 + $0x30] sm:$0xff]
          %v3473 = vld [vmem:[%s9 + $0x38] sm:$0xff]
          %v3474 = vld [vmem:[%s9 + $0x40] sm:$0xff]
          %v3475 = vld [vmem:[%s9 + $0x48] sm:$0xff]
          %v3476 = vld [vmem:[%s9 + $0x50] sm:$0xff]
          %v3477 = vld [vmem:[%s9 + $0x58] sm:$0xf]
          %3479 = vset.pattern.permute.xlu0 0
          %3480 = vperm.xlu0 %3479, %v3466
          %v3481 = vpop.permute.xlu0 %3480
          %3484 = vset.pattern.permute.xlu0 0
          %3485 = vperm.xlu0 %3484, %v3467
          %v3486 = vpop.permute.xlu0 %3485
          %3489 = vset.pattern.permute.xlu0 0
          %3490 = vperm.xlu0 %3489, %v3468
          %v3491 = vpop.permute.xlu0 %3490
          %3494 = vset.pattern.permute.xlu0 0
          %3495 = vperm.xlu0 %3494, %v3469
          %v3496 = vpop.permute.xlu0 %3495
          %3499 = vset.pattern.permute.xlu0 0
          %3500 = vperm.xlu0 %3499, %v3470
          %v3501 = vpop.permute.xlu0 %3500
          %3504 = vset.pattern.permute.xlu0 0
          %3505 = vperm.xlu0 %3504, %v3471
          %v3506 = vpop.permute.xlu0 %3505
          %3509 = vset.pattern.permute.xlu0 0
          %3510 = vperm.xlu0 %3509, %v3472
          %v3511 = vpop.permute.xlu0 %3510
          %3514 = vset.pattern.permute.xlu0 0
          %3515 = vperm.xlu0 %3514, %v3473
          %v3516 = vpop.permute.xlu0 %3515
          %3519 = vset.pattern.permute.xlu0 0
          %3520 = vperm.xlu0 %3519, %v3474
          %v3521 = vpop.permute.xlu0 %3520
          %3524 = vset.pattern.permute.xlu0 0
          %3525 = vperm.xlu0 %3524, %v3475
          %v3526 = vpop.permute.xlu0 %3525
          %3529 = vset.pattern.permute.xlu0 0
          %3530 = vperm.xlu0 %3529, %v3476
          %v3531 = vpop.permute.xlu0 %3530
          %3534 = vset.pattern.permute.xlu0 0
          %3535 = vperm.xlu0 %3534, %v3477
          %v3536 = vpop.permute.xlu0 %3535
          %v3538 = vmul.f32 %v3431, %v3481
          %v3539 = vmul.f32 %v3434, %v3486
          %v3540 = vmul.f32 %v3437, %v3491
          %v3541 = vmul.f32 %v3440, %v3496
          %v3542 = vmul.f32 %v3443, %v3501
          %v3543 = vmul.f32 %v3446, %v3506
          %v3544 = vmul.f32 %v3449, %v3511
          %v3545 = vmul.f32 %v3452, %v3516
          %v3546 = vmul.f32 %v3455, %v3521
          %v3547 = vmul.f32 %v3458, %v3526
          %v3548 = vmul.f32 %v3461, %v3531
          %v3549 = vmul.f32 %v3464, %v3536
          %v3550 = vsel %vm1816, %v3538, 0.0
          %v3551 = vsel %vm1816, %v3539, 0.0
          %v3552 = vadd.f32 %v3550, %v3551
          %v3553 = vsel %vm1816, %v3540, 0.0
          %v3554 = vadd.f32 %v3552, %v3553
          %v3555 = vsel %vm1816, %v3541, 0.0
          %v3556 = vadd.f32 %v3554, %v3555
          %v3557 = vsel %vm1816, %v3542, 0.0
          %v3558 = vadd.f32 %v3556, %v3557
          %v3559 = vsel %vm1816, %v3543, 0.0
          %v3560 = vadd.f32 %v3558, %v3559
          %v3561 = vsel %vm1816, %v3544, 0.0
          %v3562 = vadd.f32 %v3560, %v3561
          %v3563 = vsel %vm1816, %v3545, 0.0
          %v3564 = vadd.f32 %v3562, %v3563
          %v3565 = vsel %vm1816, %v3546, 0.0
          %v3566 = vadd.f32 %v3564, %v3565
          %v3567 = vsel %vm1816, %v3547, 0.0
          %v3568 = vadd.f32 %v3566, %v3567
          %v3569 = vsel %vm1816, %v3548, 0.0
          %v3570 = vadd.f32 %v3568, %v3569
          %v3571 = vsel %vm2697, %v3549, 0.0
          %v3572 = vadd.f32 %v3570, %v3571
          %v3573 = vrot.slane %v3572, 4
          %v3574 = vadd.f32 %v3572, %v3573
          %v3575 = vrot.slane %v3574, 2
          %v3576 = vadd.f32 %v3574, %v3575
          %v3577 = vrot.slane %v3576, 1
          %v3578 = vadd.f32 %v3576, %v3577
          %v3579 = vmul.f32 %v3578, 0.013888889
          %v3580 = vmul.f32 %v3538, %v3431
          %v3581 = vmul.f32 %v3539, %v3434
          %v3582 = vmul.f32 %v3540, %v3437
          %v3583 = vmul.f32 %v3541, %v3440
          %v3584 = vmul.f32 %v3542, %v3443
          %v3585 = vmul.f32 %v3543, %v3446
          %v3586 = vmul.f32 %v3544, %v3449
          %v3587 = vmul.f32 %v3545, %v3452
          %v3588 = vmul.f32 %v3546, %v3455
          %v3589 = vmul.f32 %v3547, %v3458
          %v3590 = vmul.f32 %v3548, %v3461
          %v3591 = vmul.f32 %v3549, %v3464
          %v3592 = vsel %vm1816, %v3580, 0.0
          %v3593 = vsel %vm1816, %v3581, 0.0
          %v3594 = vadd.f32 %v3592, %v3593
          %v3595 = vsel %vm1816, %v3582, 0.0
          %v3596 = vadd.f32 %v3594, %v3595
          %v3597 = vsel %vm1816, %v3583, 0.0
          %v3598 = vadd.f32 %v3596, %v3597
          %v3599 = vsel %vm1816, %v3584, 0.0
          %v3600 = vadd.f32 %v3598, %v3599
          %v3601 = vsel %vm1816, %v3585, 0.0
          %v3602 = vadd.f32 %v3600, %v3601
          %v3603 = vsel %vm1816, %v3586, 0.0
          %v3604 = vadd.f32 %v3602, %v3603
          %v3605 = vsel %vm1816, %v3587, 0.0
          %v3606 = vadd.f32 %v3604, %v3605
          %v3607 = vsel %vm1816, %v3588, 0.0
          %v3608 = vadd.f32 %v3606, %v3607
          %v3609 = vsel %vm1816, %v3589, 0.0
          %v3610 = vadd.f32 %v3608, %v3609
          %v3611 = vsel %vm1816, %v3590, 0.0
          %v3612 = vadd.f32 %v3610, %v3611
          %v3613 = vsel %vm2697, %v3591, 0.0
          %v3614 = vadd.f32 %v3612, %v3613
          %v3615 = vrot.slane %v3614, 4
          %v3616 = vadd.f32 %v3614, %v3615
          %v3617 = vrot.slane %v3616, 2
          %v3618 = vadd.f32 %v3616, %v3617
          %v3619 = vrot.slane %v3618, 1
          %v3620 = vadd.f32 %v3618, %v3619
          %v3621 = vmul.f32 %v3620, 0.013888889
          %v3622 = vmul.f32 %v3579, %v3579
          %v3623 = vsub.f32 %v3621, %v3622
          %v3624 = vld [vmem:[#allocation14] sm:$0x1]
          %v3625 = vadd.f32 %v3623, 1e-05
          %v3626 = vrsqrt.pop %v3625
          %v3627 = vmul.f32 %v3626, %v3625
          %v3628 = vmul.f32 %v3627, %v3626
          %v3629 = vmul.f32 0.5, %v3628
          %v3630 = vsub.f32 1.5, %v3629
          %v3631 = vmul.f32 %v3626, %v3630
          %vm3632 = vweird.f32 %v3625
          %vm3633 = vweird.f32 %v3626
          %vm3634 = vmor %vm3632, %vm3633
          %v3635 = vsel %vm3634, %v3626, %v3631
          %v3636 = vmul.f32 %v3624, %v3635
          %v3637 = vld [vmem:[#allocation16] sm:$0x1]
          %v3638 = vmul.f32 %v3579, %v3636
          %v3639 = vsub.f32 %v3637, %v3638
          %v3641 = vperm.slane %v3636, 0
          %v3643 = vmul.f32 %v3431, %v3641
          %v3644 = vmul.f32 %v3434, %v3641
          %v3645 = vmul.f32 %v3437, %v3641
          %v3646 = vmul.f32 %v3440, %v3641
          %v3647 = vmul.f32 %v3443, %v3641
          %v3648 = vmul.f32 %v3446, %v3641
          %v3649 = vmul.f32 %v3449, %v3641
          %v3650 = vmul.f32 %v3452, %v3641
          %v3651 = vmul.f32 %v3455, %v3641
          %v3652 = vmul.f32 %v3458, %v3641
          %v3653 = vmul.f32 %v3461, %v3641
          %v3654 = vmul.f32 %v3464, %v3641
          %v3656 = vperm.slane %v3639, 0
          %v3658 = vadd.f32 %v3643, %v3656
          %v3659 = vadd.f32 %v3644, %v3656
          %v3660 = vadd.f32 %v3645, %v3656
          %v3661 = vadd.f32 %v3646, %v3656
          %v3662 = vadd.f32 %v3647, %v3656
          %v3663 = vadd.f32 %v3648, %v3656
          %v3664 = vadd.f32 %v3649, %v3656
          %v3665 = vadd.f32 %v3650, %v3656
          %v3666 = vadd.f32 %v3651, %v3656
          %v3667 = vadd.f32 %v3652, %v3656
          %v3668 = vadd.f32 %v3653, %v3656
          %v3669 = vadd.f32 %v3654, %v3656
          %v3670 = vmax.f32 %v3658, 0.0
          %v3671 = vmax.f32 %v3659, 0.0
          %v3672 = vmax.f32 %v3660, 0.0
          %v3673 = vmax.f32 %v3661, 0.0
          %v3674 = vmax.f32 %v3662, 0.0
          %v3675 = vmax.f32 %v3663, 0.0
          %v3676 = vmax.f32 %v3664, 0.0
          %v3677 = vmax.f32 %v3665, 0.0
          %v3678 = vmax.f32 %v3666, 0.0
          %v3679 = vmax.f32 %v3667, 0.0
          %v3680 = vmax.f32 %v3668, 0.0
          %v3681 = vmax.f32 %v3669, 0.0
          %v3690 = vrot.slane %v3670, 2
          %v3691 = vrot.slane %v3671, 2
          %v3692 = vsel %vm2711, %v3690, %v3691
          %v3693 = vrot.slane %v3672, 2
          %v3694 = vsel %vm2711, %v3691, %v3693
          %v3695 = vrot.slane %v3674, 2
          %v3696 = vrot.slane %v3675, 2
          %v3697 = vsel %vm2711, %v3695, %v3696
          %v3698 = vrot.slane %v3676, 2
          %v3699 = vsel %vm2711, %v3696, %v3698
          %v3700 = vrot.slane %v3678, 2
          %v3701 = vrot.slane %v3679, 2
          %v3702 = vsel %vm2711, %v3700, %v3701
          %v3709 = vmax.f32 %v3670, %v3692
          %v3710 = vmax.f32 %v3671, %v3694
          %v3711 = vmax.f32 %v3674, %v3697
          %v3712 = vmax.f32 %v3675, %v3699
          %v3713 = vmax.f32 %v3678, %v3702
          %v3714 = vmax.f32 %v3679, %v3701
          %v3719 = vrot.slane %v3673, 2
          %v3720 = vsel %vm2711, %v3693, %v3719
          %v3721 = vsel %vm2711, %v3719, %v3695
          %v3722 = vrot.slane %v3677, 2
          %v3723 = vsel %vm2711, %v3698, %v3722
          %v3724 = vsel %vm2711, %v3722, %v3700
          %v3725 = vrot.slane %v3680, 2
          %v3726 = vrot.slane %v3681, 2
          %v3727 = vsel %vm2711, %v3725, %v3726
          %v3734 = vmax.f32 %v3672, %v3720
          %v3735 = vmax.f32 %v3673, %v3721
          %v3736 = vmax.f32 %v3676, %v3723
          %v3737 = vmax.f32 %v3677, %v3724
          %v3738 = vmax.f32 %v3680, %v3727
          %v3739 = vmax.f32 %v3681, %v3726
          %v3740 = vmax.f32 %v3709, %v3734
          %v3741 = vmax.f32 %v3710, %v3735
          %v3742 = vmax.f32 %v3711, %v3736
          %v3743 = vmax.f32 %v3712, %v3737
          %v3744 = vmax.f32 %v3713, %v3738
          %v3745 = vmax.f32 %v3714, %v3739
          %3746 = vst.msk [vmem:[#allocation4] sm:$0x3] %vm1889, %v3740
          %3748 = vst.sshfl [vmem:[#allocation1] sm:$0xff pattern:$0x73625140] %v3740
          %s3749 = scalar_lea.vmem [#allocation1], 2
          %v3750 = vld [vmem:[%s3749] ss:$4 sm:$0xff]
          %3751 = vrot.lane.b32.xlu0 %v3750, 64
          %v3752 = vpop.permute.xlu0 %3751
          %vm3754 = vcmask 1041920
          %3755 = vst.msk [vmem:[#allocation4] sm:$0x3] %vm3754, %v3752
          %3756 = vst.msk [vmem:[#allocation4 + $0x2] sm:$0x3] %vm1889, %v3741
          %3758 = vrot.lane.b32.xlu0 %v3742, 64
          %v3759 = vpop.permute.xlu0 %3758
          %3761 = vst.msk [vmem:[#allocation4 + $0x2] sm:$0x3] %vm3754, %v3759
          %3762 = vst.sshfl [vmem:[#allocation1] sm:$0xff pattern:$0x73625140] %v3742
          %s3763 = scalar_lea.vmem [#allocation1], 2
          %v3764 = vld [vmem:[%s3763] ss:$4 sm:$0xff]
          %3766 = vst.msk [vmem:[#allocation4 + $0x4] sm:$0x3] %vm1889, %v3764
          %3768 = vrot.lane.b32.xlu0 %v3743, 64
          %v3769 = vpop.permute.xlu0 %3768
          %3771 = vst.msk [vmem:[#allocation4 + $0x4] sm:$0x3] %vm3754, %v3769
          %3772 = vst.msk [vmem:[#allocation4 + $0x6] sm:$0x3] %vm1889, %v3744
          %3774 = vst.sshfl [vmem:[#allocation1] sm:$0xff pattern:$0x73625140] %v3744
          %s3775 = scalar_lea.vmem [#allocation1], 2
          %v3776 = vld [vmem:[%s3775] ss:$4 sm:$0xff]
          %3777 = vrot.lane.b32.xlu0 %v3776, 64
          %v3778 = vpop.permute.xlu0 %3777
          %3780 = vst.msk [vmem:[#allocation4 + $0x6] sm:$0x3] %vm3754, %v3778
          %3781 = vst.msk [vmem:[#allocation4 + $0x8] sm:$0x3] %vm1889, %v3745
          %v3782 = vld [vmem:[#allocation4] sm:$0xff]
          %v3783 = vld [vmem:[#allocation4 + $0x8] sm:$0x3]
          %v3784 = vld [vmem:[%s10] sm:$0xff]
          %v3785 = vld [vmem:[%s10 + $0x8] sm:$0xff]
          %v3786 = vld [vmem:[%s10 + $0x10] sm:$0xff]
          %v3787 = vld [vmem:[%s10 + $0x18] sm:$0xff]
          %v3788 = vld [vmem:[%s10 + $0x20] sm:$0xff]
          %v3789 = vld [vmem:[%s10 + $0x28] sm:$0xff]
          %v3790 = vld [vmem:[%s10 + $0x30] sm:$0xff]
          %v3791 = vld [vmem:[%s10 + $0x38] sm:$0xff]
          %v3792 = vld [vmem:[%s10 + $0x40] sm:$0xff]
          %v3793 = vld [vmem:[%s10 + $0x48] sm:$0xff]
          %v3794 = vld [vmem:[%s10 + $0x50] sm:$0xff]
          %v3795 = vld [vmem:[%s10 + $0x58] sm:$0xff]
          %v3796 = vld [vmem:[%s10 + $0x60] sm:$0xff]
          %v3797 = vld [vmem:[%s10 + $0x68] sm:$0xff]
          %v3798 = vld [vmem:[%s10 + $0x70] sm:$0xff]
          %v3799 = vld [vmem:[%s10 + $0x78] sm:$0xff]
          %v3800 = vld [vmem:[%s10 + $0x80] sm:$0xff]
          %v3801 = vld [vmem:[%s10 + $0x88] sm:$0xff]
          %v3802 = vld [vmem:[%s10 + $0x90] sm:$0xff]
          %v3803 = vld [vmem:[%s10 + $0x98] sm:$0xff]
          %v3804 = vld [vmem:[%s10 + $0xa0] sm:$0xff]
          %v3805 = vld [vmem:[%s10 + $0xa8] sm:$0xff]
          %v3806 = vld [vmem:[%s10 + $0xb0] sm:$0xff]
          %v3807 = vld [vmem:[%s10 + $0xb8] sm:$0xff]
          %v3808 = vld [vmem:[%s10 + $0xc0] sm:$0xff]
          %v3809 = vld [vmem:[%s10 + $0xc8] sm:$0xff]
          %v3810 = vld [vmem:[%s10 + $0xd0] sm:$0xff]
          %v3811 = vld [vmem:[%s10 + $0xd8] sm:$0xff]
          %v3812 = vld [vmem:[%s10 + $0xe0] sm:$0xff]
          %v3813 = vld [vmem:[%s10 + $0xe8] sm:$0xff]
          %v3814 = vld [vmem:[%s10 + $0xf0] sm:$0xff]
          %v3815 = vld [vmem:[%s10 + $0xf8] sm:$0xff]
          %v3816 = vld [vmem:[%s10 + $0x100] sm:$0xff]
          %v3817 = vld [vmem:[%s10 + $0x108] sm:$0xff]
          %v3818 = vld [vmem:[%s10 + $0x110] sm:$0xff]
          %v3819 = vld [vmem:[%s10 + $0x118] sm:$0xff]
          %v3820 = vld [vmem:[%s10 + $0x120] sm:$0xff]
          %v3821 = vld [vmem:[%s10 + $0x128] sm:$0xff]
          %v3822 = vld [vmem:[%s10 + $0x130] sm:$0xff]
          %v3823 = vld [vmem:[%s10 + $0x138] sm:$0xff]
          %v3824 = vld [vmem:[%s10 + $0x140] sm:$0xff]
          %v3825 = vld [vmem:[%s10 + $0x148] sm:$0xff]
          %v3826 = vld [vmem:[%s10 + $0x150] sm:$0xff]
          %v3827 = vld [vmem:[%s10 + $0x158] sm:$0xff]
          %v3828 = vld [vmem:[%s10 + $0x160] sm:$0xff]
          %v3829 = vld [vmem:[%s10 + $0x168] sm:$0xff]
          %v3830 = vld [vmem:[%s10 + $0x170] sm:$0xff]
          %v3831 = vld [vmem:[%s10 + $0x178] sm:$0xff]
          %v3832 = vld [vmem:[%s10 + $0x180] sm:$0xff]
          %v3833 = vld [vmem:[%s10 + $0x188] sm:$0xff]
          %v3834 = vld [vmem:[%s10 + $0x190] sm:$0xff]
          %v3835 = vld [vmem:[%s10 + $0x198] sm:$0xff]
          %v3836 = vld [vmem:[%s10 + $0x1a0] sm:$0xff]
          %v3837 = vld [vmem:[%s10 + $0x1a8] sm:$0xff]
          %v3838 = vld [vmem:[%s10 + $0x1b0] sm:$0xff]
          %v3839 = vld [vmem:[%s10 + $0x1b8] sm:$0xff]
          %v3840 = vld [vmem:[%s10 + $0x1c0] sm:$0xff]
          %v3841 = vld [vmem:[%s10 + $0x1c8] sm:$0xff]
          %v3842 = vld [vmem:[%s10 + $0x1d0] sm:$0xff]
          %v3843 = vld [vmem:[%s10 + $0x1d8] sm:$0xff]
          %v3844 = vld [vmem:[%s10 + $0x1e0] sm:$0xff]
          %v3845 = vld [vmem:[%s10 + $0x1e8] sm:$0xff]
          %v3846 = vld [vmem:[%s10 + $0x1f0] sm:$0xff]
          %v3847 = vld [vmem:[%s10 + $0x1f8] sm:$0xff]
          %v3848 = vld [vmem:[%s10 + $0x200] sm:$0xff]
          %v3849 = vld [vmem:[%s10 + $0x208] sm:$0xff]
          %v3850 = vld [vmem:[%s10 + $0x210] sm:$0xff]
          %v3851 = vld [vmem:[%s10 + $0x218] sm:$0xff]
          %v3852 = vld [vmem:[%s10 + $0x220] sm:$0xff]
          %v3853 = vld [vmem:[%s10 + $0x228] sm:$0xff]
          %v3854 = vld [vmem:[%s10 + $0x230] sm:$0xff]
          %v3855 = vld [vmem:[%s10 + $0x238] sm:$0xff]
          %v3856 = vld [vmem:[#allocation17] sm:$0x1]
          %v3858 = vperm.slane %v3856, 0
          %3862 = vst [vmem:[#allocation1] ss:$4 sm:$0xff] %v3782
          %s3863 = scalar_lea.vmem [#allocation1], 32
          %3864 = vst [vmem:[%s3863] ss:$4 sm:$0xff] %v3783
          %v3865 = vld.sshfl [vmem:[#allocation1] sm:$0xff pattern:$0x73625140]
          %v3866 = vld.sshfl [vmem:[#allocation1 + $0x8] sm:$0xff pattern:$0x73625140]
          %v3867 = vld.sshfl [vmem:[#allocation1 + $0x10] sm:$0xff pattern:$0x73625140]
          %v3868 = vld.sshfl [vmem:[#allocation1 + $0x18] sm:$0xff pattern:$0x73625140]
          %v3869 = vld.sshfl [vmem:[#allocation1 + $0x20] sm:$0xff pattern:$0x73625140]
          %v3874 = vsel %vm1816, %v3869, 0
          %3876 = vmatpush.msra.mxu0 %v3799
          %3877 = vmatpush.msra.mxu0 %v3798
          %3878 = vmatpush.msra.mxu0 %v3797
          %3879 = vmatpush.msra.mxu0 %v3796
          %3880 = vmatpush.msra.mxu0 %v3795
          %3881 = vmatpush.msra.mxu0 %v3794
          %3882 = vmatpush.msra.mxu0 %v3793
          %3883 = vmatpush.msra.mxu0 %v3792
          %3884 = vmatpush.msra.mxu0 %v3791
          %3885 = vmatpush.msra.mxu0 %v3790
          %3886 = vmatpush.msra.mxu0 %v3789
          %3887 = vmatpush.msra.mxu0 %v3788
          %3888 = vmatpush.msra.mxu0 %v3787
          %3889 = vmatpush.msra.mxu0 %v3786
          %3890 = vmatpush.msra.mxu0 %v3785
          %3891 = vmatpush.msra.mxu0 %v3784
          %3892 = vmatmul.f32.gmra.mxu0 %v3865
          %v3893 = vpop.f32.mrf.mxu0
          %v3894 = vadd.f32 %v3858, %v3893
          %3895 = vdwg.mxu0
          %3896 = vmatpush.msra.mxu0 %v3815
          %3897 = vmatpush.msra.mxu0 %v3814
          %3898 = vmatpush.msra.mxu0 %v3813
          %3899 = vmatpush.msra.mxu0 %v3812
          %3900 = vmatpush.msra.mxu0 %v3811
          %3901 = vmatpush.msra.mxu0 %v3810
          %3902 = vmatpush.msra.mxu0 %v3809
          %3903 = vmatpush.msra.mxu0 %v3808
          %3904 = vmatpush.msra.mxu0 %v3807
          %3905 = vmatpush.msra.mxu0 %v3806
          %3906 = vmatpush.msra.mxu0 %v3805
          %3907 = vmatpush.msra.mxu0 %v3804
          %3908 = vmatpush.msra.mxu0 %v3803
          %3909 = vmatpush.msra.mxu0 %v3802
          %3910 = vmatpush.msra.mxu0 %v3801
          %3911 = vmatpush.msra.mxu0 %v3800
          %3912 = vmatmul.f32.gmra.mxu0 %v3866
          %v3913 = vpop.f32.mrf.mxu0
          %v3914 = vadd.f32 %v3894, %v3913
          %3915 = vdwg.mxu0
          %3916 = vmatpush.msra.mxu0 %v3831
          %3917 = vmatpush.msra.mxu0 %v3830
          %3918 = vmatpush.msra.mxu0 %v3829
          %3919 = vmatpush.msra.mxu0 %v3828
          %3920 = vmatpush.msra.mxu0 %v3827
          %3921 = vmatpush.msra.mxu0 %v3826
          %3922 = vmatpush.msra.mxu0 %v3825
          %3923 = vmatpush.msra.mxu0 %v3824
          %3924 = vmatpush.msra.mxu0 %v3823
          %3925 = vmatpush.msra.mxu0 %v3822
          %3926 = vmatpush.msra.mxu0 %v3821
          %3927 = vmatpush.msra.mxu0 %v3820
          %3928 = vmatpush.msra.mxu0 %v3819
          %3929 = vmatpush.msra.mxu0 %v3818
          %3930 = vmatpush.msra.mxu0 %v3817
          %3931 = vmatpush.msra.mxu0 %v3816
          %3932 = vmatmul.f32.gmra.mxu0 %v3867
          %v3933 = vpop.f32.mrf.mxu0
          %v3934 = vadd.f32 %v3914, %v3933
          %3935 = vdwg.mxu0
          %3936 = vmatpush.msra.mxu0 %v3847
          %3937 = vmatpush.msra.mxu0 %v3846
          %3938 = vmatpush.msra.mxu0 %v3845
          %3939 = vmatpush.msra.mxu0 %v3844
          %3940 = vmatpush.msra.mxu0 %v3843
          %3941 = vmatpush.msra.mxu0 %v3842
          %3942 = vmatpush.msra.mxu0 %v3841
          %3943 = vmatpush.msra.mxu0 %v3840
          %3944 = vmatpush.msra.mxu0 %v3839
          %3945 = vmatpush.msra.mxu0 %v3838
          %3946 = vmatpush.msra.mxu0 %v3837
          %3947 = vmatpush.msra.mxu0 %v3836
          %3948 = vmatpush.msra.mxu0 %v3835
          %3949 = vmatpush.msra.mxu0 %v3834
          %3950 = vmatpush.msra.mxu0 %v3833
          %3951 = vmatpush.msra.mxu0 %v3832
          %3952 = vmatmul.f32.gmra.mxu0 %v3868
          %v3953 = vpop.f32.mrf.mxu0
          %v3954 = vadd.f32 %v3934, %v3953
          %3955 = vdwg.mxu0
          %3956 = vmatpush.msra.mxu0 0.0
          %3957 = vmatpush.msra.mxu0 0.0
          %3958 = vmatpush.msra.mxu0 0.0
          %3959 = vmatpush.msra.mxu0 0.0
          %3960 = vmatpush.msra.mxu0 0.0
          %3961 = vmatpush.msra.mxu0 0.0
          %3962 = vmatpush.msra.mxu0 0.0
          %3963 = vmatpush.msra.mxu0 0.0
          %3964 = vmatpush.msra.mxu0 %v3855
          %3965 = vmatpush.msra.mxu0 %v3854
          %3966 = vmatpush.msra.mxu0 %v3853
          %3967 = vmatpush.msra.mxu0 %v3852
          %3968 = vmatpush.msra.mxu0 %v3851
          %3969 = vmatpush.msra.mxu0 %v3850
          %3970 = vmatpush.msra.mxu0 %v3849
          %3971 = vmatpush.msra.mxu0 %v3848
          %3972 = vmatmul.f32.gmra.mxu0 %v3874
          %v3973 = vpop.f32.mrf.mxu0
          %v3974 = vadd.f32 %v3954, %v3973
          %3975 = vdwg.mxu0
          %v3976 = vmax.f32 %v3974, 0.0
          %v3977 = vld [vmem:[#allocation19] sm:$0x1]
          %v3979 = vperm.slane %v3977, 0
          %v3981 = vmul.f32 %v3976, %v3979
          %vm3982 = vcmask 254976
          %v3983 = vsel %vm3982, %v3981, 0.0
          %3984 = vadd.xlane.f32.xlu0 %v3983
          %v3985 = vpop.xlane.xlu0 %3984
          %v3986 = vld [vmem:[#allocation5] sm:$0x1]
          %v3988 = vperm.slane %v3986, 0
          %v3990 = vadd.f32 %v3985, %v3988
          %v3991 = vsub.f32 0.0, %v3990
          %v3992 = vmul.f32 %v3991, 1.442695
          %v3993 = vpow.pop %v3992
          %v3994 = vadd.f32 %v3993, 1.0
          %v3995 = vrcp.pop %v3994
          %v3996 = vmul.f32 %v3994, %v3995
          %v3997 = vsub.f32 1.0, %v3996
          %v3998 = vmul.f32 %v3995, %v3997
          %v3999 = vadd.f32 %v3995, %v3998
          %vm4000 = vweird.f32 %v3994
          %vm4001 = vweird.f32 %v3995
          %vm4002 = vmor %vm4000, %vm4001
          %v4003 = vsel %vm4002, %v3995, %v3999
          %v4004 = vand.u32 2147483647, %v3994
          %vm4005 = vcmp.eq.f32.partialorder %v4004, 8.507059e+37
          %v4006 = vand.u32 %v3994, 2147483648
          %v4007 = vor.u32 1.1754944e-38, %v4006
          %v4008 = vsel %vm4005, %v4007, %v4003
          %v4009 = vmul.f32 1.0, %v4008
          %vm4010 = vcmask 1024
          %4011 = vst.msk [vmem:[%s14] sm:$0x3] %vm4010, %v4009
        $region120: #{tpu_custom_call.1} parent=75 // pred_fallthru
          _
        // Predicated region
        $region121: #{tpu_custom_call.1} parent=75 // pred_check
          %p4012 = pneg %p351
        $region122: #{tpu_custom_call.1} parent=75 // pred_check_branch
          %4014 = sbr.rel (%p4012) target = $region124
        $region123: #{tpu_custom_call.1} parent=75 // pred_region
          _
        $region124: #{tpu_custom_call.1} parent=75 // pred_fallthru
          _
        // Predicated region
        $region125: #{tpu_custom_call.1} parent=75 // pred_check
          %p4015 = pneg %p351
        $region126: #{tpu_custom_call.1} parent=75 // pred_check_branch
          %4017 = sbr.rel (%p4015) target = $region128
        $region127: #{tpu_custom_call.1} parent=75 // pred_region
          _
        $region128: #{tpu_custom_call.1} parent=75 // pred_fallthru
          _
      $region76: #{tpu_custom_call.1} parent=5 // pred_fallthru
        _
      %p4018 = scmp.le.s32.totalorder 2, %s29
      // Predicated region
      $region129: #{tpu_custom_call.1} parent=5 // pred_check
        %p4019 = pneg %p4018
      $region130: #{tpu_custom_call.1} parent=5 // pred_check_branch
        %4021 = sbr.rel (%p4019) target = $region132
      $region131: #{tpu_custom_call.1} parent=5 // pred_region
        %s4022 = ssub.s32 %s29, 2
      $region132: #{tpu_custom_call.1} parent=5 // pred_fallthru
        _
    $region6: #{tpu_custom_call.1} parent=1 // loop_footer
      %s33 = sadd.s32 1, %s29
    $region7: #{tpu_custom_call.1} parent=1 // loop_footer_branch
      %28 = sbr.rel target = $region3
    $region8: #{tpu_custom_call.1} parent=1 // loop_exit
      _
    %4023 = vsyncpa [#allocation7], 1
    %s4024 = scalar_lea.sflag [#allocation7], 1
    %4025 = vsyncpa %s4024, 1
    %4026 = vsyncpa [#allocation9], 1
    %4027 = vsyncpa [#allocation12], 1
    %4028 = vsyncpa [#allocation15], 1
    %4029 = vsyncpa [#allocation18], 1

</llo_original>
